<compile_context>
chip_gen: v5e
topology: v5e:2x2
jax: 0.10.0
libtpu: 0.0.40
codegen_flags: <defaults>
</compile_context>

<pallas_src>
import functools

import jax
import jax.numpy as jnp
from jax.experimental import pallas as pl
from jax.experimental.pallas import tpu as pltpu


_LANE = 128
_SUBLANE = 8
_TM_DEFAULT = 512        # row tile; large tiles amortize per-step overhead


def _round_up(x, m):
    return ((x + m - 1) // m) * m


# --------------------------------------------------------------------------
# Pallas kernel: one row tile of a chain of (GEMM + bias + activation) layers
# --------------------------------------------------------------------------
def _gemm_chain_kernel(*refs, activations):
    x_ref = refs[0]
    out_ref = refs[-1]
    wb = refs[1:-1]                      # w0, b0, w1, b1, ...
    h = x_ref[...]
    n_layers = len(activations)
    for l in range(n_layers):
        w = wb[2 * l][...]
        b = wb[2 * l + 1][...]           # (1, N) broadcasts over the row tile
        acc = jnp.dot(h, w, preferred_element_type=jnp.float32) + b
        act = activations[l]
        if act == "relu":
            acc = jnp.maximum(acc, 0.0)
        elif act == "sigmoid":
            acc = jax.nn.sigmoid(acc)    # exp/recip on the EUP slot
        h = acc.astype(jnp.bfloat16) if (l + 1) < n_layers else acc
    out_ref[...] = h.astype(out_ref.dtype)


def gemm_chain(x, layers, activations, *, out_dtype=jnp.bfloat16, tm=_TM_DEFAULT):
    """x: (M, K); layers: [(w (K_l, N_l), b (N_l,)), ...] -> (M, N_last).

    M-tiled single Pallas kernel: all layer weights stay resident in VMEM,
    the row tile is double-buffered, MXU accumulates in f32.
    """
    M, K = x.shape
    x = x.astype(jnp.bfloat16)

    tm = min(tm, _round_up(M, _SUBLANE))
    m_pad = _round_up(M, tm)
    if m_pad != M:
        x = jnp.pad(x, ((0, m_pad - M), (0, 0)))
    grid = m_pad // tm

    operands = [x]
    in_specs = [pl.BlockSpec((tm, K), lambda i: (i, 0))]
    flops = 0
    weight_bytes = 0
    inter_bytes = 0
    k_cur = K
    for (w, b) in layers:
        kin, nout = w.shape
        assert kin == k_cur
        operands.append(w.astype(jnp.bfloat16))
        operands.append(b.reshape(1, nout).astype(jnp.float32))
        in_specs.append(pl.BlockSpec((kin, nout), lambda i: (0, 0)))   # resident
        in_specs.append(pl.BlockSpec((1, nout), lambda i: (0, 0)))     # resident
        flops += 2 * m_pad * kin * nout
        weight_bytes += kin * nout * 2 + nout * 4
        inter_bytes += tm * nout * 4
        k_cur = nout
    n_out = k_cur
    out_bytes = jnp.dtype(out_dtype).itemsize

    vmem_bytes = (2 * tm * K * 2                 # double-buffered x tile (bf16)
                  + 2 * tm * n_out * out_bytes   # double-buffered out tile
                  + 2 * weight_bytes             # resident weights + biases
                  + 2 * inter_bytes              # f32 intermediates (margin)
                  + (2 << 20))
    cost = pl.CostEstimate(
        flops=flops,
        transcendentals=m_pad * n_out if activations[-1] == "sigmoid" else 0,
        bytes_accessed=m_pad * K * 2 + weight_bytes + m_pad * n_out * out_bytes)

    kernel = functools.partial(_gemm_chain_kernel, activations=tuple(activations))
    out = pl.pallas_call(
        kernel,
        out_shape=jax.ShapeDtypeStruct((m_pad, n_out), out_dtype),
        grid=(grid,),
        in_specs=in_specs,
        out_specs=pl.BlockSpec((tm, n_out), lambda i: (i, 0)),
        compiler_params=pltpu.CompilerParams(
            dimension_semantics=("parallel",),                   # megacore
            vmem_limit_bytes=int(min(max(vmem_bytes, 16 << 20), 48 << 20))),
        cost_estimate=cost,
    )(*operands)
    return out[:M] if m_pad != M else out


# --------------------------------------------------------------------------
# Glue: non-overlapping 2x2x2 patch extraction (channels-last), XLA-side
# --------------------------------------------------------------------------
def patchify_222(x):
    """x: (N, D, H, W, C) -> (N*D/2*H/2*W/2, C*8); feature order (C, kd, kh, kw)."""
    n, d, h, w, c = x.shape
    x = x.reshape(n, d // 2, 2, h // 2, 2, w // 2, 2, c)
    x = x.transpose(0, 1, 3, 5, 7, 2, 4, 6)      # (N, D2, H2, W2, C, 2, 2, 2)
    return x.reshape(n * (d // 2) * (h // 2) * (w // 2), c * 8)


# --------------------------------------------------------------------------
# Parameter init (PyTorch Conv3d layout + uniform bounds) and kernel layouts
# --------------------------------------------------------------------------
def init_params(key, n_classes):
    defs = [(1, 32, 2), (32, 64, 2), (64, 128, 2), (128, 256, 2),
            (256, 256, 1), (256, 256, 1), (256, n_classes, 1)]
    params = []
    for cin, cout, k in defs:
        key, kw_, kb_ = jax.random.split(key, 3)
        fan_in = cin * k ** 3
        bound = 1.0 / float(fan_in) ** 0.5
        wgt = jax.random.uniform(kw_, (cout, cin, k, k, k), jnp.float32, -bound, bound)
        b = jax.random.uniform(kb_, (cout,), jnp.float32, -bound, bound)
        params.append((wgt, b))
    return params


def prepare_params(params, n_classes):
    """PyTorch-layout (C_out, C_in, kd, kh, kw) weights -> GEMM/kernel layouts."""
    (w0, b0), (w1, b1), (w2, b2), (w3, b3), (w4, b4), (w5, b5), (w6, b6) = params

    # conv0 as a (64 -> 256) matrix acting on a 4x4x4 input row (C_in == 1).
    # Row feature index f = d10*16 + h10*4 + w10 (4x4x4 offsets); output column
    # o1*32 + c where o1 = 2x2x2 patch index (== conv1 kernel position).
    w0_g = w0.reshape(32, 8).T                        # (8, 32), rows = (kd,kh,kw)
    idx = jnp.arange(64)
    d10, rem = idx // 16, idx % 16
    h10, w10 = rem // 4, rem % 4
    o1 = (d10 // 2) * 4 + (h10 // 2) * 2 + (w10 // 2)
    o0 = (d10 % 2) * 4 + (h10 % 2) * 2 + (w10 % 2)
    w0_big = jnp.zeros((64, 8, 32), w0.dtype).at[idx, o1].set(w0_g[o0]).reshape(64, 256)
    b0_big = jnp.tile(b0, 8)                          # (256,), matches (o1, C) order

    # conv1 / conv2: K ordered (kernel position, C_in).
    w1_p = jnp.transpose(w1, (2, 3, 4, 1, 0)).reshape(8 * 32, 64)
    w2_p = jnp.transpose(w2, (2, 3, 4, 1, 0)).reshape(8 * 64, 128)
    # conv3: K ordered (C_in, kernel position) to match patchify_222.
    w3_p = w3.reshape(256, 128 * 8).T
    # 1x1x1 convs: plain (C_in, C_out); final layer padded to a lane-dense width.
    w4_p = w4.reshape(256, 256).T
    w5_p = w5.reshape(256, 256).T
    n_pad = _round_up(max(n_classes, 1), _LANE)
    w6_g = w6.reshape(n_classes, 256).T
    w6_p = jnp.zeros((256, n_pad), w6.dtype).at[:, :n_classes].set(w6_g)
    b6_p = jnp.zeros((n_pad,), b6.dtype).at[:n_classes].set(b6)

    bf = lambda a: a.astype(jnp.bfloat16)
    return ((bf(w0_big), b0_big), (bf(w1_p), b1), (bf(w2_p), b2),
            (bf(w3_p), b3), (bf(w4_p), b4), (bf(w5_p), b5), (bf(w6_p), b6_p))


# --------------------------------------------------------------------------
# Full forward pass (matches nn.Sequential(... Flatten) on NCDHW input)
# --------------------------------------------------------------------------
def segmentation_network_full(data, kparams, n_classes):
    """data: (N, 1, D, H, W) f32, D/H/W divisible by 16 -> (N, n_classes*D/16*H/16*W/16)."""
    n, c, d, h, w = data.shape
    assert c == 1 and d % 16 == 0 and h % 16 == 0 and w % 16 == 0
    d8, h8, w8 = d // 8, h // 8, w // 8
    d16, h16, w16 = d // 16, h // 16, w // 16

    l0, l1p, l2p, l3p, l4p, l5p, l6p = kparams

    # Single space-to-rows rearrange: one 64-wide row per conv-1 output voxel,
    # rows ordered (n, d8, h8, w8, d2, h2, w2) so the 8 sibling rows of every
    # conv-2 patch are consecutive (conv1->conv2 regroup becomes a free reshape).
    x = data[:, 0].astype(jnp.bfloat16)
    x = x.reshape(n, d8, 2, 4, h8, 2, 4, w8, 2, 4)
    x = x.transpose(0, 1, 4, 7, 2, 5, 8, 3, 6, 9)
    rows = x.reshape(n * d8 * h8 * w8 * 8, 64)

    # conv0 + conv1 (both + ReLU) fused into one kernel.
    y = gemm_chain(rows, [l0, l1p], ("relu", "relu"), out_dtype=jnp.bfloat16)
    # conv1 -> conv2 patch regroup: pure row-major reshape (no data movement).
    y = y.reshape(-1, 8 * 64)
    # conv2 + ReLU.
    y = gemm_chain(y, [l2p], ("relu",), out_dtype=jnp.bfloat16)
    # conv2 -> conv3 patch regroup (small tensor; XLA transpose).
    y = patchify_222(y.reshape(n, d8, h8, w8, 128))
    # conv3 + ReLU + three 1x1x1 convs (ReLU, ReLU, Sigmoid) fused.
    y = gemm_chain(y, [l3p, l4p, l5p, l6p], ("relu", "relu", "relu", "sigmoid"),
                   out_dtype=jnp.float32)
    y = y[:, :n_classes]

    # Back to NCDHW then Flatten (matches nn.Flatten on the conv output).
    y = y.reshape(n, d16, h16, w16, n_classes)
    y = jnp.transpose(y, (0, 4, 1, 2, 3))
    return y.reshape(n, -1)


# --------------------------------------------------------------------------
# Pure-JAX f32 reference (PyTorch-layout weights, no Pallas) for validation
# --------------------------------------------------------------------------
def reference_forward(data, params):
    x = jnp.transpose(data, (0, 2, 3, 4, 1)).astype(jnp.float32)   # NDHWC
    for li in range(4):
        wgt, b = params[li]
        n_, d_, h_, w_, c_ = x.shape
        xp = x.reshape(n_, d_ // 2, 2, h_ // 2, 2, w_ // 2, 2, c_)
        x = jnp.einsum("nduhvwxc,ocuvx->ndhwo", xp, wgt) + b
        x = jnp.maximum(x, 0.0)
    for li in range(4, 7):
        wgt, b = params[li]
        w2 = wgt.reshape(wgt.shape[0], wgt.shape[1])
        x = jnp.einsum("ndhwc,oc->ndhwo", x, w2) + b
        x = jnp.maximum(x, 0.0) if li < 6 else jax.nn.sigmoid(x)
    x = jnp.transpose(x, (0, 4, 1, 2, 3))
    return x.reshape(x.shape[0], -1)


if __name__ == "__main__":
    n_classes = 3
    key = jax.random.PRNGKey(0)
    key_params, key_data = jax.random.split(key)

    params = init_params(key_params, n_classes)
    kparams = prepare_params(params, n_classes)

    # Smallest interesting shape: spatial 32 (must be divisible by 16).
    data = jax.random.normal(key_data, (2, 1, 32, 32, 32), dtype=jnp.float32)

    forward = jax.jit(segmentation_network_full, static_argnums=2)
    out = jax.block_until_ready(forward(data, kparams, n_classes))

    d16 = 32 // 16
    assert out.shape == (2, n_classes * d16 * d16 * d16), out.shape
    assert bool(jnp.all(jnp.isfinite(out)))

    # Numerical check vs pure-JAX f32 reference (bf16 path -> loose tolerance).
    ref = jax.block_until_ready(jax.jit(reference_forward)(data, params))
    max_err = float(jnp.max(jnp.abs(out - ref)))
    assert max_err < 0.08, f"max abs error vs reference: {max_err}"

    print("KERNEL_OK")
</pallas_src>

<mosaic_0001>
module attributes {stable_mosaic.version = 11 : i64} {
  func.func @_gemm_chain_kernel(%arg0: i32, %arg1: memref<512x64xbf16, #tpu.memory_space<vmem>>, %arg2: memref<64x256xbf16, #tpu.memory_space<vmem>>, %arg3: memref<1x256xf32, #tpu.memory_space<vmem>>, %arg4: memref<256x64xbf16, #tpu.memory_space<vmem>>, %arg5: memref<1x64xf32, #tpu.memory_space<vmem>>, %arg6: memref<512x64xbf16, #tpu.memory_space<vmem>>) attributes {dimension_semantics = [#tpu.dimension_semantics<parallel>], iteration_bounds = array<i64: 2>, scalar_prefetch = 0 : i64, scratch_operands = 0 : i64, tpu.core_type = #tpu.core_type<tc>, window_params = [{transform_indices = @transform_0, window_bounds = array<i64: 512, 64>}, {pipeline_mode = #tpu.pipeline_mode<synchronous>, transform_indices = @transform_1, window_bounds = array<i64: 64, 256>}, {pipeline_mode = #tpu.pipeline_mode<synchronous>, transform_indices = @transform_2, window_bounds = array<i64: 1, 256>}, {pipeline_mode = #tpu.pipeline_mode<synchronous>, transform_indices = @transform_3, window_bounds = array<i64: 256, 64>}, {pipeline_mode = #tpu.pipeline_mode<synchronous>, transform_indices = @transform_4, window_bounds = array<i64: 1, 64>}, {transform_indices = @transform_5, window_bounds = array<i64: 512, 64>}]} {
    %c0 = arith.constant 0 : index
    %c0_0 = arith.constant 0 : index
    %0 = vector.load %arg1[%c0, %c0_0] : memref<512x64xbf16, #tpu.memory_space<vmem>>, vector<512x64xbf16>
    %c0_1 = arith.constant 0 : index
    %c0_2 = arith.constant 0 : index
    %1 = vector.load %arg2[%c0_1, %c0_2] : memref<64x256xbf16, #tpu.memory_space<vmem>>, vector<64x256xbf16>
    %c0_3 = arith.constant 0 : index
    %c0_4 = arith.constant 0 : index
    %2 = vector.load %arg3[%c0_3, %c0_4] : memref<1x256xf32, #tpu.memory_space<vmem>>, vector<1x256xf32>
    %cst = arith.constant dense<0.000000e+00> : vector<512x256xf32>
    %3 = tpu.matmul %0, %1, %cst {dimension_numbers = #tpu.dot_dimension_numbers<[1], [0], [0], [1], [0, 0, 1, 1], [], []>} : vector<512x64xbf16>, vector<64x256xbf16>, vector<512x256xf32> -> vector<512x256xf32>
    %4 = vector.broadcast %2 : vector<1x256xf32> to vector<512x256xf32>
    %5 = arith.addf %3, %4 : vector<512x256xf32>
    %cst_5 = arith.constant 0.000000e+00 : f32
    %6 = vector.broadcast %cst_5 : f32 to vector<512x256xf32>
    %7 = arith.maximumf %5, %6 : vector<512x256xf32>
    %8 = arith.truncf %7 : vector<512x256xf32> to vector<512x256xbf16>
    %c0_6 = arith.constant 0 : index
    %c0_7 = arith.constant 0 : index
    %9 = vector.load %arg4[%c0_6, %c0_7] : memref<256x64xbf16, #tpu.memory_space<vmem>>, vector<256x64xbf16>
    %c0_8 = arith.constant 0 : index
    %c0_9 = arith.constant 0 : index
    %10 = vector.load %arg5[%c0_8, %c0_9] : memref<1x64xf32, #tpu.memory_space<vmem>>, vector<1x64xf32>
    %cst_10 = arith.constant dense<0.000000e+00> : vector<512x64xf32>
    %11 = tpu.matmul %8, %9, %cst_10 {dimension_numbers = #tpu.dot_dimension_numbers<[1], [0], [0], [1], [0, 0, 1, 1], [], []>} : vector<512x256xbf16>, vector<256x64xbf16>, vector<512x64xf32> -> vector<512x64xf32>
    %12 = vector.broadcast %10 : vector<1x64xf32> to vector<512x64xf32>
    %13 = arith.addf %11, %12 : vector<512x64xf32>
    %cst_11 = arith.constant 0.000000e+00 : f32
    %14 = vector.broadcast %cst_11 : f32 to vector<512x64xf32>
    %15 = arith.maximumf %13, %14 : vector<512x64xf32>
    %16 = arith.truncf %15 : vector<512x64xf32> to vector<512x64xbf16>
    %c0_12 = arith.constant 0 : index
    %c0_13 = arith.constant 0 : index
    %17 = vector.load %arg6[%c0_12, %c0_13] : memref<512x64xbf16, #tpu.memory_space<vmem>>, vector<512x64xbf16>
    tpu.vector_store %arg6[%c0_12, %c0_13], %16 {strides = array<i32>} : memref<512x64xbf16, #tpu.memory_space<vmem>>, vector<512x64xbf16>,
    return
  }
  func.func @transform_0(%arg0: i32) -> (i32, i32) {
    %c0_i32 = arith.constant 0 : i32
    %c0_i32_0 = arith.constant 0 : i32
    return %arg0, %c0_i32 : i32, i32
  }
  func.func @transform_1(%arg0: i32) -> (i32, i32) {
    %c0_i32 = arith.constant 0 : i32
    %c0_i32_0 = arith.constant 0 : i32
    %c0_i32_1 = arith.constant 0 : i32
    return %c0_i32, %c0_i32_0 : i32, i32
  }
  func.func @transform_2(%arg0: i32) -> (i32, i32) {
    %c0_i32 = arith.constant 0 : i32
    %c0_i32_0 = arith.constant 0 : i32
    %c0_i32_1 = arith.constant 0 : i32
    return %c0_i32, %c0_i32_0 : i32, i32
  }
  func.func @transform_3(%arg0: i32) -> (i32, i32) {
    %c0_i32 = arith.constant 0 : i32
    %c0_i32_0 = arith.constant 0 : i32
    %c0_i32_1 = arith.constant 0 : i32
    return %c0_i32, %c0_i32_0 : i32, i32
  }
  func.func @transform_4(%arg0: i32) -> (i32, i32) {
    %c0_i32 = arith.constant 0 : i32
    %c0_i32_0 = arith.constant 0 : i32
    %c0_i32_1 = arith.constant 0 : i32
    return %c0_i32, %c0_i32_0 : i32, i32
  }
  func.func @transform_5(%arg0: i32) -> (i32, i32) {
    %c0_i32 = arith.constant 0 : i32
    %c0_i32_0 = arith.constant 0 : i32
    return %arg0, %c0_i32 : i32, i32
  }
}

module attributes {stable_mosaic.version = 11 : i64} {
  func.func @_gemm_chain_kernel(%arg0: i32, %arg1: memref<128x512xbf16, #tpu.memory_space<vmem>>, %arg2: memref<512x128xbf16, #tpu.memory_space<vmem>>, %arg3: memref<1x128xf32, #tpu.memory_space<vmem>>, %arg4: memref<128x128xbf16, #tpu.memory_space<vmem>>) attributes {dimension_semantics = [#tpu.dimension_semantics<parallel>], iteration_bounds = array<i64: 1>, scalar_prefetch = 0 : i64, scratch_operands = 0 : i64, tpu.core_type = #tpu.core_type<tc>, window_params = [{transform_indices = @transform_0, window_bounds = array<i64: 128, 512>}, {pipeline_mode = #tpu.pipeline_mode<synchronous>, transform_indices = @transform_1, window_bounds = array<i64: 512, 128>}, {pipeline_mode = #tpu.pipeline_mode<synchronous>, transform_indices = @transform_2, window_bounds = array<i64: 1, 128>}, {transform_indices = @transform_3, window_bounds = array<i64: 128, 128>}]} {
    %c0 = arith.constant 0 : index
    %c0_0 = arith.constant 0 : index
    %0 = vector.load %arg1[%c0, %c0_0] : memref<128x512xbf16, #tpu.memory_space<vmem>>, vector<128x512xbf16>
    %c0_1 = arith.constant 0 : index
    %c0_2 = arith.constant 0 : index
    %1 = vector.load %arg2[%c0_1, %c0_2] : memref<512x128xbf16, #tpu.memory_space<vmem>>, vector<512x128xbf16>
    %c0_3 = arith.constant 0 : index
    %c0_4 = arith.constant 0 : index
    %2 = vector.load %arg3[%c0_3, %c0_4] : memref<1x128xf32, #tpu.memory_space<vmem>>, vector<1x128xf32>
    %cst = arith.constant dense<0.000000e+00> : vector<128x128xf32>
    %3 = tpu.matmul %0, %1, %cst {dimension_numbers = #tpu.dot_dimension_numbers<[1], [0], [0], [1], [0, 0, 1, 1], [], []>} : vector<128x512xbf16>, vector<512x128xbf16>, vector<128x128xf32> -> vector<128x128xf32>
    %4 = vector.broadcast %2 : vector<1x128xf32> to vector<128x128xf32>
    %5 = arith.addf %3, %4 : vector<128x128xf32>
    %cst_5 = arith.constant 0.000000e+00 : f32
    %6 = vector.broadcast %cst_5 : f32 to vector<128x128xf32>
    %7 = arith.maximumf %5, %6 : vector<128x128xf32>
    %8 = arith.truncf %7 : vector<128x128xf32> to vector<128x128xbf16>
    %c0_6 = arith.constant 0 : index
    %c0_7 = arith.constant 0 : index
    %9 = vector.load %arg4[%c0_6, %c0_7] : memref<128x128xbf16, #tpu.memory_space<vmem>>, vector<128x128xbf16>
    tpu.vector_store %arg4[%c0_6, %c0_7], %8 {strides = array<i32>} : memref<128x128xbf16, #tpu.memory_space<vmem>>, vector<128x128xbf16>,
    return
  }
  func.func @transform_0(%arg0: i32) -> (i32, i32) {
    %c0_i32 = arith.constant 0 : i32
    %c0_i32_0 = arith.constant 0 : i32
    return %arg0, %c0_i32 : i32, i32
  }
  func.func @transform_1(%arg0: i32) -> (i32, i32) {
    %c0_i32 = arith.constant 0 : i32
    %c0_i32_0 = arith.constant 0 : i32
    %c0_i32_1 = arith.constant 0 : i32
    return %c0_i32, %c0_i32_0 : i32, i32
  }
  func.func @transform_2(%arg0: i32) -> (i32, i32) {
    %c0_i32 = arith.constant 0 : i32
    %c0_i32_0 = arith.constant 0 : i32
    %c0_i32_1 = arith.constant 0 : i32
    return %c0_i32, %c0_i32_0 : i32, i32
  }
  func.func @transform_3(%arg0: i32) -> (i32, i32) {
    %c0_i32 = arith.constant 0 : i32
    %c0_i32_0 = arith.constant 0 : i32
    return %arg0, %c0_i32 : i32, i32
  }
}

module attributes {stable_mosaic.version = 11 : i64} {
  func.func @_gemm_chain_kernel(%arg0: i32, %arg1: memref<16x1024xbf16, #tpu.memory_space<vmem>>, %arg2: memref<1024x256xbf16, #tpu.memory_space<vmem>>, %arg3: memref<1x256xf32, #tpu.memory_space<vmem>>, %arg4: memref<256x256xbf16, #tpu.memory_space<vmem>>, %arg5: memref<1x256xf32, #tpu.memory_space<vmem>>, %arg6: memref<256x256xbf16, #tpu.memory_space<vmem>>, %arg7: memref<1x256xf32, #tpu.memory_space<vmem>>, %arg8: memref<256x128xbf16, #tpu.memory_space<vmem>>, %arg9: memref<1x128xf32, #tpu.memory_space<vmem>>, %arg10: memref<16x128xf32, #tpu.memory_space<vmem>>) attributes {dimension_semantics = [#tpu.dimension_semantics<parallel>], iteration_bounds = array<i64: 1>, scalar_prefetch = 0 : i64, scratch_operands = 0 : i64, tpu.core_type = #tpu.core_type<tc>, window_params = [{transform_indices = @transform_0, window_bounds = array<i64: 16, 1024>}, {pipeline_mode = #tpu.pipeline_mode<synchronous>, transform_indices = @transform_1, window_bounds = array<i64: 1024, 256>}, {pipeline_mode = #tpu.pipeline_mode<synchronous>, transform_indices = @transform_2, window_bounds = array<i64: 1, 256>}, {pipeline_mode = #tpu.pipeline_mode<synchronous>, transform_indices = @transform_3, window_bounds = array<i64: 256, 256>}, {pipeline_mode = #tpu.pipeline_mode<synchronous>, transform_indices = @transform_4, window_bounds = array<i64: 1, 256>}, {pipeline_mode = #tpu.pipeline_mode<synchronous>, transform_indices = @transform_5, window_bounds = array<i64: 256, 256>}, {pipeline_mode = #tpu.pipeline_mode<synchronous>, transform_indices = @transform_6, window_bounds = array<i64: 1, 256>}, {pipeline_mode = #tpu.pipeline_mode<synchronous>, transform_indices = @transform_7, window_bounds = array<i64: 256, 128>}, {pipeline_mode = #tpu.pipeline_mode<synchronous>, transform_indices = @transform_8, window_bounds = array<i64: 1, 128>}, {transform_indices = @transform_9, window_bounds = array<i64: 16, 128>}]} {
    %c0 = arith.constant 0 : index
    %c0_0 = arith.constant 0 : index
    %0 = vector.load %arg1[%c0, %c0_0] : memref<16x1024xbf16, #tpu.memory_space<vmem>>, vector<16x1024xbf16>
    %c0_1 = arith.constant 0 : index
    %c0_2 = arith.constant 0 : index
    %1 = vector.load %arg2[%c0_1, %c0_2] : memref<1024x256xbf16, #tpu.memory_space<vmem>>, vector<1024x256xbf16>
    %c0_3 = arith.constant 0 : index
    %c0_4 = arith.constant 0 : index
    %2 = vector.load %arg3[%c0_3, %c0_4] : memref<1x256xf32, #tpu.memory_space<vmem>>, vector<1x256xf32>
    %cst = arith.constant dense<0.000000e+00> : vector<16x256xf32>
    %3 = tpu.matmul %0, %1, %cst {dimension_numbers = #tpu.dot_dimension_numbers<[1], [0], [0], [1], [0, 0, 1, 1], [], []>} : vector<16x1024xbf16>, vector<1024x256xbf16>, vector<16x256xf32> -> vector<16x256xf32>
    %4 = vector.broadcast %2 : vector<1x256xf32> to vector<16x256xf32>
    %5 = arith.addf %3, %4 : vector<16x256xf32>
    %cst_5 = arith.constant 0.000000e+00 : f32
    %6 = vector.broadcast %cst_5 : f32 to vector<16x256xf32>
    %7 = arith.maximumf %5, %6 : vector<16x256xf32>
    %8 = arith.truncf %7 : vector<16x256xf32> to vector<16x256xbf16>
    %c0_6 = arith.constant 0 : index
    %c0_7 = arith.constant 0 : index
    %9 = vector.load %arg4[%c0_6, %c0_7] : memref<256x256xbf16, #tpu.memory_space<vmem>>, vector<256x256xbf16>
    %c0_8 = arith.constant 0 : index
    %c0_9 = arith.constant 0 : index
    %10 = vector.load %arg5[%c0_8, %c0_9] : memref<1x256xf32, #tpu.memory_space<vmem>>, vector<1x256xf32>
    %cst_10 = arith.constant dense<0.000000e+00> : vector<16x256xf32>
    %11 = tpu.matmul %8, %9, %cst_10 {dimension_numbers = #tpu.dot_dimension_numbers<[1], [0], [0], [1], [0, 0, 1, 1], [], []>} : vector<16x256xbf16>, vector<256x256xbf16>, vector<16x256xf32> -> vector<16x256xf32>
    %12 = vector.broadcast %10 : vector<1x256xf32> to vector<16x256xf32>
    %13 = arith.addf %11, %12 : vector<16x256xf32>
    %cst_11 = arith.constant 0.000000e+00 : f32
    %14 = vector.broadcast %cst_11 : f32 to vector<16x256xf32>
    %15 = arith.maximumf %13, %14 : vector<16x256xf32>
    %16 = arith.truncf %15 : vector<16x256xf32> to vector<16x256xbf16>
    %c0_12 = arith.constant 0 : index
    %c0_13 = arith.constant 0 : index
    %17 = vector.load %arg6[%c0_12, %c0_13] : memref<256x256xbf16, #tpu.memory_space<vmem>>, vector<256x256xbf16>
    %c0_14 = arith.constant 0 : index
    %c0_15 = arith.constant 0 : index
    %18 = vector.load %arg7[%c0_14, %c0_15] : memref<1x256xf32, #tpu.memory_space<vmem>>, vector<1x256xf32>
    %cst_16 = arith.constant dense<0.000000e+00> : vector<16x256xf32>
    %19 = tpu.matmul %16, %17, %cst_16 {dimension_numbers = #tpu.dot_dimension_numbers<[1], [0], [0], [1], [0, 0, 1, 1], [], []>} : vector<16x256xbf16>, vector<256x256xbf16>, vector<16x256xf32> -> vector<16x256xf32>
    %20 = vector.broadcast %18 : vector<1x256xf32> to vector<16x256xf32>
    %21 = arith.addf %19, %20 : vector<16x256xf32>
    %cst_17 = arith.constant 0.000000e+00 : f32
    %22 = vector.broadcast %cst_17 : f32 to vector<16x256xf32>
    %23 = arith.maximumf %21, %22 : vector<16x256xf32>
    %24 = arith.truncf %23 : vector<16x256xf32> to vector<16x256xbf16>
    %c0_18 = arith.constant 0 : index
    %c0_19 = arith.constant 0 : index
    %25 = vector.load %arg8[%c0_18, %c0_19] : memref<256x128xbf16, #tpu.memory_space<vmem>>, vector<256x128xbf16>
    %c0_20 = arith.constant 0 : index
    %c0_21 = arith.constant 0 : index
    %26 = vector.load %arg9[%c0_20, %c0_21] : memref<1x128xf32, #tpu.memory_space<vmem>>, vector<1x128xf32>
    %cst_22 = arith.constant dense<0.000000e+00> : vector<16x128xf32>
    %27 = tpu.matmul %24, %25, %cst_22 {dimension_numbers = #tpu.dot_dimension_numbers<[1], [0], [0], [1], [0, 0, 1, 1], [], []>} : vector<16x256xbf16>, vector<256x128xbf16>, vector<16x128xf32> -> vector<16x128xf32>
    %28 = vector.broadcast %26 : vector<1x128xf32> to vector<16x128xf32>
    %29 = arith.addf %27, %28 : vector<16x128xf32>
    %30 = arith.negf %29 : vector<16x128xf32>
    %31 = math.exp %30 : vector<16x128xf32>
    %cst_23 = arith.constant 1.000000e+00 : f32
    %32 = vector.broadcast %cst_23 : f32 to vector<16x128xf32>
    %33 = arith.addf %32, %31 : vector<16x128xf32>
    %34 = arith.divf %32, %33 : vector<16x128xf32>
    %c0_24 = arith.constant 0 : index
    %c0_25 = arith.constant 0 : index
    %35 = vector.load %arg10[%c0_24, %c0_25] : memref<16x128xf32, #tpu.memory_space<vmem>>, vector<16x128xf32>
    tpu.vector_store %arg10[%c0_24, %c0_25], %34 {strides = array<i32>} : memref<16x128xf32, #tpu.memory_space<vmem>>, vector<16x128xf32>,
    return
  }
  func.func @transform_0(%arg0: i32) -> (i32, i32) {
    %c0_i32 = arith.constant 0 : i32
    %c0_i32_0 = arith.constant 0 : i32
    return %arg0, %c0_i32 : i32, i32
  }
  func.func @transform_1(%arg0: i32) -> (i32, i32) {
    %c0_i32 = arith.constant 0 : i32
    %c0_i32_0 = arith.constant 0 : i32
    %c0_i32_1 = arith.constant 0 : i32
    return %c0_i32, %c0_i32_0 : i32, i32
  }
  func.func @transform_2(%arg0: i32) -> (i32, i32) {
    %c0_i32 = arith.constant 0 : i32
    %c0_i32_0 = arith.constant 0 : i32
    %c0_i32_1 = arith.constant 0 : i32
    return %c0_i32, %c0_i32_0 : i32, i32
  }
  func.func @transform_3(%arg0: i32) -> (i32, i32) {
    %c0_i32 = arith.constant 0 : i32
    %c0_i32_0 = arith.constant 0 : i32
    %c0_i32_1 = arith.constant 0 : i32
    return %c0_i32, %c0_i32_0 : i32, i32
  }
  func.func @transform_4(%arg0: i32) -> (i32, i32) {
    %c0_i32 = arith.constant 0 : i32
    %c0_i32_0 = arith.constant 0 : i32
    %c0_i32_1 = arith.constant 0 : i32
    return %c0_i32, %c0_i32_0 : i32, i32
  }
  func.func @transform_5(%arg0: i32) -> (i32, i32) {
    %c0_i32 = arith.constant 0 : i32
    %c0_i32_0 = arith.constant 0 : i32
    %c0_i32_1 = arith.constant 0 : i32
    return %c0_i32, %c0_i32_0 : i32, i32
  }
  func.func @transform_6(%arg0: i32) -> (i32, i32) {
    %c0_i32 = arith.constant 0 : i32
    %c0_i32_0 = arith.constant 0 : i32
    %c0_i32_1 = arith.constant 0 : i32
    return %c0_i32, %c0_i32_0 : i32, i32
  }
  func.func @transform_7(%arg0: i32) -> (i32, i32) {
    %c0_i32 = arith.constant 0 : i32
    %c0_i32_0 = arith.constant 0 : i32
    %c0_i32_1 = arith.constant 0 : i32
    return %c0_i32, %c0_i32_0 : i32, i32
  }
  func.func @transform_8(%arg0: i32) -> (i32, i32) {
    %c0_i32 = arith.constant 0 : i32
    %c0_i32_0 = arith.constant 0 : i32
    %c0_i32_1 = arith.constant 0 : i32
    return %c0_i32, %c0_i32_0 : i32, i32
  }
  func.func @transform_9(%arg0: i32) -> (i32, i32) {
    %c0_i32 = arith.constant 0 : i32
    %c0_i32_0 = arith.constant 0 : i32
    return %arg0, %c0_i32 : i32, i32
  }
}

</mosaic_0001>

<llo_original>
// kernel: segmentation_network_full.3
$region0: #{segmentation_network_full.3}
  #allocation0 [shape = 'u32[]', space=smem, size = 0x4, offset = 0x4, fixed_abs, tag = 'smem constant byte address 0x4 - core index']
  #allocation1 [shape = 'u32[72,128]{1,0:T(1,128)}', space=vmem, size = 0x9000, scoped, tag = 'internal scratch']
  %s0 = inlined_call_operand.vmem [shape: bf16[1024,64], index: 0, kind: input, shape index: {}]
  %s1 = inlined_call_operand.vmem [shape: bf16[64,256], index: 1, kind: input, shape index: {}]
  %s2 = inlined_call_operand.vmem [shape: f32[1,256], index: 2, kind: input, shape index: {}]
  %s3 = inlined_call_operand.vmem [shape: bf16[256,64], index: 3, kind: input, shape index: {}]
  %s4 = inlined_call_operand.vmem [shape: f32[1,64], index: 4, kind: input, shape index: {}]
  %s5 = inlined_call_operand.vmem [shape: bf16[1024,64], index: 5, kind: output, shape index: {}]
  %s6 = sld [smem:[#allocation0]]
  $region53: #{segmentation_network_full.3} parent=0
    _
  %s8 = ssub.s32 1, %s6
  %s9 = scalar_select 0, %s8, %s6
  loop: start=0, step=1, limit=4
  $region2: #{segmentation_network_full.3} parent=0 // loop_pre_header
    _
  $region3: #{segmentation_network_full.3} parent=0 // loop_header
    %s11 = sphi 0, %s15
    %p12 = scmp.ge.s32.totalorder %s11, 4
    %s21 = sphi 0, %s23
    %s24 = sphi 0, %s21
    %s25 = sphi 0, %s24
    %s41 = sphi 0, %s25
    %s45 = sphi 0, %s45
    %s47 = sphi 0, %s45
    %s48 = sphi 0, %s47
    %s62 = sphi 0, %s48
    %s66 = sphi 0, %s66
    %s68 = sphi 0, %s66
    %s69 = sphi 0, %s68
    %s83 = sphi 0, %s69
    %s87 = sphi 0, %s87
    %s89 = sphi 0, %s87
    %s90 = sphi 0, %s89
    %s104 = sphi 0, %s90
    %s108 = sphi 0, %s108
    %s110 = sphi 0, %s108
    %s111 = sphi 0, %s110
    %s125 = sphi 0, %s111
    %s131 = sphi 0, %s133
    %s134 = sphi 0, %s131
    %s135 = sphi 0, %s134
    %s151 = sphi 0, %s135
  $region4: #{segmentation_network_full.3} parent=0 // loop_header_branch
    %14 = sbr.rel (%p12) target = $region8
  $region5: #{segmentation_network_full.3} parent=0 // loop_body
    %s16 = ssub.s32 %s11, 1
    %s17 = ssub.s32 %s11, 2
    %s18 = sadd.s32 %s11, 1
    %s19 = ssub.s32 %s11, %s18
    %p20 = scmp.eq.s32.totalorder %s19, 0
    %s22 = sadd.s32 %s21, 1
    %s23 = scalar_select %p20, %s21, %s22
    %p26 = pneg %p20
    %p27 = scmp.eq.s32.totalorder %s11, 1
    %p28 = por %p26, %p27
    %p29 = scmp.ne.s32.totalorder %s21, %s24
    %p30 = scmp.eq.s32.totalorder %s11, 0
    %p31 = por %p29, %p30
    %p32 = scmp.ne.s32.totalorder %s21, %s24
    %p33 = scmp.eq.s32.totalorder %s16, 1
    %p34 = por %p32, %p33
    %p35 = scmp.ne.s32.totalorder %s24, %s25
    %p36 = scmp.eq.s32.totalorder %s16, 0
    %p37 = por %p35, %p36
    %p38 = scmp.ne.s32.totalorder %s24, %s25
    %p39 = scmp.eq.s32.totalorder %s17, 1
    %p40 = por %p38, %p39
    %p42 = scmp.ne.s32.totalorder %s25, %s41
    %p43 = scmp.eq.s32.totalorder %s17, 0
    %p44 = por %p42, %p43
    %s46 = sadd.s32 %s45, 1
    %p49 = scmp.eq.s32.totalorder %s11, 1
    %p50 = scmp.ne.s32.totalorder %s45, %s47
    %p51 = scmp.eq.s32.totalorder %s11, 0
    %p52 = por %p50, %p51
    %p53 = scmp.ne.s32.totalorder %s45, %s47
    %p54 = scmp.eq.s32.totalorder %s16, 1
    %p55 = por %p53, %p54
    %p56 = scmp.ne.s32.totalorder %s47, %s48
    %p57 = scmp.eq.s32.totalorder %s16, 0
    %p58 = por %p56, %p57
    %p59 = scmp.ne.s32.totalorder %s47, %s48
    %p60 = scmp.eq.s32.totalorder %s17, 1
    %p61 = por %p59, %p60
    %p63 = scmp.ne.s32.totalorder %s48, %s62
    %p64 = scmp.eq.s32.totalorder %s17, 0
    %p65 = por %p63, %p64
    %s67 = sadd.s32 %s66, 1
    %p70 = scmp.eq.s32.totalorder %s11, 1
    %p71 = scmp.ne.s32.totalorder %s66, %s68
    %p72 = scmp.eq.s32.totalorder %s11, 0
    %p73 = por %p71, %p72
    %p74 = scmp.ne.s32.totalorder %s66, %s68
    %p75 = scmp.eq.s32.totalorder %s16, 1
    %p76 = por %p74, %p75
    %p77 = scmp.ne.s32.totalorder %s68, %s69
    %p78 = scmp.eq.s32.totalorder %s16, 0
    %p79 = por %p77, %p78
    %p80 = scmp.ne.s32.totalorder %s68, %s69
    %p81 = scmp.eq.s32.totalorder %s17, 1
    %p82 = por %p80, %p81
    %p84 = scmp.ne.s32.totalorder %s69, %s83
    %p85 = scmp.eq.s32.totalorder %s17, 0
    %p86 = por %p84, %p85
    %s88 = sadd.s32 %s87, 1
    %p91 = scmp.eq.s32.totalorder %s11, 1
    %p92 = scmp.ne.s32.totalorder %s87, %s89
    %p93 = scmp.eq.s32.totalorder %s11, 0
    %p94 = por %p92, %p93
    %p95 = scmp.ne.s32.totalorder %s87, %s89
    %p96 = scmp.eq.s32.totalorder %s16, 1
    %p97 = por %p95, %p96
    %p98 = scmp.ne.s32.totalorder %s89, %s90
    %p99 = scmp.eq.s32.totalorder %s16, 0
    %p100 = por %p98, %p99
    %p101 = scmp.ne.s32.totalorder %s89, %s90
    %p102 = scmp.eq.s32.totalorder %s17, 1
    %p103 = por %p101, %p102
    %p105 = scmp.ne.s32.totalorder %s90, %s104
    %p106 = scmp.eq.s32.totalorder %s17, 0
    %p107 = por %p105, %p106
    %s109 = sadd.s32 %s108, 1
    %p112 = scmp.eq.s32.totalorder %s11, 1
    %p113 = scmp.ne.s32.totalorder %s108, %s110
    %p114 = scmp.eq.s32.totalorder %s11, 0
    %p115 = por %p113, %p114
    %p116 = scmp.ne.s32.totalorder %s108, %s110
    %p117 = scmp.eq.s32.totalorder %s16, 1
    %p118 = por %p116, %p117
    %p119 = scmp.ne.s32.totalorder %s110, %s111
    %p120 = scmp.eq.s32.totalorder %s16, 0
    %p121 = por %p119, %p120
    %p122 = scmp.ne.s32.totalorder %s110, %s111
    %p123 = scmp.eq.s32.totalorder %s17, 1
    %p124 = por %p122, %p123
    %p126 = scmp.ne.s32.totalorder %s111, %s125
    %p127 = scmp.eq.s32.totalorder %s17, 0
    %p128 = por %p126, %p127
    %s129 = ssub.s32 %s11, %s18
    %p130 = scmp.eq.s32.totalorder %s129, 0
    %s132 = sadd.s32 %s131, 1
    %s133 = scalar_select %p130, %s131, %s132
    %p136 = pneg %p130
    %p137 = scmp.eq.s32.totalorder %s11, 1
    %p138 = por %p136, %p137
    %p139 = scmp.ne.s32.totalorder %s131, %s134
    %p140 = scmp.eq.s32.totalorder %s11, 0
    %p141 = por %p139, %p140
    %p142 = scmp.ne.s32.totalorder %s131, %s134
    %p143 = scmp.eq.s32.totalorder %s16, 1
    %p144 = por %p142, %p143
    %p145 = scmp.ne.s32.totalorder %s134, %s135
    %p146 = scmp.eq.s32.totalorder %s16, 0
    %p147 = por %p145, %p146
    %p148 = scmp.ne.s32.totalorder %s134, %s135
    %p149 = scmp.eq.s32.totalorder %s17, 1
    %p150 = por %p148, %p149
    %p152 = scmp.ne.s32.totalorder %s135, %s151
    %p153 = scmp.eq.s32.totalorder %s17, 0
    %p154 = por %p152, %p153
    %p155 = scmp.le.s32.totalorder 1, %s11
    %p156 = scmp.lt.s32.totalorder %s11, 3
    %p157 = pnand %p155, %p156
    %p158 = pneg %p157
    // Predicated region
    $region9: #{segmentation_network_full.3} parent=5 // pred_check
      _
    $region10: #{segmentation_network_full.3} parent=5 // pred_check_branch
      %160 = sbr.rel (%p157) target = $region12
    $region11: #{segmentation_network_full.3} parent=5 // pred_region
      %s161 = ssub.s32 %s11, 1
      // Predicated region
      $region13: #{segmentation_network_full.3} parent=11 // pred_check
        %p162 = pneg %p58
      $region14: #{segmentation_network_full.3} parent=11 // pred_check_branch
        %164 = sbr.rel (%p162) target = $region16
      $region15: #{segmentation_network_full.3} parent=11 // pred_region
        _
      $region16: #{segmentation_network_full.3} parent=11 // pred_fallthru
        _
      // Predicated region
      $region17: #{segmentation_network_full.3} parent=11 // pred_check
        %p165 = pneg %p79
      $region18: #{segmentation_network_full.3} parent=11 // pred_check_branch
        %167 = sbr.rel (%p165) target = $region20
      $region19: #{segmentation_network_full.3} parent=11 // pred_region
        _
      $region20: #{segmentation_network_full.3} parent=11 // pred_fallthru
        _
      // Predicated region
      $region21: #{segmentation_network_full.3} parent=11 // pred_check
        %p168 = pneg %p100
      $region22: #{segmentation_network_full.3} parent=11 // pred_check_branch
        %170 = sbr.rel (%p168) target = $region24
      $region23: #{segmentation_network_full.3} parent=11 // pred_region
        _
      $region24: #{segmentation_network_full.3} parent=11 // pred_fallthru
        _
      // Predicated region
      $region25: #{segmentation_network_full.3} parent=11 // pred_check
        %p171 = pneg %p121
      $region26: #{segmentation_network_full.3} parent=11 // pred_check_branch
        %173 = sbr.rel (%p171) target = $region28
      $region27: #{segmentation_network_full.3} parent=11 // pred_region
        _
      $region28: #{segmentation_network_full.3} parent=11 // pred_fallthru
        _
    $region12: #{segmentation_network_full.3} parent=5 // pred_fallthru
      _
    %p174 = scmp.lt.s32.totalorder %s11, 2
    // Predicated region
    $region29: #{segmentation_network_full.3} parent=5 // pred_check
      %p175 = pneg %p174
    $region30: #{segmentation_network_full.3} parent=5 // pred_check_branch
      %177 = sbr.rel (%p175) target = $region32
    $region31: #{segmentation_network_full.3} parent=5 // pred_region
      // Predicated region
      $region33: #{segmentation_network_full.3} parent=31 // pred_check
        %p178 = pneg %p31
      $region34: #{segmentation_network_full.3} parent=31 // pred_check_branch
        %180 = sbr.rel (%p178) target = $region36
      $region35: #{segmentation_network_full.3} parent=31 // pred_region
        %s181 = smul.u32 64, %s11
        %p182 = scmp.lt.s32.totalorder %s181, 127
        %s183 = scalar_select %p182, %s181, 127
        %s184 = smul.addr %s183, 4
        %s185 = scalar_lea.vmem %s0, %s184
        %s186 = smul.u32 64, %s11
      $region36: #{segmentation_network_full.3} parent=31 // pred_fallthru
        _
    $region32: #{segmentation_network_full.3} parent=5 // pred_fallthru
      _
    %p187 = scmp.le.s32.totalorder 1, %s11
    %p188 = scmp.lt.s32.totalorder %s11, 3
    %p189 = pnand %p187, %p188
    %p190 = pneg %p189
    // Predicated region
    $region37: #{segmentation_network_full.3} parent=5 // pred_check
      _
    $region38: #{segmentation_network_full.3} parent=5 // pred_check_branch
      %192 = sbr.rel (%p189) target = $region40
    $region39: #{segmentation_network_full.3} parent=5 // pred_region
      %s193 = ssub.s32 %s11, 1
      %s194 = smul.u32 64, %s16
      %p195 = scmp.lt.s32.totalorder %s194, 127
      %s196 = scalar_select %p195, %s194, 127
      %s197 = smul.addr %s196, 4
      %s198 = scalar_lea.vmem %s0, %s197
      %p199 = pneg %p37
      %p200 = pneg %p34
      %p201 = pneg %p58
      %p202 = pneg %p55
      %p203 = pneg %p79
      %p204 = pneg %p76
      %p205 = pneg %p100
      %p206 = pneg %p97
      %p207 = pneg %p121
      %p208 = pneg %p118
      %p209 = pneg %p147
      %p210 = pneg %p144
      %s211 = smul.u32 64, %s16
      %p212 = scmp.lt.s32.totalorder %s211, 127
      %s213 = scalar_select %p212, %s211, 127
      %s214 = smul.addr %s213, 4
      %s215 = scalar_lea.vmem %s5, %s214
      %s216 = smul.u32 64, %s16
      %p217 = scmp.lt.s32.totalorder %s216, 127
      %s218 = scalar_select %p217, %s216, 127
      %s219 = smul.addr %s218, 4
      %s220 = scalar_lea.vmem %s0, %s219
      %s221 = smul.u32 64, %s16
      %s222 = smul.u32 64, %s16
      %p223 = scmp.lt.s32.totalorder %s222, 127
      %s224 = scalar_select %p223, %s222, 127
      %s225 = smul.addr %s224, 4
      %s226 = scalar_lea.vmem %s5, %s225
      %s227 = smul.u32 64, %s16
      %v229 = vld [vmem:[%s220] sm:$0xf]
      %v230 = vld [vmem:[%s220 + $0x4] sm:$0xf]
      %v231 = vld [vmem:[%s220 + $0x8] sm:$0xf]
      %v232 = vld [vmem:[%s220 + $0xc] sm:$0xf]
      %v233 = vld [vmem:[%s220 + $0x10] sm:$0xf]
      %v234 = vld [vmem:[%s220 + $0x14] sm:$0xf]
      %v235 = vld [vmem:[%s220 + $0x18] sm:$0xf]
      %v236 = vld [vmem:[%s220 + $0x1c] sm:$0xf]
      %v237 = vld [vmem:[%s220 + $0x20] sm:$0xf]
      %v238 = vld [vmem:[%s220 + $0x24] sm:$0xf]
      %v239 = vld [vmem:[%s220 + $0x28] sm:$0xf]
      %v240 = vld [vmem:[%s220 + $0x2c] sm:$0xf]
      %v241 = vld [vmem:[%s220 + $0x30] sm:$0xf]
      %v242 = vld [vmem:[%s220 + $0x34] sm:$0xf]
      %v243 = vld [vmem:[%s220 + $0x38] sm:$0xf]
      %v244 = vld [vmem:[%s220 + $0x3c] sm:$0xf]
      %v245 = vld [vmem:[%s220 + $0x40] sm:$0xf]
      %v246 = vld [vmem:[%s220 + $0x44] sm:$0xf]
      %v247 = vld [vmem:[%s220 + $0x48] sm:$0xf]
      %v248 = vld [vmem:[%s220 + $0x4c] sm:$0xf]
      %v249 = vld [vmem:[%s220 + $0x50] sm:$0xf]
      %v250 = vld [vmem:[%s220 + $0x54] sm:$0xf]
      %v251 = vld [vmem:[%s220 + $0x58] sm:$0xf]
      %v252 = vld [vmem:[%s220 + $0x5c] sm:$0xf]
      %v253 = vld [vmem:[%s220 + $0x60] sm:$0xf]
      %v254 = vld [vmem:[%s220 + $0x64] sm:$0xf]
      %v255 = vld [vmem:[%s220 + $0x68] sm:$0xf]
      %v256 = vld [vmem:[%s220 + $0x6c] sm:$0xf]
      %v257 = vld [vmem:[%s220 + $0x70] sm:$0xf]
      %v258 = vld [vmem:[%s220 + $0x74] sm:$0xf]
      %v259 = vld [vmem:[%s220 + $0x78] sm:$0xf]
      %v260 = vld [vmem:[%s220 + $0x7c] sm:$0xf]
      %v261 = vld [vmem:[%s220 + $0x80] sm:$0xf]
      %v262 = vld [vmem:[%s220 + $0x84] sm:$0xf]
      %v263 = vld [vmem:[%s220 + $0x88] sm:$0xf]
      %v264 = vld [vmem:[%s220 + $0x8c] sm:$0xf]
      %v265 = vld [vmem:[%s220 + $0x90] sm:$0xf]
      %v266 = vld [vmem:[%s220 + $0x94] sm:$0xf]
      %v267 = vld [vmem:[%s220 + $0x98] sm:$0xf]
      %v268 = vld [vmem:[%s220 + $0x9c] sm:$0xf]
      %v269 = vld [vmem:[%s220 + $0xa0] sm:$0xf]
      %v270 = vld [vmem:[%s220 + $0xa4] sm:$0xf]
      %v271 = vld [vmem:[%s220 + $0xa8] sm:$0xf]
      %v272 = vld [vmem:[%s220 + $0xac] sm:$0xf]
      %v273 = vld [vmem:[%s220 + $0xb0] sm:$0xf]
      %v274 = vld [vmem:[%s220 + $0xb4] sm:$0xf]
      %v275 = vld [vmem:[%s220 + $0xb8] sm:$0xf]
      %v276 = vld [vmem:[%s220 + $0xbc] sm:$0xf]
      %v277 = vld [vmem:[%s220 + $0xc0] sm:$0xf]
      %v278 = vld [vmem:[%s220 + $0xc4] sm:$0xf]
      %v279 = vld [vmem:[%s220 + $0xc8] sm:$0xf]
      %v280 = vld [vmem:[%s220 + $0xcc] sm:$0xf]
      %v281 = vld [vmem:[%s220 + $0xd0] sm:$0xf]
      %v282 = vld [vmem:[%s220 + $0xd4] sm:$0xf]
      %v283 = vld [vmem:[%s220 + $0xd8] sm:$0xf]
      %v284 = vld [vmem:[%s220 + $0xdc] sm:$0xf]
      %v285 = vld [vmem:[%s220 + $0xe0] sm:$0xf]
      %v286 = vld [vmem:[%s220 + $0xe4] sm:$0xf]
      %v287 = vld [vmem:[%s220 + $0xe8] sm:$0xf]
      %v288 = vld [vmem:[%s220 + $0xec] sm:$0xf]
      %v289 = vld [vmem:[%s220 + $0xf0] sm:$0xf]
      %v290 = vld [vmem:[%s220 + $0xf4] sm:$0xf]
      %v291 = vld [vmem:[%s220 + $0xf8] sm:$0xf]
      %v292 = vld [vmem:[%s220 + $0xfc] sm:$0xf]
      %v293 = vld [vmem:[%s1] sm:$0xff]
      %v294 = vld [vmem:[%s1 + $0x8] sm:$0xff]
      %v295 = vld [vmem:[%s1 + $0x10] sm:$0xff]
      %v296 = vld [vmem:[%s1 + $0x18] sm:$0xff]
      %v297 = vld [vmem:[%s1 + $0x20] sm:$0xff]
      %v298 = vld [vmem:[%s1 + $0x28] sm:$0xff]
      %v299 = vld [vmem:[%s1 + $0x30] sm:$0xff]
      %v300 = vld [vmem:[%s1 + $0x38] sm:$0xff]
      %v301 = vld [vmem:[%s2] sm:$0x3]
      %v303 = vperm.slane %v301, 0
      %v304 = vperm.slane %v301, 1
      %v371 = vunpack.c.l.b16 %v229
      %v372 = vunpack.c.l.b16 %v230
      %v373 = vunpack.c.l.b16 %v231
      %v374 = vunpack.c.l.b16 %v232
      %v375 = vunpack.c.l.b16 %v233
      %v376 = vunpack.c.l.b16 %v234
      %v377 = vunpack.c.l.b16 %v235
      %v378 = vunpack.c.l.b16 %v236
      %v379 = vunpack.c.l.b16 %v237
      %v380 = vunpack.c.l.b16 %v238
      %v381 = vunpack.c.l.b16 %v239
      %v382 = vunpack.c.l.b16 %v240
      %v383 = vunpack.c.l.b16 %v241
      %v384 = vunpack.c.l.b16 %v242
      %v385 = vunpack.c.l.b16 %v243
      %v386 = vunpack.c.l.b16 %v244
      %v387 = vunpack.c.l.b16 %v245
      %v388 = vunpack.c.l.b16 %v246
      %v389 = vunpack.c.l.b16 %v247
      %v390 = vunpack.c.l.b16 %v248
      %v391 = vunpack.c.l.b16 %v249
      %v392 = vunpack.c.l.b16 %v250
      %v393 = vunpack.c.l.b16 %v251
      %v394 = vunpack.c.l.b16 %v252
      %v395 = vunpack.c.l.b16 %v253
      %v396 = vunpack.c.l.b16 %v254
      %v397 = vunpack.c.l.b16 %v255
      %v398 = vunpack.c.l.b16 %v256
      %v399 = vunpack.c.l.b16 %v257
      %v400 = vunpack.c.l.b16 %v258
      %v401 = vunpack.c.l.b16 %v259
      %v402 = vunpack.c.l.b16 %v260
      %v403 = vunpack.c.l.b16 %v261
      %v404 = vunpack.c.l.b16 %v262
      %v405 = vunpack.c.l.b16 %v263
      %v406 = vunpack.c.l.b16 %v264
      %v407 = vunpack.c.l.b16 %v265
      %v408 = vunpack.c.l.b16 %v266
      %v409 = vunpack.c.l.b16 %v267
      %v410 = vunpack.c.l.b16 %v268
      %v411 = vunpack.c.l.b16 %v269
      %v412 = vunpack.c.l.b16 %v270
      %v413 = vunpack.c.l.b16 %v271
      %v414 = vunpack.c.l.b16 %v272
      %v415 = vunpack.c.l.b16 %v273
      %v416 = vunpack.c.l.b16 %v274
      %v417 = vunpack.c.l.b16 %v275
      %v418 = vunpack.c.l.b16 %v276
      %v419 = vunpack.c.l.b16 %v277
      %v420 = vunpack.c.l.b16 %v278
      %v421 = vunpack.c.l.b16 %v279
      %v422 = vunpack.c.l.b16 %v280
      %v423 = vunpack.c.l.b16 %v281
      %v424 = vunpack.c.l.b16 %v282
      %v425 = vunpack.c.l.b16 %v283
      %v426 = vunpack.c.l.b16 %v284
      %v427 = vunpack.c.l.b16 %v285
      %v428 = vunpack.c.l.b16 %v286
      %v429 = vunpack.c.l.b16 %v287
      %v430 = vunpack.c.l.b16 %v288
      %v431 = vunpack.c.l.b16 %v289
      %v432 = vunpack.c.l.b16 %v290
      %v433 = vunpack.c.l.b16 %v291
      %v434 = vunpack.c.l.b16 %v292
      %v435 = vpack.c.b16 %v372, %v371
      %v436 = vpack.c.b16 %v374, %v373
      %v437 = vpack.c.b16 %v376, %v375
      %v438 = vpack.c.b16 %v378, %v377
      %v439 = vpack.c.b16 %v380, %v379
      %v440 = vpack.c.b16 %v382, %v381
      %v441 = vpack.c.b16 %v384, %v383
      %v442 = vpack.c.b16 %v386, %v385
      %v443 = vpack.c.b16 %v388, %v387
      %v444 = vpack.c.b16 %v390, %v389
      %v445 = vpack.c.b16 %v392, %v391
      %v446 = vpack.c.b16 %v394, %v393
      %v447 = vpack.c.b16 %v396, %v395
      %v448 = vpack.c.b16 %v398, %v397
      %v449 = vpack.c.b16 %v400, %v399
      %v450 = vpack.c.b16 %v402, %v401
      %v451 = vpack.c.b16 %v404, %v403
      %v452 = vpack.c.b16 %v406, %v405
      %v453 = vpack.c.b16 %v408, %v407
      %v454 = vpack.c.b16 %v410, %v409
      %v455 = vpack.c.b16 %v412, %v411
      %v456 = vpack.c.b16 %v414, %v413
      %v457 = vpack.c.b16 %v416, %v415
      %v458 = vpack.c.b16 %v418, %v417
      %v459 = vpack.c.b16 %v420, %v419
      %v460 = vpack.c.b16 %v422, %v421
      %v461 = vpack.c.b16 %v424, %v423
      %v462 = vpack.c.b16 %v426, %v425
      %v463 = vpack.c.b16 %v428, %v427
      %v464 = vpack.c.b16 %v430, %v429
      %v465 = vpack.c.b16 %v432, %v431
      %v466 = vpack.c.b16 %v434, %v433
      %v475 = vunpack.c.l.b16 %v293
      %v476 = vunpack.c.h.b16 %v293
      %v477 = vunpack.c.l.b16 %v294
      %v478 = vunpack.c.h.b16 %v294
      %v479 = vunpack.c.l.b16 %v295
      %v480 = vunpack.c.h.b16 %v295
      %v481 = vunpack.c.l.b16 %v296
      %v482 = vunpack.c.h.b16 %v296
      %v483 = vunpack.c.l.b16 %v297
      %v484 = vunpack.c.h.b16 %v297
      %v485 = vunpack.c.l.b16 %v298
      %v486 = vunpack.c.h.b16 %v298
      %v487 = vunpack.c.l.b16 %v299
      %v488 = vunpack.c.h.b16 %v299
      %v489 = vunpack.c.l.b16 %v300
      %v490 = vunpack.c.h.b16 %v300
      %v491 = vpack.c.b16 %v477, %v475
      %v492 = vpack.c.b16 %v478, %v476
      %v493 = vpack.c.b16 %v481, %v479
      %v494 = vpack.c.b16 %v482, %v480
      %v495 = vpack.c.b16 %v485, %v483
      %v496 = vpack.c.b16 %v486, %v484
      %v497 = vpack.c.b16 %v489, %v487
      %v498 = vpack.c.b16 %v490, %v488
      %vm507 = vcmask 523264
      %v509 = vsel %vm507, %v435, 0
      %v512 = vsel %vm507, %v436, 0
      %v515 = vsel %vm507, %v437, 0
      %v518 = vsel %vm507, %v438, 0
      %v521 = vsel %vm507, %v439, 0
      %v524 = vsel %vm507, %v440, 0
      %v527 = vsel %vm507, %v441, 0
      %v530 = vsel %vm507, %v442, 0
      %v533 = vsel %vm507, %v443, 0
      %v536 = vsel %vm507, %v444, 0
      %v539 = vsel %vm507, %v445, 0
      %v542 = vsel %vm507, %v446, 0
      %v545 = vsel %vm507, %v447, 0
      %v548 = vsel %vm507, %v448, 0
      %v551 = vsel %vm507, %v449, 0
      %v554 = vsel %vm507, %v450, 0
      %v557 = vsel %vm507, %v451, 0
      %v560 = vsel %vm507, %v452, 0
      %v563 = vsel %vm507, %v453, 0
      %v566 = vsel %vm507, %v454, 0
      %v569 = vsel %vm507, %v455, 0
      %v572 = vsel %vm507, %v456, 0
      %v575 = vsel %vm507, %v457, 0
      %v578 = vsel %vm507, %v458, 0
      %v581 = vsel %vm507, %v459, 0
      %v584 = vsel %vm507, %v460, 0
      %v587 = vsel %vm507, %v461, 0
      %v590 = vsel %vm507, %v462, 0
      %v593 = vsel %vm507, %v463, 0
      %v596 = vsel %vm507, %v464, 0
      %v599 = vsel %vm507, %v465, 0
      %v602 = vsel %vm507, %v466, 0
      %604 = vmatpush.bf16.msra.mxu0 0
      %605 = vmatpush.bf16.msra.mxu0 0
      %606 = vmatpush.bf16.msra.mxu0 0
      %607 = vmatpush.bf16.msra.mxu0 0
      %608 = vmatpush.bf16.msra.mxu0 %v497
      %609 = vmatpush.bf16.msra.mxu0 %v495
      %610 = vmatpush.bf16.msra.mxu0 %v493
      %611 = vmatpush.bf16.msra.mxu0 %v491
      %612 = vmatmul.bf16.gmra.mxu0 %v509
      %v613 = vpop.f32.mrf.mxu0
      %v614 = vadd.f32 %v303, %v613
      %v615 = vpop.f32.mrf.mxu0
      %v616 = vadd.f32 %v303, %v615
      %617 = vmatmul.bf16.gmra.mxu0 %v512
      %v618 = vpop.f32.mrf.mxu0
      %v619 = vadd.f32 %v303, %v618
      %v620 = vpop.f32.mrf.mxu0
      %v621 = vadd.f32 %v303, %v620
      %622 = vmatmul.bf16.gmra.mxu0 %v515
      %v623 = vpop.f32.mrf.mxu0
      %v624 = vadd.f32 %v303, %v623
      %v625 = vpop.f32.mrf.mxu0
      %v626 = vadd.f32 %v303, %v625
      %627 = vmatmul.bf16.gmra.mxu0 %v518
      %v628 = vpop.f32.mrf.mxu0
      %v629 = vadd.f32 %v303, %v628
      %v630 = vpop.f32.mrf.mxu0
      %v631 = vadd.f32 %v303, %v630
      %632 = vmatmul.bf16.gmra.mxu0 %v521
      %v633 = vpop.f32.mrf.mxu0
      %v634 = vadd.f32 %v303, %v633
      %v635 = vpop.f32.mrf.mxu0
      %v636 = vadd.f32 %v303, %v635
      %637 = vmatmul.bf16.gmra.mxu0 %v524
      %v638 = vpop.f32.mrf.mxu0
      %v639 = vadd.f32 %v303, %v638
      %v640 = vpop.f32.mrf.mxu0
      %v641 = vadd.f32 %v303, %v640
      %642 = vmatmul.bf16.gmra.mxu0 %v527
      %v643 = vpop.f32.mrf.mxu0
      %v644 = vadd.f32 %v303, %v643
      %v645 = vpop.f32.mrf.mxu0
      %v646 = vadd.f32 %v303, %v645
      %647 = vmatmul.bf16.gmra.mxu0 %v530
      %v648 = vpop.f32.mrf.mxu0
      %v649 = vadd.f32 %v303, %v648
      %v650 = vpop.f32.mrf.mxu0
      %v651 = vadd.f32 %v303, %v650
      %652 = vmatmul.bf16.gmra.mxu0 %v533
      %v653 = vpop.f32.mrf.mxu0
      %v654 = vadd.f32 %v303, %v653
      %v655 = vpop.f32.mrf.mxu0
      %v656 = vadd.f32 %v303, %v655
      %657 = vmatmul.bf16.gmra.mxu0 %v536
      %v658 = vpop.f32.mrf.mxu0
      %v659 = vadd.f32 %v303, %v658
      %v660 = vpop.f32.mrf.mxu0
      %v661 = vadd.f32 %v303, %v660
      %662 = vmatmul.bf16.gmra.mxu0 %v539
      %v663 = vpop.f32.mrf.mxu0
      %v664 = vadd.f32 %v303, %v663
      %v665 = vpop.f32.mrf.mxu0
      %v666 = vadd.f32 %v303, %v665
      %667 = vmatmul.bf16.gmra.mxu0 %v542
      %v668 = vpop.f32.mrf.mxu0
      %v669 = vadd.f32 %v303, %v668
      %v670 = vpop.f32.mrf.mxu0
      %v671 = vadd.f32 %v303, %v670
      %672 = vmatmul.bf16.gmra.mxu0 %v545
      %v673 = vpop.f32.mrf.mxu0
      %v674 = vadd.f32 %v303, %v673
      %v675 = vpop.f32.mrf.mxu0
      %v676 = vadd.f32 %v303, %v675
      %677 = vmatmul.bf16.gmra.mxu0 %v548
      %v678 = vpop.f32.mrf.mxu0
      %v679 = vadd.f32 %v303, %v678
      %v680 = vpop.f32.mrf.mxu0
      %v681 = vadd.f32 %v303, %v680
      %682 = vmatmul.bf16.gmra.mxu0 %v551
      %v683 = vpop.f32.mrf.mxu0
      %v684 = vadd.f32 %v303, %v683
      %v685 = vpop.f32.mrf.mxu0
      %v686 = vadd.f32 %v303, %v685
      %687 = vmatmul.bf16.gmra.mxu0 %v554
      %v688 = vpop.f32.mrf.mxu0
      %v689 = vadd.f32 %v303, %v688
      %v690 = vpop.f32.mrf.mxu0
      %v691 = vadd.f32 %v303, %v690
      %692 = vmatmul.bf16.gmra.mxu0 %v557
      %v693 = vpop.f32.mrf.mxu0
      %v694 = vadd.f32 %v303, %v693
      %v695 = vpop.f32.mrf.mxu0
      %v696 = vadd.f32 %v303, %v695
      %697 = vmatmul.bf16.gmra.mxu0 %v560
      %v698 = vpop.f32.mrf.mxu0
      %v699 = vadd.f32 %v303, %v698
      %v700 = vpop.f32.mrf.mxu0
      %v701 = vadd.f32 %v303, %v700
      %702 = vmatmul.bf16.gmra.mxu0 %v563
      %v703 = vpop.f32.mrf.mxu0
      %v704 = vadd.f32 %v303, %v703
      %v705 = vpop.f32.mrf.mxu0
      %v706 = vadd.f32 %v303, %v705
      %707 = vmatmul.bf16.gmra.mxu0 %v566
      %v708 = vpop.f32.mrf.mxu0
      %v709 = vadd.f32 %v303, %v708
      %v710 = vpop.f32.mrf.mxu0
      %v711 = vadd.f32 %v303, %v710
      %712 = vmatmul.bf16.gmra.mxu0 %v569
      %v713 = vpop.f32.mrf.mxu0
      %v714 = vadd.f32 %v303, %v713
      %v715 = vpop.f32.mrf.mxu0
      %v716 = vadd.f32 %v303, %v715
      %717 = vmatmul.bf16.gmra.mxu0 %v572
      %v718 = vpop.f32.mrf.mxu0
      %v719 = vadd.f32 %v303, %v718
      %v720 = vpop.f32.mrf.mxu0
      %v721 = vadd.f32 %v303, %v720
      %722 = vmatmul.bf16.gmra.mxu0 %v575
      %v723 = vpop.f32.mrf.mxu0
      %v724 = vadd.f32 %v303, %v723
      %v725 = vpop.f32.mrf.mxu0
      %v726 = vadd.f32 %v303, %v725
      %727 = vmatmul.bf16.gmra.mxu0 %v578
      %v728 = vpop.f32.mrf.mxu0
      %v729 = vadd.f32 %v303, %v728
      %v730 = vpop.f32.mrf.mxu0
      %v731 = vadd.f32 %v303, %v730
      %732 = vmatmul.bf16.gmra.mxu0 %v581
      %v733 = vpop.f32.mrf.mxu0
      %v734 = vadd.f32 %v303, %v733
      %v735 = vpop.f32.mrf.mxu0
      %v736 = vadd.f32 %v303, %v735
      %737 = vmatmul.bf16.gmra.mxu0 %v584
      %v738 = vpop.f32.mrf.mxu0
      %v739 = vadd.f32 %v303, %v738
      %v740 = vpop.f32.mrf.mxu0
      %v741 = vadd.f32 %v303, %v740
      %742 = vmatmul.bf16.gmra.mxu0 %v587
      %v743 = vpop.f32.mrf.mxu0
      %v744 = vadd.f32 %v303, %v743
      %v745 = vpop.f32.mrf.mxu0
      %v746 = vadd.f32 %v303, %v745
      %747 = vmatmul.bf16.gmra.mxu0 %v590
      %v748 = vpop.f32.mrf.mxu0
      %v749 = vadd.f32 %v303, %v748
      %v750 = vpop.f32.mrf.mxu0
      %v751 = vadd.f32 %v303, %v750
      %752 = vmatmul.bf16.gmra.mxu0 %v593
      %v753 = vpop.f32.mrf.mxu0
      %v754 = vadd.f32 %v303, %v753
      %v755 = vpop.f32.mrf.mxu0
      %v756 = vadd.f32 %v303, %v755
      %757 = vmatmul.bf16.gmra.mxu0 %v596
      %v758 = vpop.f32.mrf.mxu0
      %v759 = vadd.f32 %v303, %v758
      %v760 = vpop.f32.mrf.mxu0
      %v761 = vadd.f32 %v303, %v760
      %762 = vmatmul.bf16.gmra.mxu0 %v599
      %v763 = vpop.f32.mrf.mxu0
      %v764 = vadd.f32 %v303, %v763
      %v765 = vpop.f32.mrf.mxu0
      %v766 = vadd.f32 %v303, %v765
      %767 = vmatmul.bf16.gmra.mxu0 %v602
      %v768 = vpop.f32.mrf.mxu0
      %v769 = vadd.f32 %v303, %v768
      %v770 = vpop.f32.mrf.mxu0
      %v771 = vadd.f32 %v303, %v770
      %772 = vdwg.mxu0
      %773 = vmatpush.bf16.msra.mxu0 0
      %774 = vmatpush.bf16.msra.mxu0 0
      %775 = vmatpush.bf16.msra.mxu0 0
      %776 = vmatpush.bf16.msra.mxu0 0
      %777 = vmatpush.bf16.msra.mxu0 %v498
      %778 = vmatpush.bf16.msra.mxu0 %v496
      %779 = vmatpush.bf16.msra.mxu0 %v494
      %780 = vmatpush.bf16.msra.mxu0 %v492
      %781 = vmatmul.bf16.gmra.mxu0 %v509
      %v782 = vpop.f32.mrf.mxu0
      %v783 = vadd.f32 %v304, %v782
      %v784 = vpop.f32.mrf.mxu0
      %v785 = vadd.f32 %v304, %v784
      %786 = vmatmul.bf16.gmra.mxu0 %v512
      %v787 = vpop.f32.mrf.mxu0
      %v788 = vadd.f32 %v304, %v787
      %v789 = vpop.f32.mrf.mxu0
      %v790 = vadd.f32 %v304, %v789
      %791 = vmatmul.bf16.gmra.mxu0 %v515
      %v792 = vpop.f32.mrf.mxu0
      %v793 = vadd.f32 %v304, %v792
      %v794 = vpop.f32.mrf.mxu0
      %v795 = vadd.f32 %v304, %v794
      %796 = vmatmul.bf16.gmra.mxu0 %v518
      %v797 = vpop.f32.mrf.mxu0
      %v798 = vadd.f32 %v304, %v797
      %v799 = vpop.f32.mrf.mxu0
      %v800 = vadd.f32 %v304, %v799
      %801 = vmatmul.bf16.gmra.mxu0 %v521
      %v802 = vpop.f32.mrf.mxu0
      %v803 = vadd.f32 %v304, %v802
      %v804 = vpop.f32.mrf.mxu0
      %v805 = vadd.f32 %v304, %v804
      %806 = vmatmul.bf16.gmra.mxu0 %v524
      %v807 = vpop.f32.mrf.mxu0
      %v808 = vadd.f32 %v304, %v807
      %v809 = vpop.f32.mrf.mxu0
      %v810 = vadd.f32 %v304, %v809
      %811 = vmatmul.bf16.gmra.mxu0 %v527
      %v812 = vpop.f32.mrf.mxu0
      %v813 = vadd.f32 %v304, %v812
      %v814 = vpop.f32.mrf.mxu0
      %v815 = vadd.f32 %v304, %v814
      %816 = vmatmul.bf16.gmra.mxu0 %v530
      %v817 = vpop.f32.mrf.mxu0
      %v818 = vadd.f32 %v304, %v817
      %v819 = vpop.f32.mrf.mxu0
      %v820 = vadd.f32 %v304, %v819
      %821 = vmatmul.bf16.gmra.mxu0 %v533
      %v822 = vpop.f32.mrf.mxu0
      %v823 = vadd.f32 %v304, %v822
      %v824 = vpop.f32.mrf.mxu0
      %v825 = vadd.f32 %v304, %v824
      %826 = vmatmul.bf16.gmra.mxu0 %v536
      %v827 = vpop.f32.mrf.mxu0
      %v828 = vadd.f32 %v304, %v827
      %v829 = vpop.f32.mrf.mxu0
      %v830 = vadd.f32 %v304, %v829
      %831 = vmatmul.bf16.gmra.mxu0 %v539
      %v832 = vpop.f32.mrf.mxu0
      %v833 = vadd.f32 %v304, %v832
      %v834 = vpop.f32.mrf.mxu0
      %v835 = vadd.f32 %v304, %v834
      %836 = vmatmul.bf16.gmra.mxu0 %v542
      %v837 = vpop.f32.mrf.mxu0
      %v838 = vadd.f32 %v304, %v837
      %v839 = vpop.f32.mrf.mxu0
      %v840 = vadd.f32 %v304, %v839
      %841 = vmatmul.bf16.gmra.mxu0 %v545
      %v842 = vpop.f32.mrf.mxu0
      %v843 = vadd.f32 %v304, %v842
      %v844 = vpop.f32.mrf.mxu0
      %v845 = vadd.f32 %v304, %v844
      %846 = vmatmul.bf16.gmra.mxu0 %v548
      %v847 = vpop.f32.mrf.mxu0
      %v848 = vadd.f32 %v304, %v847
      %v849 = vpop.f32.mrf.mxu0
      %v850 = vadd.f32 %v304, %v849
      %851 = vmatmul.bf16.gmra.mxu0 %v551
      %v852 = vpop.f32.mrf.mxu0
      %v853 = vadd.f32 %v304, %v852
      %v854 = vpop.f32.mrf.mxu0
      %v855 = vadd.f32 %v304, %v854
      %856 = vmatmul.bf16.gmra.mxu0 %v554
      %v857 = vpop.f32.mrf.mxu0
      %v858 = vadd.f32 %v304, %v857
      %v859 = vpop.f32.mrf.mxu0
      %v860 = vadd.f32 %v304, %v859
      %861 = vmatmul.bf16.gmra.mxu0 %v557
      %v862 = vpop.f32.mrf.mxu0
      %v863 = vadd.f32 %v304, %v862
      %v864 = vpop.f32.mrf.mxu0
      %v865 = vadd.f32 %v304, %v864
      %866 = vmatmul.bf16.gmra.mxu0 %v560
      %v867 = vpop.f32.mrf.mxu0
      %v868 = vadd.f32 %v304, %v867
      %v869 = vpop.f32.mrf.mxu0
      %v870 = vadd.f32 %v304, %v869
      %871 = vmatmul.bf16.gmra.mxu0 %v563
      %v872 = vpop.f32.mrf.mxu0
      %v873 = vadd.f32 %v304, %v872
      %v874 = vpop.f32.mrf.mxu0
      %v875 = vadd.f32 %v304, %v874
      %876 = vmatmul.bf16.gmra.mxu0 %v566
      %v877 = vpop.f32.mrf.mxu0
      %v878 = vadd.f32 %v304, %v877
      %v879 = vpop.f32.mrf.mxu0
      %v880 = vadd.f32 %v304, %v879
      %881 = vmatmul.bf16.gmra.mxu0 %v569
      %v882 = vpop.f32.mrf.mxu0
      %v883 = vadd.f32 %v304, %v882
      %v884 = vpop.f32.mrf.mxu0
      %v885 = vadd.f32 %v304, %v884
      %886 = vmatmul.bf16.gmra.mxu0 %v572
      %v887 = vpop.f32.mrf.mxu0
      %v888 = vadd.f32 %v304, %v887
      %v889 = vpop.f32.mrf.mxu0
      %v890 = vadd.f32 %v304, %v889
      %891 = vmatmul.bf16.gmra.mxu0 %v575
      %v892 = vpop.f32.mrf.mxu0
      %v893 = vadd.f32 %v304, %v892
      %v894 = vpop.f32.mrf.mxu0
      %v895 = vadd.f32 %v304, %v894
      %896 = vmatmul.bf16.gmra.mxu0 %v578
      %v897 = vpop.f32.mrf.mxu0
      %v898 = vadd.f32 %v304, %v897
      %v899 = vpop.f32.mrf.mxu0
      %v900 = vadd.f32 %v304, %v899
      %901 = vmatmul.bf16.gmra.mxu0 %v581
      %v902 = vpop.f32.mrf.mxu0
      %v903 = vadd.f32 %v304, %v902
      %v904 = vpop.f32.mrf.mxu0
      %v905 = vadd.f32 %v304, %v904
      %906 = vmatmul.bf16.gmra.mxu0 %v584
      %v907 = vpop.f32.mrf.mxu0
      %v908 = vadd.f32 %v304, %v907
      %v909 = vpop.f32.mrf.mxu0
      %v910 = vadd.f32 %v304, %v909
      %911 = vmatmul.bf16.gmra.mxu0 %v587
      %v912 = vpop.f32.mrf.mxu0
      %v913 = vadd.f32 %v304, %v912
      %v914 = vpop.f32.mrf.mxu0
      %v915 = vadd.f32 %v304, %v914
      %916 = vmatmul.bf16.gmra.mxu0 %v590
      %v917 = vpop.f32.mrf.mxu0
      %v918 = vadd.f32 %v304, %v917
      %v919 = vpop.f32.mrf.mxu0
      %v920 = vadd.f32 %v304, %v919
      %921 = vmatmul.bf16.gmra.mxu0 %v593
      %v922 = vpop.f32.mrf.mxu0
      %v923 = vadd.f32 %v304, %v922
      %v924 = vpop.f32.mrf.mxu0
      %v925 = vadd.f32 %v304, %v924
      %926 = vmatmul.bf16.gmra.mxu0 %v596
      %v927 = vpop.f32.mrf.mxu0
      %v928 = vadd.f32 %v304, %v927
      %v929 = vpop.f32.mrf.mxu0
      %v930 = vadd.f32 %v304, %v929
      %931 = vmatmul.bf16.gmra.mxu0 %v599
      %v932 = vpop.f32.mrf.mxu0
      %v933 = vadd.f32 %v304, %v932
      %v934 = vpop.f32.mrf.mxu0
      %v935 = vadd.f32 %v304, %v934
      %936 = vmatmul.bf16.gmra.mxu0 %v602
      %v937 = vpop.f32.mrf.mxu0
      %v938 = vadd.f32 %v304, %v937
      %v939 = vpop.f32.mrf.mxu0
      %v940 = vadd.f32 %v304, %v939
      %941 = vdwg.mxu0
      %v942 = vmax.f32 %v614, 0.0
      %v943 = vmax.f32 %v783, 0.0
      %v944 = vmax.f32 %v616, 0.0
      %v945 = vmax.f32 %v785, 0.0
      %v946 = vmax.f32 %v619, 0.0
      %v947 = vmax.f32 %v788, 0.0
      %v948 = vmax.f32 %v621, 0.0
      %v949 = vmax.f32 %v790, 0.0
      %v950 = vmax.f32 %v624, 0.0
      %v951 = vmax.f32 %v793, 0.0
      %v952 = vmax.f32 %v626, 0.0
      %v953 = vmax.f32 %v795, 0.0
      %v954 = vmax.f32 %v629, 0.0
      %v955 = vmax.f32 %v798, 0.0
      %v956 = vmax.f32 %v631, 0.0
      %v957 = vmax.f32 %v800, 0.0
      %v958 = vmax.f32 %v634, 0.0
      %v959 = vmax.f32 %v803, 0.0
      %v960 = vmax.f32 %v636, 0.0
      %v961 = vmax.f32 %v805, 0.0
      %v962 = vmax.f32 %v639, 0.0
      %v963 = vmax.f32 %v808, 0.0
      %v964 = vmax.f32 %v641, 0.0
      %v965 = vmax.f32 %v810, 0.0
      %v966 = vmax.f32 %v644, 0.0
      %v967 = vmax.f32 %v813, 0.0
      %v968 = vmax.f32 %v646, 0.0
      %v969 = vmax.f32 %v815, 0.0
      %v970 = vmax.f32 %v649, 0.0
      %v971 = vmax.f32 %v818, 0.0
      %v972 = vmax.f32 %v651, 0.0
      %v973 = vmax.f32 %v820, 0.0
      %v974 = vmax.f32 %v654, 0.0
      %v975 = vmax.f32 %v823, 0.0
      %v976 = vmax.f32 %v656, 0.0
      %v977 = vmax.f32 %v825, 0.0
      %v978 = vmax.f32 %v659, 0.0
      %v979 = vmax.f32 %v828, 0.0
      %v980 = vmax.f32 %v661, 0.0
      %v981 = vmax.f32 %v830, 0.0
      %v982 = vmax.f32 %v664, 0.0
      %v983 = vmax.f32 %v833, 0.0
      %v984 = vmax.f32 %v666, 0.0
      %v985 = vmax.f32 %v835, 0.0
      %v986 = vmax.f32 %v669, 0.0
      %v987 = vmax.f32 %v838, 0.0
      %v988 = vmax.f32 %v671, 0.0
      %v989 = vmax.f32 %v840, 0.0
      %v990 = vmax.f32 %v674, 0.0
      %v991 = vmax.f32 %v843, 0.0
      %v992 = vmax.f32 %v676, 0.0
      %v993 = vmax.f32 %v845, 0.0
      %v994 = vmax.f32 %v679, 0.0
      %v995 = vmax.f32 %v848, 0.0
      %v996 = vmax.f32 %v681, 0.0
      %v997 = vmax.f32 %v850, 0.0
      %v998 = vmax.f32 %v684, 0.0
      %v999 = vmax.f32 %v853, 0.0
      %v1000 = vmax.f32 %v686, 0.0
      %v1001 = vmax.f32 %v855, 0.0
      %v1002 = vmax.f32 %v689, 0.0
      %v1003 = vmax.f32 %v858, 0.0
      %v1004 = vmax.f32 %v691, 0.0
      %v1005 = vmax.f32 %v860, 0.0
      %v1006 = vmax.f32 %v694, 0.0
      %v1007 = vmax.f32 %v863, 0.0
      %v1008 = vmax.f32 %v696, 0.0
      %v1009 = vmax.f32 %v865, 0.0
      %v1010 = vmax.f32 %v699, 0.0
      %v1011 = vmax.f32 %v868, 0.0
      %v1012 = vmax.f32 %v701, 0.0
      %v1013 = vmax.f32 %v870, 0.0
      %v1014 = vmax.f32 %v704, 0.0
      %v1015 = vmax.f32 %v873, 0.0
      %v1016 = vmax.f32 %v706, 0.0
      %v1017 = vmax.f32 %v875, 0.0
      %v1018 = vmax.f32 %v709, 0.0
      %v1019 = vmax.f32 %v878, 0.0
      %v1020 = vmax.f32 %v711, 0.0
      %v1021 = vmax.f32 %v880, 0.0
      %v1022 = vmax.f32 %v714, 0.0
      %v1023 = vmax.f32 %v883, 0.0
      %v1024 = vmax.f32 %v716, 0.0
      %v1025 = vmax.f32 %v885, 0.0
      %v1026 = vmax.f32 %v719, 0.0
      %v1027 = vmax.f32 %v888, 0.0
      %v1028 = vmax.f32 %v721, 0.0
      %v1029 = vmax.f32 %v890, 0.0
      %v1030 = vmax.f32 %v724, 0.0
      %v1031 = vmax.f32 %v893, 0.0
      %v1032 = vmax.f32 %v726, 0.0
      %v1033 = vmax.f32 %v895, 0.0
      %v1034 = vmax.f32 %v729, 0.0
      %v1035 = vmax.f32 %v898, 0.0
      %v1036 = vmax.f32 %v731, 0.0
      %v1037 = vmax.f32 %v900, 0.0
      %v1038 = vmax.f32 %v734, 0.0
      %v1039 = vmax.f32 %v903, 0.0
      %v1040 = vmax.f32 %v736, 0.0
      %v1041 = vmax.f32 %v905, 0.0
      %v1042 = vmax.f32 %v739, 0.0
      %v1043 = vmax.f32 %v908, 0.0
      %v1044 = vmax.f32 %v741, 0.0
      %v1045 = vmax.f32 %v910, 0.0
      %v1046 = vmax.f32 %v744, 0.0
      %v1047 = vmax.f32 %v913, 0.0
      %v1048 = vmax.f32 %v746, 0.0
      %v1049 = vmax.f32 %v915, 0.0
      %v1050 = vmax.f32 %v749, 0.0
      %v1051 = vmax.f32 %v918, 0.0
      %v1052 = vmax.f32 %v751, 0.0
      %v1053 = vmax.f32 %v920, 0.0
      %v1054 = vmax.f32 %v754, 0.0
      %v1055 = vmax.f32 %v923, 0.0
      %v1056 = vmax.f32 %v756, 0.0
      %v1057 = vmax.f32 %v925, 0.0
      %v1058 = vmax.f32 %v759, 0.0
      %v1059 = vmax.f32 %v928, 0.0
      %v1060 = vmax.f32 %v761, 0.0
      %v1061 = vmax.f32 %v930, 0.0
      %v1062 = vmax.f32 %v764, 0.0
      %v1063 = vmax.f32 %v933, 0.0
      %v1064 = vmax.f32 %v766, 0.0
      %v1065 = vmax.f32 %v935, 0.0
      %v1066 = vmax.f32 %v769, 0.0
      %v1067 = vmax.f32 %v938, 0.0
      %v1068 = vmax.f32 %v771, 0.0
      %v1069 = vmax.f32 %v940, 0.0
      %v1070 = vpack.c.bf16 %v944, %v942
      %v1071 = vpack.c.bf16 %v945, %v943
      %v1072 = vpack.c.bf16 %v948, %v946
      %v1073 = vpack.c.bf16 %v949, %v947
      %v1074 = vpack.c.bf16 %v952, %v950
      %v1075 = vpack.c.bf16 %v953, %v951
      %v1076 = vpack.c.bf16 %v956, %v954
      %v1077 = vpack.c.bf16 %v957, %v955
      %v1078 = vpack.c.bf16 %v960, %v958
      %v1079 = vpack.c.bf16 %v961, %v959
      %v1080 = vpack.c.bf16 %v964, %v962
      %v1081 = vpack.c.bf16 %v965, %v963
      %v1082 = vpack.c.bf16 %v968, %v966
      %v1083 = vpack.c.bf16 %v969, %v967
      %v1084 = vpack.c.bf16 %v972, %v970
      %v1085 = vpack.c.bf16 %v973, %v971
      %v1086 = vpack.c.bf16 %v976, %v974
      %v1087 = vpack.c.bf16 %v977, %v975
      %v1088 = vpack.c.bf16 %v980, %v978
      %v1089 = vpack.c.bf16 %v981, %v979
      %v1090 = vpack.c.bf16 %v984, %v982
      %v1091 = vpack.c.bf16 %v985, %v983
      %v1092 = vpack.c.bf16 %v988, %v986
      %v1093 = vpack.c.bf16 %v989, %v987
      %v1094 = vpack.c.bf16 %v992, %v990
      %v1095 = vpack.c.bf16 %v993, %v991
      %v1096 = vpack.c.bf16 %v996, %v994
      %v1097 = vpack.c.bf16 %v997, %v995
      %v1098 = vpack.c.bf16 %v1000, %v998
      %v1099 = vpack.c.bf16 %v1001, %v999
      %v1100 = vpack.c.bf16 %v1004, %v1002
      %v1101 = vpack.c.bf16 %v1005, %v1003
      %v1102 = vpack.c.bf16 %v1008, %v1006
      %v1103 = vpack.c.bf16 %v1009, %v1007
      %v1104 = vpack.c.bf16 %v1012, %v1010
      %v1105 = vpack.c.bf16 %v1013, %v1011
      %v1106 = vpack.c.bf16 %v1016, %v1014
      %v1107 = vpack.c.bf16 %v1017, %v1015
      %v1108 = vpack.c.bf16 %v1020, %v1018
      %v1109 = vpack.c.bf16 %v1021, %v1019
      %v1110 = vpack.c.bf16 %v1024, %v1022
      %v1111 = vpack.c.bf16 %v1025, %v1023
      %v1112 = vpack.c.bf16 %v1028, %v1026
      %v1113 = vpack.c.bf16 %v1029, %v1027
      %v1114 = vpack.c.bf16 %v1032, %v1030
      %v1115 = vpack.c.bf16 %v1033, %v1031
      %v1116 = vpack.c.bf16 %v1036, %v1034
      %v1117 = vpack.c.bf16 %v1037, %v1035
      %v1118 = vpack.c.bf16 %v1040, %v1038
      %v1119 = vpack.c.bf16 %v1041, %v1039
      %v1120 = vpack.c.bf16 %v1044, %v1042
      %v1121 = vpack.c.bf16 %v1045, %v1043
      %v1122 = vpack.c.bf16 %v1048, %v1046
      %v1123 = vpack.c.bf16 %v1049, %v1047
      %v1124 = vpack.c.bf16 %v1052, %v1050
      %v1125 = vpack.c.bf16 %v1053, %v1051
      %v1126 = vpack.c.bf16 %v1056, %v1054
      %v1127 = vpack.c.bf16 %v1057, %v1055
      %v1128 = vpack.c.bf16 %v1060, %v1058
      %v1129 = vpack.c.bf16 %v1061, %v1059
      %v1130 = vpack.c.bf16 %v1064, %v1062
      %v1131 = vpack.c.bf16 %v1065, %v1063
      %v1132 = vpack.c.bf16 %v1068, %v1066
      %v1133 = vpack.c.bf16 %v1069, %v1067
      %v1134 = vld [vmem:[%s3] sm:$0xf]
      %v1135 = vld [vmem:[%s3 + $0x4] sm:$0xf]
      %v1136 = vld [vmem:[%s3 + $0x8] sm:$0xf]
      %v1137 = vld [vmem:[%s3 + $0xc] sm:$0xf]
      %v1138 = vld [vmem:[%s3 + $0x10] sm:$0xf]
      %v1139 = vld [vmem:[%s3 + $0x14] sm:$0xf]
      %v1140 = vld [vmem:[%s3 + $0x18] sm:$0xf]
      %v1141 = vld [vmem:[%s3 + $0x1c] sm:$0xf]
      %v1142 = vld [vmem:[%s3 + $0x20] sm:$0xf]
      %v1143 = vld [vmem:[%s3 + $0x24] sm:$0xf]
      %v1144 = vld [vmem:[%s3 + $0x28] sm:$0xf]
      %v1145 = vld [vmem:[%s3 + $0x2c] sm:$0xf]
      %v1146 = vld [vmem:[%s3 + $0x30] sm:$0xf]
      %v1147 = vld [vmem:[%s3 + $0x34] sm:$0xf]
      %v1148 = vld [vmem:[%s3 + $0x38] sm:$0xf]
      %v1149 = vld [vmem:[%s3 + $0x3c] sm:$0xf]
      %v1150 = vld [vmem:[%s3 + $0x40] sm:$0xf]
      %v1151 = vld [vmem:[%s3 + $0x44] sm:$0xf]
      %v1152 = vld [vmem:[%s3 + $0x48] sm:$0xf]
      %v1153 = vld [vmem:[%s3 + $0x4c] sm:$0xf]
      %v1154 = vld [vmem:[%s3 + $0x50] sm:$0xf]
      %v1155 = vld [vmem:[%s3 + $0x54] sm:$0xf]
      %v1156 = vld [vmem:[%s3 + $0x58] sm:$0xf]
      %v1157 = vld [vmem:[%s3 + $0x5c] sm:$0xf]
      %v1158 = vld [vmem:[%s3 + $0x60] sm:$0xf]
      %v1159 = vld [vmem:[%s3 + $0x64] sm:$0xf]
      %v1160 = vld [vmem:[%s3 + $0x68] sm:$0xf]
      %v1161 = vld [vmem:[%s3 + $0x6c] sm:$0xf]
      %v1162 = vld [vmem:[%s3 + $0x70] sm:$0xf]
      %v1163 = vld [vmem:[%s3 + $0x74] sm:$0xf]
      %v1164 = vld [vmem:[%s3 + $0x78] sm:$0xf]
      %v1165 = vld [vmem:[%s3 + $0x7c] sm:$0xf]
      %v1166 = vld [vmem:[%s4] sm:$0x1]
      %v1168 = vperm.slane %v1166, 0
      %v1202 = vunpack.c.l.b16 %v1134
      %v1203 = vunpack.c.l.b16 %v1135
      %v1204 = vunpack.c.l.b16 %v1136
      %v1205 = vunpack.c.l.b16 %v1137
      %v1206 = vunpack.c.l.b16 %v1138
      %v1207 = vunpack.c.l.b16 %v1139
      %v1208 = vunpack.c.l.b16 %v1140
      %v1209 = vunpack.c.l.b16 %v1141
      %v1210 = vunpack.c.l.b16 %v1142
      %v1211 = vunpack.c.l.b16 %v1143
      %v1212 = vunpack.c.l.b16 %v1144
      %v1213 = vunpack.c.l.b16 %v1145
      %v1214 = vunpack.c.l.b16 %v1146
      %v1215 = vunpack.c.l.b16 %v1147
      %v1216 = vunpack.c.l.b16 %v1148
      %v1217 = vunpack.c.l.b16 %v1149
      %v1218 = vunpack.c.l.b16 %v1150
      %v1219 = vunpack.c.l.b16 %v1151
      %v1220 = vunpack.c.l.b16 %v1152
      %v1221 = vunpack.c.l.b16 %v1153
      %v1222 = vunpack.c.l.b16 %v1154
      %v1223 = vunpack.c.l.b16 %v1155
      %v1224 = vunpack.c.l.b16 %v1156
      %v1225 = vunpack.c.l.b16 %v1157
      %v1226 = vunpack.c.l.b16 %v1158
      %v1227 = vunpack.c.l.b16 %v1159
      %v1228 = vunpack.c.l.b16 %v1160
      %v1229 = vunpack.c.l.b16 %v1161
      %v1230 = vunpack.c.l.b16 %v1162
      %v1231 = vunpack.c.l.b16 %v1163
      %v1232 = vunpack.c.l.b16 %v1164
      %v1233 = vunpack.c.l.b16 %v1165
      %v1234 = vpack.c.b16 %v1203, %v1202
      %v1235 = vpack.c.b16 %v1205, %v1204
      %v1236 = vpack.c.b16 %v1207, %v1206
      %v1237 = vpack.c.b16 %v1209, %v1208
      %v1238 = vpack.c.b16 %v1211, %v1210
      %v1239 = vpack.c.b16 %v1213, %v1212
      %v1240 = vpack.c.b16 %v1215, %v1214
      %v1241 = vpack.c.b16 %v1217, %v1216
      %v1242 = vpack.c.b16 %v1219, %v1218
      %v1243 = vpack.c.b16 %v1221, %v1220
      %v1244 = vpack.c.b16 %v1223, %v1222
      %v1245 = vpack.c.b16 %v1225, %v1224
      %v1246 = vpack.c.b16 %v1227, %v1226
      %v1247 = vpack.c.b16 %v1229, %v1228
      %v1248 = vpack.c.b16 %v1231, %v1230
      %v1249 = vpack.c.b16 %v1233, %v1232
      %1266 = vmatpush.bf16.msra.mxu0 %v1241
      %1267 = vmatpush.bf16.msra.mxu0 %v1240
      %1268 = vmatpush.bf16.msra.mxu0 %v1239
      %1269 = vmatpush.bf16.msra.mxu0 %v1238
      %1270 = vmatpush.bf16.msra.mxu0 %v1237
      %1271 = vmatpush.bf16.msra.mxu0 %v1236
      %1272 = vmatpush.bf16.msra.mxu0 %v1235
      %1273 = vmatpush.bf16.msra.mxu0 %v1234
      %1274 = vmatmul.bf16.gmra.mxu0 %v1070
      %v1275 = vpop.f32.mrf.mxu0
      %v1276 = vadd.f32 %v1168, %v1275
      %v1277 = vpop.f32.mrf.mxu0
      %v1278 = vadd.f32 %v1168, %v1277
      %1279 = vmatmul.bf16.gmra.mxu0 %v1072
      %v1280 = vpop.f32.mrf.mxu0
      %v1281 = vadd.f32 %v1168, %v1280
      %v1282 = vpop.f32.mrf.mxu0
      %v1283 = vadd.f32 %v1168, %v1282
      %1284 = vmatmul.bf16.gmra.mxu0 %v1074
      %v1285 = vpop.f32.mrf.mxu0
      %v1286 = vadd.f32 %v1168, %v1285
      %v1287 = vpop.f32.mrf.mxu0
      %v1288 = vadd.f32 %v1168, %v1287
      %1289 = vmatmul.bf16.gmra.mxu0 %v1076
      %v1290 = vpop.f32.mrf.mxu0
      %v1291 = vadd.f32 %v1168, %v1290
      %v1292 = vpop.f32.mrf.mxu0
      %v1293 = vadd.f32 %v1168, %v1292
      %1294 = vmatmul.bf16.gmra.mxu0 %v1078
      %v1295 = vpop.f32.mrf.mxu0
      %v1296 = vadd.f32 %v1168, %v1295
      %v1297 = vpop.f32.mrf.mxu0
      %v1298 = vadd.f32 %v1168, %v1297
      %1299 = vmatmul.bf16.gmra.mxu0 %v1080
      %v1300 = vpop.f32.mrf.mxu0
      %v1301 = vadd.f32 %v1168, %v1300
      %v1302 = vpop.f32.mrf.mxu0
      %v1303 = vadd.f32 %v1168, %v1302
      %1304 = vmatmul.bf16.gmra.mxu0 %v1082
      %v1305 = vpop.f32.mrf.mxu0
      %v1306 = vadd.f32 %v1168, %v1305
      %v1307 = vpop.f32.mrf.mxu0
      %v1308 = vadd.f32 %v1168, %v1307
      %1309 = vmatmul.bf16.gmra.mxu0 %v1084
      %v1310 = vpop.f32.mrf.mxu0
      %v1311 = vadd.f32 %v1168, %v1310
      %v1312 = vpop.f32.mrf.mxu0
      %v1313 = vadd.f32 %v1168, %v1312
      %1314 = vmatmul.bf16.gmra.mxu0 %v1086
      %v1315 = vpop.f32.mrf.mxu0
      %v1316 = vadd.f32 %v1168, %v1315
      %v1317 = vpop.f32.mrf.mxu0
      %v1318 = vadd.f32 %v1168, %v1317
      %1319 = vmatmul.bf16.gmra.mxu0 %v1088
      %v1320 = vpop.f32.mrf.mxu0
      %v1321 = vadd.f32 %v1168, %v1320
      %v1322 = vpop.f32.mrf.mxu0
      %v1323 = vadd.f32 %v1168, %v1322
      %1324 = vmatmul.bf16.gmra.mxu0 %v1090
      %v1325 = vpop.f32.mrf.mxu0
      %v1326 = vadd.f32 %v1168, %v1325
      %v1327 = vpop.f32.mrf.mxu0
      %v1328 = vadd.f32 %v1168, %v1327
      %1329 = vmatmul.bf16.gmra.mxu0 %v1092
      %v1330 = vpop.f32.mrf.mxu0
      %v1331 = vadd.f32 %v1168, %v1330
      %v1332 = vpop.f32.mrf.mxu0
      %v1333 = vadd.f32 %v1168, %v1332
      %1334 = vmatmul.bf16.gmra.mxu0 %v1094
      %v1335 = vpop.f32.mrf.mxu0
      %v1336 = vadd.f32 %v1168, %v1335
      %v1337 = vpop.f32.mrf.mxu0
      %v1338 = vadd.f32 %v1168, %v1337
      %1339 = vmatmul.bf16.gmra.mxu0 %v1096
      %v1340 = vpop.f32.mrf.mxu0
      %v1341 = vadd.f32 %v1168, %v1340
      %v1342 = vpop.f32.mrf.mxu0
      %v1343 = vadd.f32 %v1168, %v1342
      %1344 = vmatmul.bf16.gmra.mxu0 %v1098
      %v1345 = vpop.f32.mrf.mxu0
      %v1346 = vadd.f32 %v1168, %v1345
      %v1347 = vpop.f32.mrf.mxu0
      %v1348 = vadd.f32 %v1168, %v1347
      %1349 = vmatmul.bf16.gmra.mxu0 %v1100
      %v1350 = vpop.f32.mrf.mxu0
      %v1351 = vadd.f32 %v1168, %v1350
      %v1352 = vpop.f32.mrf.mxu0
      %v1353 = vadd.f32 %v1168, %v1352
      %1354 = vmatmul.bf16.gmra.mxu0 %v1102
      %v1355 = vpop.f32.mrf.mxu0
      %v1356 = vadd.f32 %v1168, %v1355
      %v1357 = vpop.f32.mrf.mxu0
      %v1358 = vadd.f32 %v1168, %v1357
      %1359 = vmatmul.bf16.gmra.mxu0 %v1104
      %v1360 = vpop.f32.mrf.mxu0
      %v1361 = vadd.f32 %v1168, %v1360
      %v1362 = vpop.f32.mrf.mxu0
      %v1363 = vadd.f32 %v1168, %v1362
      %1364 = vmatmul.bf16.gmra.mxu0 %v1106
      %v1365 = vpop.f32.mrf.mxu0
      %v1366 = vadd.f32 %v1168, %v1365
      %v1367 = vpop.f32.mrf.mxu0
      %v1368 = vadd.f32 %v1168, %v1367
      %1369 = vmatmul.bf16.gmra.mxu0 %v1108
      %v1370 = vpop.f32.mrf.mxu0
      %v1371 = vadd.f32 %v1168, %v1370
      %v1372 = vpop.f32.mrf.mxu0
      %v1373 = vadd.f32 %v1168, %v1372
      %1374 = vmatmul.bf16.gmra.mxu0 %v1110
      %v1375 = vpop.f32.mrf.mxu0
      %v1376 = vadd.f32 %v1168, %v1375
      %v1377 = vpop.f32.mrf.mxu0
      %v1378 = vadd.f32 %v1168, %v1377
      %1379 = vmatmul.bf16.gmra.mxu0 %v1112
      %v1380 = vpop.f32.mrf.mxu0
      %v1381 = vadd.f32 %v1168, %v1380
      %v1382 = vpop.f32.mrf.mxu0
      %v1383 = vadd.f32 %v1168, %v1382
      %1384 = vmatmul.bf16.gmra.mxu0 %v1114
      %v1385 = vpop.f32.mrf.mxu0
      %v1386 = vadd.f32 %v1168, %v1385
      %v1387 = vpop.f32.mrf.mxu0
      %v1388 = vadd.f32 %v1168, %v1387
      %1389 = vmatmul.bf16.gmra.mxu0 %v1116
      %v1390 = vpop.f32.mrf.mxu0
      %v1391 = vadd.f32 %v1168, %v1390
      %v1392 = vpop.f32.mrf.mxu0
      %v1393 = vadd.f32 %v1168, %v1392
      %1394 = vmatmul.bf16.gmra.mxu0 %v1118
      %v1395 = vpop.f32.mrf.mxu0
      %v1396 = vadd.f32 %v1168, %v1395
      %v1397 = vpop.f32.mrf.mxu0
      %v1398 = vadd.f32 %v1168, %v1397
      %1399 = vmatmul.bf16.gmra.mxu0 %v1120
      %v1400 = vpop.f32.mrf.mxu0
      %v1401 = vadd.f32 %v1168, %v1400
      %v1402 = vpop.f32.mrf.mxu0
      %v1403 = vadd.f32 %v1168, %v1402
      %1404 = vmatmul.bf16.gmra.mxu0 %v1122
      %v1405 = vpop.f32.mrf.mxu0
      %v1406 = vadd.f32 %v1168, %v1405
      %v1407 = vpop.f32.mrf.mxu0
      %v1408 = vadd.f32 %v1168, %v1407
      %1409 = vmatmul.bf16.gmra.mxu0 %v1124
      %v1410 = vpop.f32.mrf.mxu0
      %v1411 = vadd.f32 %v1168, %v1410
      %v1412 = vpop.f32.mrf.mxu0
      %v1413 = vadd.f32 %v1168, %v1412
      %1414 = vmatmul.bf16.gmra.mxu0 %v1126
      %v1415 = vpop.f32.mrf.mxu0
      %v1416 = vadd.f32 %v1168, %v1415
      %v1417 = vpop.f32.mrf.mxu0
      %v1418 = vadd.f32 %v1168, %v1417
      %1419 = vmatmul.bf16.gmra.mxu0 %v1128
      %v1420 = vpop.f32.mrf.mxu0
      %v1421 = vadd.f32 %v1168, %v1420
      %v1422 = vpop.f32.mrf.mxu0
      %v1423 = vadd.f32 %v1168, %v1422
      %1424 = vmatmul.bf16.gmra.mxu0 %v1130
      %v1425 = vpop.f32.mrf.mxu0
      %v1426 = vadd.f32 %v1168, %v1425
      %v1427 = vpop.f32.mrf.mxu0
      %v1428 = vadd.f32 %v1168, %v1427
      %1429 = vmatmul.bf16.gmra.mxu0 %v1132
      %v1430 = vpop.f32.mrf.mxu0
      %v1431 = vadd.f32 %v1168, %v1430
      %v1432 = vpop.f32.mrf.mxu0
      %v1433 = vadd.f32 %v1168, %v1432
      %1434 = vdwg.mxu0
      %1435 = vmatpush.bf16.msra.mxu0 %v1249
      %1436 = vmatpush.bf16.msra.mxu0 %v1248
      %1437 = vmatpush.bf16.msra.mxu0 %v1247
      %1438 = vmatpush.bf16.msra.mxu0 %v1246
      %1439 = vmatpush.bf16.msra.mxu0 %v1245
      %1440 = vmatpush.bf16.msra.mxu0 %v1244
      %1441 = vmatpush.bf16.msra.mxu0 %v1243
      %1442 = vmatpush.bf16.msra.mxu0 %v1242
      %1443 = vmatmul.bf16.gmra.mxu0 %v1071
      %v1444 = vpop.f32.mrf.mxu0
      %v1445 = vadd.f32 %v1276, %v1444
      %v1446 = vpop.f32.mrf.mxu0
      %v1447 = vadd.f32 %v1278, %v1446
      %1448 = vmatmul.bf16.gmra.mxu0 %v1073
      %v1449 = vpop.f32.mrf.mxu0
      %v1450 = vadd.f32 %v1281, %v1449
      %v1451 = vpop.f32.mrf.mxu0
      %v1452 = vadd.f32 %v1283, %v1451
      %1453 = vmatmul.bf16.gmra.mxu0 %v1075
      %v1454 = vpop.f32.mrf.mxu0
      %v1455 = vadd.f32 %v1286, %v1454
      %v1456 = vpop.f32.mrf.mxu0
      %v1457 = vadd.f32 %v1288, %v1456
      %1458 = vmatmul.bf16.gmra.mxu0 %v1077
      %v1459 = vpop.f32.mrf.mxu0
      %v1460 = vadd.f32 %v1291, %v1459
      %v1461 = vpop.f32.mrf.mxu0
      %v1462 = vadd.f32 %v1293, %v1461
      %1463 = vmatmul.bf16.gmra.mxu0 %v1079
      %v1464 = vpop.f32.mrf.mxu0
      %v1465 = vadd.f32 %v1296, %v1464
      %v1466 = vpop.f32.mrf.mxu0
      %v1467 = vadd.f32 %v1298, %v1466
      %1468 = vmatmul.bf16.gmra.mxu0 %v1081
      %v1469 = vpop.f32.mrf.mxu0
      %v1470 = vadd.f32 %v1301, %v1469
      %v1471 = vpop.f32.mrf.mxu0
      %v1472 = vadd.f32 %v1303, %v1471
      %1473 = vmatmul.bf16.gmra.mxu0 %v1083
      %v1474 = vpop.f32.mrf.mxu0
      %v1475 = vadd.f32 %v1306, %v1474
      %v1476 = vpop.f32.mrf.mxu0
      %v1477 = vadd.f32 %v1308, %v1476
      %1478 = vmatmul.bf16.gmra.mxu0 %v1085
      %v1479 = vpop.f32.mrf.mxu0
      %v1480 = vadd.f32 %v1311, %v1479
      %v1481 = vpop.f32.mrf.mxu0
      %v1482 = vadd.f32 %v1313, %v1481
      %1483 = vmatmul.bf16.gmra.mxu0 %v1087
      %v1484 = vpop.f32.mrf.mxu0
      %v1485 = vadd.f32 %v1316, %v1484
      %v1486 = vpop.f32.mrf.mxu0
      %v1487 = vadd.f32 %v1318, %v1486
      %1488 = vmatmul.bf16.gmra.mxu0 %v1089
      %v1489 = vpop.f32.mrf.mxu0
      %v1490 = vadd.f32 %v1321, %v1489
      %v1491 = vpop.f32.mrf.mxu0
      %v1492 = vadd.f32 %v1323, %v1491
      %1493 = vmatmul.bf16.gmra.mxu0 %v1091
      %v1494 = vpop.f32.mrf.mxu0
      %v1495 = vadd.f32 %v1326, %v1494
      %v1496 = vpop.f32.mrf.mxu0
      %v1497 = vadd.f32 %v1328, %v1496
      %1498 = vmatmul.bf16.gmra.mxu0 %v1093
      %v1499 = vpop.f32.mrf.mxu0
      %v1500 = vadd.f32 %v1331, %v1499
      %v1501 = vpop.f32.mrf.mxu0
      %v1502 = vadd.f32 %v1333, %v1501
      %1503 = vmatmul.bf16.gmra.mxu0 %v1095
      %v1504 = vpop.f32.mrf.mxu0
      %v1505 = vadd.f32 %v1336, %v1504
      %v1506 = vpop.f32.mrf.mxu0
      %v1507 = vadd.f32 %v1338, %v1506
      %1508 = vmatmul.bf16.gmra.mxu0 %v1097
      %v1509 = vpop.f32.mrf.mxu0
      %v1510 = vadd.f32 %v1341, %v1509
      %v1511 = vpop.f32.mrf.mxu0
      %v1512 = vadd.f32 %v1343, %v1511
      %1513 = vmatmul.bf16.gmra.mxu0 %v1099
      %v1514 = vpop.f32.mrf.mxu0
      %v1515 = vadd.f32 %v1346, %v1514
      %v1516 = vpop.f32.mrf.mxu0
      %v1517 = vadd.f32 %v1348, %v1516
      %1518 = vmatmul.bf16.gmra.mxu0 %v1101
      %v1519 = vpop.f32.mrf.mxu0
      %v1520 = vadd.f32 %v1351, %v1519
      %v1521 = vpop.f32.mrf.mxu0
      %v1522 = vadd.f32 %v1353, %v1521
      %1523 = vmatmul.bf16.gmra.mxu0 %v1103
      %v1524 = vpop.f32.mrf.mxu0
      %v1525 = vadd.f32 %v1356, %v1524
      %v1526 = vpop.f32.mrf.mxu0
      %v1527 = vadd.f32 %v1358, %v1526
      %1528 = vmatmul.bf16.gmra.mxu0 %v1105
      %v1529 = vpop.f32.mrf.mxu0
      %v1530 = vadd.f32 %v1361, %v1529
      %v1531 = vpop.f32.mrf.mxu0
      %v1532 = vadd.f32 %v1363, %v1531
      %1533 = vmatmul.bf16.gmra.mxu0 %v1107
      %v1534 = vpop.f32.mrf.mxu0
      %v1535 = vadd.f32 %v1366, %v1534
      %v1536 = vpop.f32.mrf.mxu0
      %v1537 = vadd.f32 %v1368, %v1536
      %1538 = vmatmul.bf16.gmra.mxu0 %v1109
      %v1539 = vpop.f32.mrf.mxu0
      %v1540 = vadd.f32 %v1371, %v1539
      %v1541 = vpop.f32.mrf.mxu0
      %v1542 = vadd.f32 %v1373, %v1541
      %1543 = vmatmul.bf16.gmra.mxu0 %v1111
      %v1544 = vpop.f32.mrf.mxu0
      %v1545 = vadd.f32 %v1376, %v1544
      %v1546 = vpop.f32.mrf.mxu0
      %v1547 = vadd.f32 %v1378, %v1546
      %1548 = vmatmul.bf16.gmra.mxu0 %v1113
      %v1549 = vpop.f32.mrf.mxu0
      %v1550 = vadd.f32 %v1381, %v1549
      %v1551 = vpop.f32.mrf.mxu0
      %v1552 = vadd.f32 %v1383, %v1551
      %1553 = vmatmul.bf16.gmra.mxu0 %v1115
      %v1554 = vpop.f32.mrf.mxu0
      %v1555 = vadd.f32 %v1386, %v1554
      %v1556 = vpop.f32.mrf.mxu0
      %v1557 = vadd.f32 %v1388, %v1556
      %1558 = vmatmul.bf16.gmra.mxu0 %v1117
      %v1559 = vpop.f32.mrf.mxu0
      %v1560 = vadd.f32 %v1391, %v1559
      %v1561 = vpop.f32.mrf.mxu0
      %v1562 = vadd.f32 %v1393, %v1561
      %1563 = vmatmul.bf16.gmra.mxu0 %v1119
      %v1564 = vpop.f32.mrf.mxu0
      %v1565 = vadd.f32 %v1396, %v1564
      %v1566 = vpop.f32.mrf.mxu0
      %v1567 = vadd.f32 %v1398, %v1566
      %1568 = vmatmul.bf16.gmra.mxu0 %v1121
      %v1569 = vpop.f32.mrf.mxu0
      %v1570 = vadd.f32 %v1401, %v1569
      %v1571 = vpop.f32.mrf.mxu0
      %v1572 = vadd.f32 %v1403, %v1571
      %1573 = vmatmul.bf16.gmra.mxu0 %v1123
      %v1574 = vpop.f32.mrf.mxu0
      %v1575 = vadd.f32 %v1406, %v1574
      %v1576 = vpop.f32.mrf.mxu0
      %v1577 = vadd.f32 %v1408, %v1576
      %1578 = vmatmul.bf16.gmra.mxu0 %v1125
      %v1579 = vpop.f32.mrf.mxu0
      %v1580 = vadd.f32 %v1411, %v1579
      %v1581 = vpop.f32.mrf.mxu0
      %v1582 = vadd.f32 %v1413, %v1581
      %1583 = vmatmul.bf16.gmra.mxu0 %v1127
      %v1584 = vpop.f32.mrf.mxu0
      %v1585 = vadd.f32 %v1416, %v1584
      %v1586 = vpop.f32.mrf.mxu0
      %v1587 = vadd.f32 %v1418, %v1586
      %1588 = vmatmul.bf16.gmra.mxu0 %v1129
      %v1589 = vpop.f32.mrf.mxu0
      %v1590 = vadd.f32 %v1421, %v1589
      %v1591 = vpop.f32.mrf.mxu0
      %v1592 = vadd.f32 %v1423, %v1591
      %1593 = vmatmul.bf16.gmra.mxu0 %v1131
      %v1594 = vpop.f32.mrf.mxu0
      %v1595 = vadd.f32 %v1426, %v1594
      %v1596 = vpop.f32.mrf.mxu0
      %v1597 = vadd.f32 %v1428, %v1596
      %1598 = vmatmul.bf16.gmra.mxu0 %v1133
      %v1599 = vpop.f32.mrf.mxu0
      %v1600 = vadd.f32 %v1431, %v1599
      %v1601 = vpop.f32.mrf.mxu0
      %v1602 = vadd.f32 %v1433, %v1601
      %1603 = vdwg.mxu0
      %v1604 = vmax.f32 %v1445, 0.0
      %v1605 = vmax.f32 %v1447, 0.0
      %v1606 = vmax.f32 %v1450, 0.0
      %v1607 = vmax.f32 %v1452, 0.0
      %v1608 = vmax.f32 %v1455, 0.0
      %v1609 = vmax.f32 %v1457, 0.0
      %v1610 = vmax.f32 %v1460, 0.0
      %v1611 = vmax.f32 %v1462, 0.0
      %v1612 = vmax.f32 %v1465, 0.0
      %v1613 = vmax.f32 %v1467, 0.0
      %v1614 = vmax.f32 %v1470, 0.0
      %v1615 = vmax.f32 %v1472, 0.0
      %v1616 = vmax.f32 %v1475, 0.0
      %v1617 = vmax.f32 %v1477, 0.0
      %v1618 = vmax.f32 %v1480, 0.0
      %v1619 = vmax.f32 %v1482, 0.0
      %v1620 = vmax.f32 %v1485, 0.0
      %v1621 = vmax.f32 %v1487, 0.0
      %v1622 = vmax.f32 %v1490, 0.0
      %v1623 = vmax.f32 %v1492, 0.0
      %v1624 = vmax.f32 %v1495, 0.0
      %v1625 = vmax.f32 %v1497, 0.0
      %v1626 = vmax.f32 %v1500, 0.0
      %v1627 = vmax.f32 %v1502, 0.0
      %v1628 = vmax.f32 %v1505, 0.0
      %v1629 = vmax.f32 %v1507, 0.0
      %v1630 = vmax.f32 %v1510, 0.0
      %v1631 = vmax.f32 %v1512, 0.0
      %v1632 = vmax.f32 %v1515, 0.0
      %v1633 = vmax.f32 %v1517, 0.0
      %v1634 = vmax.f32 %v1520, 0.0
      %v1635 = vmax.f32 %v1522, 0.0
      %v1636 = vmax.f32 %v1525, 0.0
      %v1637 = vmax.f32 %v1527, 0.0
      %v1638 = vmax.f32 %v1530, 0.0
      %v1639 = vmax.f32 %v1532, 0.0
      %v1640 = vmax.f32 %v1535, 0.0
      %v1641 = vmax.f32 %v1537, 0.0
      %v1642 = vmax.f32 %v1540, 0.0
      %v1643 = vmax.f32 %v1542, 0.0
      %v1644 = vmax.f32 %v1545, 0.0
      %v1645 = vmax.f32 %v1547, 0.0
      %v1646 = vmax.f32 %v1550, 0.0
      %v1647 = vmax.f32 %v1552, 0.0
      %v1648 = vmax.f32 %v1555, 0.0
      %v1649 = vmax.f32 %v1557, 0.0
      %v1650 = vmax.f32 %v1560, 0.0
      %v1651 = vmax.f32 %v1562, 0.0
      %v1652 = vmax.f32 %v1565, 0.0
      %v1653 = vmax.f32 %v1567, 0.0
      %v1654 = vmax.f32 %v1570, 0.0
      %v1655 = vmax.f32 %v1572, 0.0
      %v1656 = vmax.f32 %v1575, 0.0
      %v1657 = vmax.f32 %v1577, 0.0
      %v1658 = vmax.f32 %v1580, 0.0
      %v1659 = vmax.f32 %v1582, 0.0
      %v1660 = vmax.f32 %v1585, 0.0
      %v1661 = vmax.f32 %v1587, 0.0
      %v1662 = vmax.f32 %v1590, 0.0
      %v1663 = vmax.f32 %v1592, 0.0
      %v1664 = vmax.f32 %v1595, 0.0
      %v1665 = vmax.f32 %v1597, 0.0
      %v1666 = vmax.f32 %v1600, 0.0
      %v1667 = vmax.f32 %v1602, 0.0
      %v1668 = vpack.c.bf16 %v1604, %v1604
      %v1669 = vpack.c.bf16 %v1605, %v1605
      %v1670 = vpack.c.bf16 %v1606, %v1606
      %v1671 = vpack.c.bf16 %v1607, %v1607
      %v1672 = vpack.c.bf16 %v1608, %v1608
      %v1673 = vpack.c.bf16 %v1609, %v1609
      %v1674 = vpack.c.bf16 %v1610, %v1610
      %v1675 = vpack.c.bf16 %v1611, %v1611
      %v1676 = vpack.c.bf16 %v1612, %v1612
      %v1677 = vpack.c.bf16 %v1613, %v1613
      %v1678 = vpack.c.bf16 %v1614, %v1614
      %v1679 = vpack.c.bf16 %v1615, %v1615
      %v1680 = vpack.c.bf16 %v1616, %v1616
      %v1681 = vpack.c.bf16 %v1617, %v1617
      %v1682 = vpack.c.bf16 %v1618, %v1618
      %v1683 = vpack.c.bf16 %v1619, %v1619
      %v1684 = vpack.c.bf16 %v1620, %v1620
      %v1685 = vpack.c.bf16 %v1621, %v1621
      %v1686 = vpack.c.bf16 %v1622, %v1622
      %v1687 = vpack.c.bf16 %v1623, %v1623
      %v1688 = vpack.c.bf16 %v1624, %v1624
      %v1689 = vpack.c.bf16 %v1625, %v1625
      %v1690 = vpack.c.bf16 %v1626, %v1626
      %v1691 = vpack.c.bf16 %v1627, %v1627
      %v1692 = vpack.c.bf16 %v1628, %v1628
      %v1693 = vpack.c.bf16 %v1629, %v1629
      %v1694 = vpack.c.bf16 %v1630, %v1630
      %v1695 = vpack.c.bf16 %v1631, %v1631
      %v1696 = vpack.c.bf16 %v1632, %v1632
      %v1697 = vpack.c.bf16 %v1633, %v1633
      %v1698 = vpack.c.bf16 %v1634, %v1634
      %v1699 = vpack.c.bf16 %v1635, %v1635
      %v1700 = vpack.c.bf16 %v1636, %v1636
      %v1701 = vpack.c.bf16 %v1637, %v1637
      %v1702 = vpack.c.bf16 %v1638, %v1638
      %v1703 = vpack.c.bf16 %v1639, %v1639
      %v1704 = vpack.c.bf16 %v1640, %v1640
      %v1705 = vpack.c.bf16 %v1641, %v1641
      %v1706 = vpack.c.bf16 %v1642, %v1642
      %v1707 = vpack.c.bf16 %v1643, %v1643
      %v1708 = vpack.c.bf16 %v1644, %v1644
      %v1709 = vpack.c.bf16 %v1645, %v1645
      %v1710 = vpack.c.bf16 %v1646, %v1646
      %v1711 = vpack.c.bf16 %v1647, %v1647
      %v1712 = vpack.c.bf16 %v1648, %v1648
      %v1713 = vpack.c.bf16 %v1649, %v1649
      %v1714 = vpack.c.bf16 %v1650, %v1650
      %v1715 = vpack.c.bf16 %v1651, %v1651
      %v1716 = vpack.c.bf16 %v1652, %v1652
      %v1717 = vpack.c.bf16 %v1653, %v1653
      %v1718 = vpack.c.bf16 %v1654, %v1654
      %v1719 = vpack.c.bf16 %v1655, %v1655
      %v1720 = vpack.c.bf16 %v1656, %v1656
      %v1721 = vpack.c.bf16 %v1657, %v1657
      %v1722 = vpack.c.bf16 %v1658, %v1658
      %v1723 = vpack.c.bf16 %v1659, %v1659
      %v1724 = vpack.c.bf16 %v1660, %v1660
      %v1725 = vpack.c.bf16 %v1661, %v1661
      %v1726 = vpack.c.bf16 %v1662, %v1662
      %v1727 = vpack.c.bf16 %v1663, %v1663
      %v1728 = vpack.c.bf16 %v1664, %v1664
      %v1729 = vpack.c.bf16 %v1665, %v1665
      %v1730 = vpack.c.bf16 %v1666, %v1666
      %v1731 = vpack.c.bf16 %v1667, %v1667
      %vm1732 = vcmask 519168
      %1733 = vst.msk [vmem:[%s226] sm:$0xf] %vm1732, %v1668
      %1734 = vst.msk [vmem:[%s226 + $0x4] sm:$0xf] %vm1732, %v1669
      %1735 = vst.msk [vmem:[%s226 + $0x8] sm:$0xf] %vm1732, %v1670
      %1736 = vst.msk [vmem:[%s226 + $0xc] sm:$0xf] %vm1732, %v1671
      %1737 = vst.msk [vmem:[%s226 + $0x10] sm:$0xf] %vm1732, %v1672
      %1738 = vst.msk [vmem:[%s226 + $0x14] sm:$0xf] %vm1732, %v1673
      %1739 = vst.msk [vmem:[%s226 + $0x18] sm:$0xf] %vm1732, %v1674
      %1740 = vst.msk [vmem:[%s226 + $0x1c] sm:$0xf] %vm1732, %v1675
      %1741 = vst.msk [vmem:[%s226 + $0x20] sm:$0xf] %vm1732, %v1676
      %1742 = vst.msk [vmem:[%s226 + $0x24] sm:$0xf] %vm1732, %v1677
      %1743 = vst.msk [vmem:[%s226 + $0x28] sm:$0xf] %vm1732, %v1678
      %1744 = vst.msk [vmem:[%s226 + $0x2c] sm:$0xf] %vm1732, %v1679
      %1745 = vst.msk [vmem:[%s226 + $0x30] sm:$0xf] %vm1732, %v1680
      %1746 = vst.msk [vmem:[%s226 + $0x34] sm:$0xf] %vm1732, %v1681
      %1747 = vst.msk [vmem:[%s226 + $0x38] sm:$0xf] %vm1732, %v1682
      %1748 = vst.msk [vmem:[%s226 + $0x3c] sm:$0xf] %vm1732, %v1683
      %1749 = vst.msk [vmem:[%s226 + $0x40] sm:$0xf] %vm1732, %v1684
      %1750 = vst.msk [vmem:[%s226 + $0x44] sm:$0xf] %vm1732, %v1685
      %1751 = vst.msk [vmem:[%s226 + $0x48] sm:$0xf] %vm1732, %v1686
      %1752 = vst.msk [vmem:[%s226 + $0x4c] sm:$0xf] %vm1732, %v1687
      %1753 = vst.msk [vmem:[%s226 + $0x50] sm:$0xf] %vm1732, %v1688
      %1754 = vst.msk [vmem:[%s226 + $0x54] sm:$0xf] %vm1732, %v1689
      %1755 = vst.msk [vmem:[%s226 + $0x58] sm:$0xf] %vm1732, %v1690
      %1756 = vst.msk [vmem:[%s226 + $0x5c] sm:$0xf] %vm1732, %v1691
      %1757 = vst.msk [vmem:[%s226 + $0x60] sm:$0xf] %vm1732, %v1692
      %1758 = vst.msk [vmem:[%s226 + $0x64] sm:$0xf] %vm1732, %v1693
      %1759 = vst.msk [vmem:[%s226 + $0x68] sm:$0xf] %vm1732, %v1694
      %1760 = vst.msk [vmem:[%s226 + $0x6c] sm:$0xf] %vm1732, %v1695
      %1761 = vst.msk [vmem:[%s226 + $0x70] sm:$0xf] %vm1732, %v1696
      %1762 = vst.msk [vmem:[%s226 + $0x74] sm:$0xf] %vm1732, %v1697
      %1763 = vst.msk [vmem:[%s226 + $0x78] sm:$0xf] %vm1732, %v1698
      %1764 = vst.msk [vmem:[%s226 + $0x7c] sm:$0xf] %vm1732, %v1699
      %1765 = vst.msk [vmem:[%s226 + $0x80] sm:$0xf] %vm1732, %v1700
      %1766 = vst.msk [vmem:[%s226 + $0x84] sm:$0xf] %vm1732, %v1701
      %1767 = vst.msk [vmem:[%s226 + $0x88] sm:$0xf] %vm1732, %v1702
      %1768 = vst.msk [vmem:[%s226 + $0x8c] sm:$0xf] %vm1732, %v1703
      %1769 = vst.msk [vmem:[%s226 + $0x90] sm:$0xf] %vm1732, %v1704
      %1770 = vst.msk [vmem:[%s226 + $0x94] sm:$0xf] %vm1732, %v1705
      %1771 = vst.msk [vmem:[%s226 + $0x98] sm:$0xf] %vm1732, %v1706
      %1772 = vst.msk [vmem:[%s226 + $0x9c] sm:$0xf] %vm1732, %v1707
      %1773 = vst.msk [vmem:[%s226 + $0xa0] sm:$0xf] %vm1732, %v1708
      %1774 = vst.msk [vmem:[%s226 + $0xa4] sm:$0xf] %vm1732, %v1709
      %1775 = vst.msk [vmem:[%s226 + $0xa8] sm:$0xf] %vm1732, %v1710
      %1776 = vst.msk [vmem:[%s226 + $0xac] sm:$0xf] %vm1732, %v1711
      %1777 = vst.msk [vmem:[%s226 + $0xb0] sm:$0xf] %vm1732, %v1712
      %1778 = vst.msk [vmem:[%s226 + $0xb4] sm:$0xf] %vm1732, %v1713
      %1779 = vst.msk [vmem:[%s226 + $0xb8] sm:$0xf] %vm1732, %v1714
      %1780 = vst.msk [vmem:[%s226 + $0xbc] sm:$0xf] %vm1732, %v1715
      %1781 = vst.msk [vmem:[%s226 + $0xc0] sm:$0xf] %vm1732, %v1716
      %1782 = vst.msk [vmem:[%s226 + $0xc4] sm:$0xf] %vm1732, %v1717
      %1783 = vst.msk [vmem:[%s226 + $0xc8] sm:$0xf] %vm1732, %v1718
      %1784 = vst.msk [vmem:[%s226 + $0xcc] sm:$0xf] %vm1732, %v1719
      %1785 = vst.msk [vmem:[%s226 + $0xd0] sm:$0xf] %vm1732, %v1720
      %1786 = vst.msk [vmem:[%s226 + $0xd4] sm:$0xf] %vm1732, %v1721
      %1787 = vst.msk [vmem:[%s226 + $0xd8] sm:$0xf] %vm1732, %v1722
      %1788 = vst.msk [vmem:[%s226 + $0xdc] sm:$0xf] %vm1732, %v1723
      %1789 = vst.msk [vmem:[%s226 + $0xe0] sm:$0xf] %vm1732, %v1724
      %1790 = vst.msk [vmem:[%s226 + $0xe4] sm:$0xf] %vm1732, %v1725
      %1791 = vst.msk [vmem:[%s226 + $0xe8] sm:$0xf] %vm1732, %v1726
      %1792 = vst.msk [vmem:[%s226 + $0xec] sm:$0xf] %vm1732, %v1727
      %1793 = vst.msk [vmem:[%s226 + $0xf0] sm:$0xf] %vm1732, %v1728
      %1794 = vst.msk [vmem:[%s226 + $0xf4] sm:$0xf] %vm1732, %v1729
      %1795 = vst.msk [vmem:[%s226 + $0xf8] sm:$0xf] %vm1732, %v1730
      %1796 = vst.msk [vmem:[%s226 + $0xfc] sm:$0xf] %vm1732, %v1731
      %s1797 = smul.u32 64, %s16
      %p1798 = scmp.lt.s32.totalorder %s1797, 127
      %s1799 = scalar_select %p1798, %s1797, 127
      %s1800 = smul.addr %s1799, 4
      %s1801 = scalar_lea.vmem %s5, %s1800
      // Predicated region
      $region41: #{segmentation_network_full.3} parent=39 // pred_check
        %p1802 = pneg %p144
      $region42: #{segmentation_network_full.3} parent=39 // pred_check_branch
        %1804 = sbr.rel (%p1802) target = $region44
      $region43: #{segmentation_network_full.3} parent=39 // pred_region
        %s1805 = smul.u32 64, %s16
      $region44: #{segmentation_network_full.3} parent=39 // pred_fallthru
        _
    $region40: #{segmentation_network_full.3} parent=5 // pred_fallthru
      _
    %p1806 = scmp.le.s32.totalorder 2, %s11
    // Predicated region
    $region45: #{segmentation_network_full.3} parent=5 // pred_check
      %p1807 = pneg %p1806
    $region46: #{segmentation_network_full.3} parent=5 // pred_check_branch
      %1809 = sbr.rel (%p1807) target = $region48
    $region47: #{segmentation_network_full.3} parent=5 // pred_region
      %s1810 = ssub.s32 %s11, 2
      // Predicated region
      $region49: #{segmentation_network_full.3} parent=47 // pred_check
        %p1811 = pneg %p150
      $region50: #{segmentation_network_full.3} parent=47 // pred_check_branch
        %1813 = sbr.rel (%p1811) target = $region52
      $region51: #{segmentation_network_full.3} parent=47 // pred_region
        %s1814 = smul.u32 64, %s17
        %p1815 = scmp.lt.s32.totalorder %s1814, 127
        %s1816 = scalar_select %p1815, %s1814, 127
        %s1817 = smul.addr %s1816, 4
        %s1818 = scalar_lea.vmem %s5, %s1817
      $region52: #{segmentation_network_full.3} parent=47 // pred_fallthru
        _
    $region48: #{segmentation_network_full.3} parent=5 // pred_fallthru
      _
  $region6: #{segmentation_network_full.3} parent=0 // loop_footer
    %s15 = sadd.s32 1, %s11
  $region7: #{segmentation_network_full.3} parent=0 // loop_footer_branch
    %10 = sbr.rel target = $region3
  $region8: #{segmentation_network_full.3} parent=0 // loop_exit
    _

// kernel: segmentation_network_full.4
$region0: #{segmentation_network_full.4}
  #allocation0 [shape = 'u32[]', space=smem, size = 0x4, offset = 0x4, fixed_abs, tag = 'smem constant byte address 0x4 - core index']
  #allocation1 [shape = 'u32[72,128]{1,0:T(1,128)}', space=vmem, size = 0x9000, scoped, tag = 'internal scratch']
  %s0 = inlined_call_operand.vmem [shape: bf16[128,512], index: 0, kind: input, shape index: {}]
  %s1 = inlined_call_operand.vmem [shape: bf16[512,128], index: 1, kind: input, shape index: {}]
  %s2 = inlined_call_operand.vmem [shape: f32[1,128], index: 2, kind: input, shape index: {}]
  %s3 = inlined_call_operand.vmem [shape: bf16[128,128], index: 3, kind: output, shape index: {}]
  %s4 = sld [smem:[#allocation0]]
  $region22: #{segmentation_network_full.4} parent=0
    _
  %s6 = ssub.s32 1, %s4
  %s7 = scalar_select 0, %s6, %s4
  // Predicated region
  $region2: #{segmentation_network_full.4} parent=0 // pred_check
    _
  $region3: #{segmentation_network_full.4} parent=0 // pred_check_branch
    %9 = sbr.rel (0) target = $region5
  $region4: #{segmentation_network_full.4} parent=0 // pred_region
    _
  $region5: #{segmentation_network_full.4} parent=0 // pred_fallthru
    _
  // Predicated region
  $region6: #{segmentation_network_full.4} parent=0 // pred_check
    _
  $region7: #{segmentation_network_full.4} parent=0 // pred_check_branch
    %11 = sbr.rel (0) target = $region9
  $region8: #{segmentation_network_full.4} parent=0 // pred_region
    _
  $region9: #{segmentation_network_full.4} parent=0 // pred_fallthru
    _
  // Predicated region
  $region10: #{segmentation_network_full.4} parent=0 // pred_check
    _
  $region11: #{segmentation_network_full.4} parent=0 // pred_check_branch
    %13 = sbr.rel (0) target = $region13
  $region12: #{segmentation_network_full.4} parent=0 // pred_region
    _
  $region13: #{segmentation_network_full.4} parent=0 // pred_fallthru
    _
  %v14 = vld [vmem:[%s0] sm:$0xff]
  %v15 = vld [vmem:[%s0 + $0x8] sm:$0xff]
  %v16 = vld [vmem:[%s0 + $0x10] sm:$0xff]
  %v17 = vld [vmem:[%s0 + $0x18] sm:$0xff]
  %v18 = vld [vmem:[%s0 + $0x20] sm:$0xff]
  %v19 = vld [vmem:[%s0 + $0x28] sm:$0xff]
  %v20 = vld [vmem:[%s0 + $0x30] sm:$0xff]
  %v21 = vld [vmem:[%s0 + $0x38] sm:$0xff]
  %v22 = vld [vmem:[%s0 + $0x40] sm:$0xff]
  %v23 = vld [vmem:[%s0 + $0x48] sm:$0xff]
  %v24 = vld [vmem:[%s0 + $0x50] sm:$0xff]
  %v25 = vld [vmem:[%s0 + $0x58] sm:$0xff]
  %v26 = vld [vmem:[%s0 + $0x60] sm:$0xff]
  %v27 = vld [vmem:[%s0 + $0x68] sm:$0xff]
  %v28 = vld [vmem:[%s0 + $0x70] sm:$0xff]
  %v29 = vld [vmem:[%s0 + $0x78] sm:$0xff]
  %v30 = vld [vmem:[%s0 + $0x80] sm:$0xff]
  %v31 = vld [vmem:[%s0 + $0x88] sm:$0xff]
  %v32 = vld [vmem:[%s0 + $0x90] sm:$0xff]
  %v33 = vld [vmem:[%s0 + $0x98] sm:$0xff]
  %v34 = vld [vmem:[%s0 + $0xa0] sm:$0xff]
  %v35 = vld [vmem:[%s0 + $0xa8] sm:$0xff]
  %v36 = vld [vmem:[%s0 + $0xb0] sm:$0xff]
  %v37 = vld [vmem:[%s0 + $0xb8] sm:$0xff]
  %v38 = vld [vmem:[%s0 + $0xc0] sm:$0xff]
  %v39 = vld [vmem:[%s0 + $0xc8] sm:$0xff]
  %v40 = vld [vmem:[%s0 + $0xd0] sm:$0xff]
  %v41 = vld [vmem:[%s0 + $0xd8] sm:$0xff]
  %v42 = vld [vmem:[%s0 + $0xe0] sm:$0xff]
  %v43 = vld [vmem:[%s0 + $0xe8] sm:$0xff]
  %v44 = vld [vmem:[%s0 + $0xf0] sm:$0xff]
  %v45 = vld [vmem:[%s0 + $0xf8] sm:$0xff]
  %v46 = vld [vmem:[%s1] sm:$0xf]
  %v47 = vld [vmem:[%s1 + $0x4] sm:$0xf]
  %v48 = vld [vmem:[%s1 + $0x8] sm:$0xf]
  %v49 = vld [vmem:[%s1 + $0xc] sm:$0xf]
  %v50 = vld [vmem:[%s1 + $0x10] sm:$0xf]
  %v51 = vld [vmem:[%s1 + $0x14] sm:$0xf]
  %v52 = vld [vmem:[%s1 + $0x18] sm:$0xf]
  %v53 = vld [vmem:[%s1 + $0x1c] sm:$0xf]
  %v54 = vld [vmem:[%s1 + $0x20] sm:$0xf]
  %v55 = vld [vmem:[%s1 + $0x24] sm:$0xf]
  %v56 = vld [vmem:[%s1 + $0x28] sm:$0xf]
  %v57 = vld [vmem:[%s1 + $0x2c] sm:$0xf]
  %v58 = vld [vmem:[%s1 + $0x30] sm:$0xf]
  %v59 = vld [vmem:[%s1 + $0x34] sm:$0xf]
  %v60 = vld [vmem:[%s1 + $0x38] sm:$0xf]
  %v61 = vld [vmem:[%s1 + $0x3c] sm:$0xf]
  %v62 = vld [vmem:[%s1 + $0x40] sm:$0xf]
  %v63 = vld [vmem:[%s1 + $0x44] sm:$0xf]
  %v64 = vld [vmem:[%s1 + $0x48] sm:$0xf]
  %v65 = vld [vmem:[%s1 + $0x4c] sm:$0xf]
  %v66 = vld [vmem:[%s1 + $0x50] sm:$0xf]
  %v67 = vld [vmem:[%s1 + $0x54] sm:$0xf]
  %v68 = vld [vmem:[%s1 + $0x58] sm:$0xf]
  %v69 = vld [vmem:[%s1 + $0x5c] sm:$0xf]
  %v70 = vld [vmem:[%s1 + $0x60] sm:$0xf]
  %v71 = vld [vmem:[%s1 + $0x64] sm:$0xf]
  %v72 = vld [vmem:[%s1 + $0x68] sm:$0xf]
  %v73 = vld [vmem:[%s1 + $0x6c] sm:$0xf]
  %v74 = vld [vmem:[%s1 + $0x70] sm:$0xf]
  %v75 = vld [vmem:[%s1 + $0x74] sm:$0xf]
  %v76 = vld [vmem:[%s1 + $0x78] sm:$0xf]
  %v77 = vld [vmem:[%s1 + $0x7c] sm:$0xf]
  %v78 = vld [vmem:[%s1 + $0x80] sm:$0xf]
  %v79 = vld [vmem:[%s1 + $0x84] sm:$0xf]
  %v80 = vld [vmem:[%s1 + $0x88] sm:$0xf]
  %v81 = vld [vmem:[%s1 + $0x8c] sm:$0xf]
  %v82 = vld [vmem:[%s1 + $0x90] sm:$0xf]
  %v83 = vld [vmem:[%s1 + $0x94] sm:$0xf]
  %v84 = vld [vmem:[%s1 + $0x98] sm:$0xf]
  %v85 = vld [vmem:[%s1 + $0x9c] sm:$0xf]
  %v86 = vld [vmem:[%s1 + $0xa0] sm:$0xf]
  %v87 = vld [vmem:[%s1 + $0xa4] sm:$0xf]
  %v88 = vld [vmem:[%s1 + $0xa8] sm:$0xf]
  %v89 = vld [vmem:[%s1 + $0xac] sm:$0xf]
  %v90 = vld [vmem:[%s1 + $0xb0] sm:$0xf]
  %v91 = vld [vmem:[%s1 + $0xb4] sm:$0xf]
  %v92 = vld [vmem:[%s1 + $0xb8] sm:$0xf]
  %v93 = vld [vmem:[%s1 + $0xbc] sm:$0xf]
  %v94 = vld [vmem:[%s1 + $0xc0] sm:$0xf]
  %v95 = vld [vmem:[%s1 + $0xc4] sm:$0xf]
  %v96 = vld [vmem:[%s1 + $0xc8] sm:$0xf]
  %v97 = vld [vmem:[%s1 + $0xcc] sm:$0xf]
  %v98 = vld [vmem:[%s1 + $0xd0] sm:$0xf]
  %v99 = vld [vmem:[%s1 + $0xd4] sm:$0xf]
  %v100 = vld [vmem:[%s1 + $0xd8] sm:$0xf]
  %v101 = vld [vmem:[%s1 + $0xdc] sm:$0xf]
  %v102 = vld [vmem:[%s1 + $0xe0] sm:$0xf]
  %v103 = vld [vmem:[%s1 + $0xe4] sm:$0xf]
  %v104 = vld [vmem:[%s1 + $0xe8] sm:$0xf]
  %v105 = vld [vmem:[%s1 + $0xec] sm:$0xf]
  %v106 = vld [vmem:[%s1 + $0xf0] sm:$0xf]
  %v107 = vld [vmem:[%s1 + $0xf4] sm:$0xf]
  %v108 = vld [vmem:[%s1 + $0xf8] sm:$0xf]
  %v109 = vld [vmem:[%s1 + $0xfc] sm:$0xf]
  %v110 = vld [vmem:[%s2] sm:$0x1]
  %v112 = vperm.slane %v110, 0
  %v146 = vunpack.c.l.b16 %v14
  %v147 = vunpack.c.h.b16 %v14
  %v148 = vunpack.c.l.b16 %v15
  %v149 = vunpack.c.h.b16 %v15
  %v150 = vunpack.c.l.b16 %v16
  %v151 = vunpack.c.h.b16 %v16
  %v152 = vunpack.c.l.b16 %v17
  %v153 = vunpack.c.h.b16 %v17
  %v154 = vunpack.c.l.b16 %v18
  %v155 = vunpack.c.h.b16 %v18
  %v156 = vunpack.c.l.b16 %v19
  %v157 = vunpack.c.h.b16 %v19
  %v158 = vunpack.c.l.b16 %v20
  %v159 = vunpack.c.h.b16 %v20
  %v160 = vunpack.c.l.b16 %v21
  %v161 = vunpack.c.h.b16 %v21
  %v162 = vunpack.c.l.b16 %v22
  %v163 = vunpack.c.h.b16 %v22
  %v164 = vunpack.c.l.b16 %v23
  %v165 = vunpack.c.h.b16 %v23
  %v166 = vunpack.c.l.b16 %v24
  %v167 = vunpack.c.h.b16 %v24
  %v168 = vunpack.c.l.b16 %v25
  %v169 = vunpack.c.h.b16 %v25
  %v170 = vunpack.c.l.b16 %v26
  %v171 = vunpack.c.h.b16 %v26
  %v172 = vunpack.c.l.b16 %v27
  %v173 = vunpack.c.h.b16 %v27
  %v174 = vunpack.c.l.b16 %v28
  %v175 = vunpack.c.h.b16 %v28
  %v176 = vunpack.c.l.b16 %v29
  %v177 = vunpack.c.h.b16 %v29
  %v178 = vunpack.c.l.b16 %v30
  %v179 = vunpack.c.h.b16 %v30
  %v180 = vunpack.c.l.b16 %v31
  %v181 = vunpack.c.h.b16 %v31
  %v182 = vunpack.c.l.b16 %v32
  %v183 = vunpack.c.h.b16 %v32
  %v184 = vunpack.c.l.b16 %v33
  %v185 = vunpack.c.h.b16 %v33
  %v186 = vunpack.c.l.b16 %v34
  %v187 = vunpack.c.h.b16 %v34
  %v188 = vunpack.c.l.b16 %v35
  %v189 = vunpack.c.h.b16 %v35
  %v190 = vunpack.c.l.b16 %v36
  %v191 = vunpack.c.h.b16 %v36
  %v192 = vunpack.c.l.b16 %v37
  %v193 = vunpack.c.h.b16 %v37
  %v194 = vunpack.c.l.b16 %v38
  %v195 = vunpack.c.h.b16 %v38
  %v196 = vunpack.c.l.b16 %v39
  %v197 = vunpack.c.h.b16 %v39
  %v198 = vunpack.c.l.b16 %v40
  %v199 = vunpack.c.h.b16 %v40
  %v200 = vunpack.c.l.b16 %v41
  %v201 = vunpack.c.h.b16 %v41
  %v202 = vunpack.c.l.b16 %v42
  %v203 = vunpack.c.h.b16 %v42
  %v204 = vunpack.c.l.b16 %v43
  %v205 = vunpack.c.h.b16 %v43
  %v206 = vunpack.c.l.b16 %v44
  %v207 = vunpack.c.h.b16 %v44
  %v208 = vunpack.c.l.b16 %v45
  %v209 = vunpack.c.h.b16 %v45
  %v210 = vpack.c.b16 %v150, %v146
  %v211 = vpack.c.b16 %v151, %v147
  %v212 = vpack.c.b16 %v152, %v148
  %v213 = vpack.c.b16 %v153, %v149
  %v214 = vpack.c.b16 %v158, %v154
  %v215 = vpack.c.b16 %v159, %v155
  %v216 = vpack.c.b16 %v160, %v156
  %v217 = vpack.c.b16 %v161, %v157
  %v218 = vpack.c.b16 %v166, %v162
  %v219 = vpack.c.b16 %v167, %v163
  %v220 = vpack.c.b16 %v168, %v164
  %v221 = vpack.c.b16 %v169, %v165
  %v222 = vpack.c.b16 %v174, %v170
  %v223 = vpack.c.b16 %v175, %v171
  %v224 = vpack.c.b16 %v176, %v172
  %v225 = vpack.c.b16 %v177, %v173
  %v226 = vpack.c.b16 %v182, %v178
  %v227 = vpack.c.b16 %v183, %v179
  %v228 = vpack.c.b16 %v184, %v180
  %v229 = vpack.c.b16 %v185, %v181
  %v230 = vpack.c.b16 %v190, %v186
  %v231 = vpack.c.b16 %v191, %v187
  %v232 = vpack.c.b16 %v192, %v188
  %v233 = vpack.c.b16 %v193, %v189
  %v234 = vpack.c.b16 %v198, %v194
  %v235 = vpack.c.b16 %v199, %v195
  %v236 = vpack.c.b16 %v200, %v196
  %v237 = vpack.c.b16 %v201, %v197
  %v238 = vpack.c.b16 %v206, %v202
  %v239 = vpack.c.b16 %v207, %v203
  %v240 = vpack.c.b16 %v208, %v204
  %v241 = vpack.c.b16 %v209, %v205
  %v338 = vunpack.c.l.b16 %v46
  %v339 = vunpack.c.l.b16 %v47
  %v340 = vunpack.c.l.b16 %v48
  %v341 = vunpack.c.l.b16 %v49
  %v342 = vunpack.c.l.b16 %v50
  %v343 = vunpack.c.l.b16 %v51
  %v344 = vunpack.c.l.b16 %v52
  %v345 = vunpack.c.l.b16 %v53
  %v346 = vunpack.c.l.b16 %v54
  %v347 = vunpack.c.l.b16 %v55
  %v348 = vunpack.c.l.b16 %v56
  %v349 = vunpack.c.l.b16 %v57
  %v350 = vunpack.c.l.b16 %v58
  %v351 = vunpack.c.l.b16 %v59
  %v352 = vunpack.c.l.b16 %v60
  %v353 = vunpack.c.l.b16 %v61
  %v354 = vunpack.c.l.b16 %v62
  %v355 = vunpack.c.l.b16 %v63
  %v356 = vunpack.c.l.b16 %v64
  %v357 = vunpack.c.l.b16 %v65
  %v358 = vunpack.c.l.b16 %v66
  %v359 = vunpack.c.l.b16 %v67
  %v360 = vunpack.c.l.b16 %v68
  %v361 = vunpack.c.l.b16 %v69
  %v362 = vunpack.c.l.b16 %v70
  %v363 = vunpack.c.l.b16 %v71
  %v364 = vunpack.c.l.b16 %v72
  %v365 = vunpack.c.l.b16 %v73
  %v366 = vunpack.c.l.b16 %v74
  %v367 = vunpack.c.l.b16 %v75
  %v368 = vunpack.c.l.b16 %v76
  %v369 = vunpack.c.l.b16 %v77
  %v370 = vunpack.c.l.b16 %v78
  %v371 = vunpack.c.l.b16 %v79
  %v372 = vunpack.c.l.b16 %v80
  %v373 = vunpack.c.l.b16 %v81
  %v374 = vunpack.c.l.b16 %v82
  %v375 = vunpack.c.l.b16 %v83
  %v376 = vunpack.c.l.b16 %v84
  %v377 = vunpack.c.l.b16 %v85
  %v378 = vunpack.c.l.b16 %v86
  %v379 = vunpack.c.l.b16 %v87
  %v380 = vunpack.c.l.b16 %v88
  %v381 = vunpack.c.l.b16 %v89
  %v382 = vunpack.c.l.b16 %v90
  %v383 = vunpack.c.l.b16 %v91
  %v384 = vunpack.c.l.b16 %v92
  %v385 = vunpack.c.l.b16 %v93
  %v386 = vunpack.c.l.b16 %v94
  %v387 = vunpack.c.l.b16 %v95
  %v388 = vunpack.c.l.b16 %v96
  %v389 = vunpack.c.l.b16 %v97
  %v390 = vunpack.c.l.b16 %v98
  %v391 = vunpack.c.l.b16 %v99
  %v392 = vunpack.c.l.b16 %v100
  %v393 = vunpack.c.l.b16 %v101
  %v394 = vunpack.c.l.b16 %v102
  %v395 = vunpack.c.l.b16 %v103
  %v396 = vunpack.c.l.b16 %v104
  %v397 = vunpack.c.l.b16 %v105
  %v398 = vunpack.c.l.b16 %v106
  %v399 = vunpack.c.l.b16 %v107
  %v400 = vunpack.c.l.b16 %v108
  %v401 = vunpack.c.l.b16 %v109
  %v402 = vpack.c.b16 %v339, %v338
  %v403 = vpack.c.b16 %v341, %v340
  %v404 = vpack.c.b16 %v343, %v342
  %v405 = vpack.c.b16 %v345, %v344
  %v406 = vpack.c.b16 %v347, %v346
  %v407 = vpack.c.b16 %v349, %v348
  %v408 = vpack.c.b16 %v351, %v350
  %v409 = vpack.c.b16 %v353, %v352
  %v410 = vpack.c.b16 %v355, %v354
  %v411 = vpack.c.b16 %v357, %v356
  %v412 = vpack.c.b16 %v359, %v358
  %v413 = vpack.c.b16 %v361, %v360
  %v414 = vpack.c.b16 %v363, %v362
  %v415 = vpack.c.b16 %v365, %v364
  %v416 = vpack.c.b16 %v367, %v366
  %v417 = vpack.c.b16 %v369, %v368
  %v418 = vpack.c.b16 %v371, %v370
  %v419 = vpack.c.b16 %v373, %v372
  %v420 = vpack.c.b16 %v375, %v374
  %v421 = vpack.c.b16 %v377, %v376
  %v422 = vpack.c.b16 %v379, %v378
  %v423 = vpack.c.b16 %v381, %v380
  %v424 = vpack.c.b16 %v383, %v382
  %v425 = vpack.c.b16 %v385, %v384
  %v426 = vpack.c.b16 %v387, %v386
  %v427 = vpack.c.b16 %v389, %v388
  %v428 = vpack.c.b16 %v391, %v390
  %v429 = vpack.c.b16 %v393, %v392
  %v430 = vpack.c.b16 %v395, %v394
  %v431 = vpack.c.b16 %v397, %v396
  %v432 = vpack.c.b16 %v399, %v398
  %v433 = vpack.c.b16 %v401, %v400
  %466 = vmatpush.bf16.msra.mxu0 %v409
  %467 = vmatpush.bf16.msra.mxu0 %v408
  %468 = vmatpush.bf16.msra.mxu0 %v407
  %469 = vmatpush.bf16.msra.mxu0 %v406
  %470 = vmatpush.bf16.msra.mxu0 %v405
  %471 = vmatpush.bf16.msra.mxu0 %v404
  %472 = vmatpush.bf16.msra.mxu0 %v403
  %473 = vmatpush.bf16.msra.mxu0 %v402
  %474 = vmatmul.bf16.gmra.mxu0 %v210
  %v475 = vpop.f32.mrf.mxu0
  %v476 = vadd.f32 %v112, %v475
  %v477 = vpop.f32.mrf.mxu0
  %v478 = vadd.f32 %v112, %v477
  %479 = vmatmul.bf16.gmra.mxu0 %v214
  %v480 = vpop.f32.mrf.mxu0
  %v481 = vadd.f32 %v112, %v480
  %v482 = vpop.f32.mrf.mxu0
  %v483 = vadd.f32 %v112, %v482
  %484 = vmatmul.bf16.gmra.mxu0 %v218
  %v485 = vpop.f32.mrf.mxu0
  %v486 = vadd.f32 %v112, %v485
  %v487 = vpop.f32.mrf.mxu0
  %v488 = vadd.f32 %v112, %v487
  %489 = vmatmul.bf16.gmra.mxu0 %v222
  %v490 = vpop.f32.mrf.mxu0
  %v491 = vadd.f32 %v112, %v490
  %v492 = vpop.f32.mrf.mxu0
  %v493 = vadd.f32 %v112, %v492
  %494 = vmatmul.bf16.gmra.mxu0 %v226
  %v495 = vpop.f32.mrf.mxu0
  %v496 = vadd.f32 %v112, %v495
  %v497 = vpop.f32.mrf.mxu0
  %v498 = vadd.f32 %v112, %v497
  %499 = vmatmul.bf16.gmra.mxu0 %v230
  %v500 = vpop.f32.mrf.mxu0
  %v501 = vadd.f32 %v112, %v500
  %v502 = vpop.f32.mrf.mxu0
  %v503 = vadd.f32 %v112, %v502
  %504 = vmatmul.bf16.gmra.mxu0 %v234
  %v505 = vpop.f32.mrf.mxu0
  %v506 = vadd.f32 %v112, %v505
  %v507 = vpop.f32.mrf.mxu0
  %v508 = vadd.f32 %v112, %v507
  %509 = vmatmul.bf16.gmra.mxu0 %v238
  %v510 = vpop.f32.mrf.mxu0
  %v511 = vadd.f32 %v112, %v510
  %v512 = vpop.f32.mrf.mxu0
  %v513 = vadd.f32 %v112, %v512
  %514 = vdwg.mxu0
  %515 = vmatpush.bf16.msra.mxu0 %v417
  %516 = vmatpush.bf16.msra.mxu0 %v416
  %517 = vmatpush.bf16.msra.mxu0 %v415
  %518 = vmatpush.bf16.msra.mxu0 %v414
  %519 = vmatpush.bf16.msra.mxu0 %v413
  %520 = vmatpush.bf16.msra.mxu0 %v412
  %521 = vmatpush.bf16.msra.mxu0 %v411
  %522 = vmatpush.bf16.msra.mxu0 %v410
  %523 = vmatmul.bf16.gmra.mxu0 %v211
  %v524 = vpop.f32.mrf.mxu0
  %v525 = vadd.f32 %v476, %v524
  %v526 = vpop.f32.mrf.mxu0
  %v527 = vadd.f32 %v478, %v526
  %528 = vmatmul.bf16.gmra.mxu0 %v215
  %v529 = vpop.f32.mrf.mxu0
  %v530 = vadd.f32 %v481, %v529
  %v531 = vpop.f32.mrf.mxu0
  %v532 = vadd.f32 %v483, %v531
  %533 = vmatmul.bf16.gmra.mxu0 %v219
  %v534 = vpop.f32.mrf.mxu0
  %v535 = vadd.f32 %v486, %v534
  %v536 = vpop.f32.mrf.mxu0
  %v537 = vadd.f32 %v488, %v536
  %538 = vmatmul.bf16.gmra.mxu0 %v223
  %v539 = vpop.f32.mrf.mxu0
  %v540 = vadd.f32 %v491, %v539
  %v541 = vpop.f32.mrf.mxu0
  %v542 = vadd.f32 %v493, %v541
  %543 = vmatmul.bf16.gmra.mxu0 %v227
  %v544 = vpop.f32.mrf.mxu0
  %v545 = vadd.f32 %v496, %v544
  %v546 = vpop.f32.mrf.mxu0
  %v547 = vadd.f32 %v498, %v546
  %548 = vmatmul.bf16.gmra.mxu0 %v231
  %v549 = vpop.f32.mrf.mxu0
  %v550 = vadd.f32 %v501, %v549
  %v551 = vpop.f32.mrf.mxu0
  %v552 = vadd.f32 %v503, %v551
  %553 = vmatmul.bf16.gmra.mxu0 %v235
  %v554 = vpop.f32.mrf.mxu0
  %v555 = vadd.f32 %v506, %v554
  %v556 = vpop.f32.mrf.mxu0
  %v557 = vadd.f32 %v508, %v556
  %558 = vmatmul.bf16.gmra.mxu0 %v239
  %v559 = vpop.f32.mrf.mxu0
  %v560 = vadd.f32 %v511, %v559
  %v561 = vpop.f32.mrf.mxu0
  %v562 = vadd.f32 %v513, %v561
  %563 = vdwg.mxu0
  %564 = vmatpush.bf16.msra.mxu0 %v425
  %565 = vmatpush.bf16.msra.mxu0 %v424
  %566 = vmatpush.bf16.msra.mxu0 %v423
  %567 = vmatpush.bf16.msra.mxu0 %v422
  %568 = vmatpush.bf16.msra.mxu0 %v421
  %569 = vmatpush.bf16.msra.mxu0 %v420
  %570 = vmatpush.bf16.msra.mxu0 %v419
  %571 = vmatpush.bf16.msra.mxu0 %v418
  %572 = vmatmul.bf16.gmra.mxu0 %v212
  %v573 = vpop.f32.mrf.mxu0
  %v574 = vadd.f32 %v525, %v573
  %v575 = vpop.f32.mrf.mxu0
  %v576 = vadd.f32 %v527, %v575
  %577 = vmatmul.bf16.gmra.mxu0 %v216
  %v578 = vpop.f32.mrf.mxu0
  %v579 = vadd.f32 %v530, %v578
  %v580 = vpop.f32.mrf.mxu0
  %v581 = vadd.f32 %v532, %v580
  %582 = vmatmul.bf16.gmra.mxu0 %v220
  %v583 = vpop.f32.mrf.mxu0
  %v584 = vadd.f32 %v535, %v583
  %v585 = vpop.f32.mrf.mxu0
  %v586 = vadd.f32 %v537, %v585
  %587 = vmatmul.bf16.gmra.mxu0 %v224
  %v588 = vpop.f32.mrf.mxu0
  %v589 = vadd.f32 %v540, %v588
  %v590 = vpop.f32.mrf.mxu0
  %v591 = vadd.f32 %v542, %v590
  %592 = vmatmul.bf16.gmra.mxu0 %v228
  %v593 = vpop.f32.mrf.mxu0
  %v594 = vadd.f32 %v545, %v593
  %v595 = vpop.f32.mrf.mxu0
  %v596 = vadd.f32 %v547, %v595
  %597 = vmatmul.bf16.gmra.mxu0 %v232
  %v598 = vpop.f32.mrf.mxu0
  %v599 = vadd.f32 %v550, %v598
  %v600 = vpop.f32.mrf.mxu0
  %v601 = vadd.f32 %v552, %v600
  %602 = vmatmul.bf16.gmra.mxu0 %v236
  %v603 = vpop.f32.mrf.mxu0
  %v604 = vadd.f32 %v555, %v603
  %v605 = vpop.f32.mrf.mxu0
  %v606 = vadd.f32 %v557, %v605
  %607 = vmatmul.bf16.gmra.mxu0 %v240
  %v608 = vpop.f32.mrf.mxu0
  %v609 = vadd.f32 %v560, %v608
  %v610 = vpop.f32.mrf.mxu0
  %v611 = vadd.f32 %v562, %v610
  %612 = vdwg.mxu0
  %613 = vmatpush.bf16.msra.mxu0 %v433
  %614 = vmatpush.bf16.msra.mxu0 %v432
  %615 = vmatpush.bf16.msra.mxu0 %v431
  %616 = vmatpush.bf16.msra.mxu0 %v430
  %617 = vmatpush.bf16.msra.mxu0 %v429
  %618 = vmatpush.bf16.msra.mxu0 %v428
  %619 = vmatpush.bf16.msra.mxu0 %v427
  %620 = vmatpush.bf16.msra.mxu0 %v426
  %621 = vmatmul.bf16.gmra.mxu0 %v213
  %v622 = vpop.f32.mrf.mxu0
  %v623 = vadd.f32 %v574, %v622
  %v624 = vpop.f32.mrf.mxu0
  %v625 = vadd.f32 %v576, %v624
  %626 = vmatmul.bf16.gmra.mxu0 %v217
  %v627 = vpop.f32.mrf.mxu0
  %v628 = vadd.f32 %v579, %v627
  %v629 = vpop.f32.mrf.mxu0
  %v630 = vadd.f32 %v581, %v629
  %631 = vmatmul.bf16.gmra.mxu0 %v221
  %v632 = vpop.f32.mrf.mxu0
  %v633 = vadd.f32 %v584, %v632
  %v634 = vpop.f32.mrf.mxu0
  %v635 = vadd.f32 %v586, %v634
  %636 = vmatmul.bf16.gmra.mxu0 %v225
  %v637 = vpop.f32.mrf.mxu0
  %v638 = vadd.f32 %v589, %v637
  %v639 = vpop.f32.mrf.mxu0
  %v640 = vadd.f32 %v591, %v639
  %641 = vmatmul.bf16.gmra.mxu0 %v229
  %v642 = vpop.f32.mrf.mxu0
  %v643 = vadd.f32 %v594, %v642
  %v644 = vpop.f32.mrf.mxu0
  %v645 = vadd.f32 %v596, %v644
  %646 = vmatmul.bf16.gmra.mxu0 %v233
  %v647 = vpop.f32.mrf.mxu0
  %v648 = vadd.f32 %v599, %v647
  %v649 = vpop.f32.mrf.mxu0
  %v650 = vadd.f32 %v601, %v649
  %651 = vmatmul.bf16.gmra.mxu0 %v237
  %v652 = vpop.f32.mrf.mxu0
  %v653 = vadd.f32 %v604, %v652
  %v654 = vpop.f32.mrf.mxu0
  %v655 = vadd.f32 %v606, %v654
  %656 = vmatmul.bf16.gmra.mxu0 %v241
  %v657 = vpop.f32.mrf.mxu0
  %v658 = vadd.f32 %v609, %v657
  %v659 = vpop.f32.mrf.mxu0
  %v660 = vadd.f32 %v611, %v659
  %661 = vdwg.mxu0
  %v662 = vmax.f32 %v623, 0.0
  %v663 = vmax.f32 %v625, 0.0
  %v664 = vmax.f32 %v628, 0.0
  %v665 = vmax.f32 %v630, 0.0
  %v666 = vmax.f32 %v633, 0.0
  %v667 = vmax.f32 %v635, 0.0
  %v668 = vmax.f32 %v638, 0.0
  %v669 = vmax.f32 %v640, 0.0
  %v670 = vmax.f32 %v643, 0.0
  %v671 = vmax.f32 %v645, 0.0
  %v672 = vmax.f32 %v648, 0.0
  %v673 = vmax.f32 %v650, 0.0
  %v674 = vmax.f32 %v653, 0.0
  %v675 = vmax.f32 %v655, 0.0
  %v676 = vmax.f32 %v658, 0.0
  %v677 = vmax.f32 %v660, 0.0
  %v678 = vpack.c.bf16 %v662, %v662
  %v679 = vpack.c.bf16 %v663, %v663
  %v680 = vpack.c.bf16 %v664, %v664
  %v681 = vpack.c.bf16 %v665, %v665
  %v682 = vpack.c.bf16 %v666, %v666
  %v683 = vpack.c.bf16 %v667, %v667
  %v684 = vpack.c.bf16 %v668, %v668
  %v685 = vpack.c.bf16 %v669, %v669
  %v686 = vpack.c.bf16 %v670, %v670
  %v687 = vpack.c.bf16 %v671, %v671
  %v688 = vpack.c.bf16 %v672, %v672
  %v689 = vpack.c.bf16 %v673, %v673
  %v690 = vpack.c.bf16 %v674, %v674
  %v691 = vpack.c.bf16 %v675, %v675
  %v692 = vpack.c.bf16 %v676, %v676
  %v693 = vpack.c.bf16 %v677, %v677
  %694 = vst [vmem:[%s3] sm:$0xf] %v678
  %695 = vst [vmem:[%s3 + $0x4] sm:$0xf] %v679
  %696 = vst [vmem:[%s3 + $0x8] sm:$0xf] %v680
  %697 = vst [vmem:[%s3 + $0xc] sm:$0xf] %v681
  %698 = vst [vmem:[%s3 + $0x10] sm:$0xf] %v682
  %699 = vst [vmem:[%s3 + $0x14] sm:$0xf] %v683
  %700 = vst [vmem:[%s3 + $0x18] sm:$0xf] %v684
  %701 = vst [vmem:[%s3 + $0x1c] sm:$0xf] %v685
  %702 = vst [vmem:[%s3 + $0x20] sm:$0xf] %v686
  %703 = vst [vmem:[%s3 + $0x24] sm:$0xf] %v687
  %704 = vst [vmem:[%s3 + $0x28] sm:$0xf] %v688
  %705 = vst [vmem:[%s3 + $0x2c] sm:$0xf] %v689
  %706 = vst [vmem:[%s3 + $0x30] sm:$0xf] %v690
  %707 = vst [vmem:[%s3 + $0x34] sm:$0xf] %v691
  %708 = vst [vmem:[%s3 + $0x38] sm:$0xf] %v692
  %709 = vst [vmem:[%s3 + $0x3c] sm:$0xf] %v693
  // Predicated region
  $region14: #{segmentation_network_full.4} parent=0 // pred_check
    _
  $region15: #{segmentation_network_full.4} parent=0 // pred_check_branch
    %711 = sbr.rel (0) target = $region17
  $region16: #{segmentation_network_full.4} parent=0 // pred_region
    _
  $region17: #{segmentation_network_full.4} parent=0 // pred_fallthru
    _
  // Predicated region
  $region18: #{segmentation_network_full.4} parent=0 // pred_check
    _
  $region19: #{segmentation_network_full.4} parent=0 // pred_check_branch
    %713 = sbr.rel (0) target = $region21
  $region20: #{segmentation_network_full.4} parent=0 // pred_region
    _
  $region21: #{segmentation_network_full.4} parent=0 // pred_fallthru
    _

// kernel: segmentation_network_full.5
$region0: #{segmentation_network_full.5}
  #allocation0 [shape = 'u32[]', space=smem, size = 0x4, offset = 0x4, fixed_abs, tag = 'smem constant byte address 0x4 - core index']
  #allocation1 [shape = 'u32[72,128]{1,0:T(1,128)}', space=vmem, size = 0x9000, scoped, tag = 'internal scratch']
  %s0 = inlined_call_operand.vmem [shape: bf16[16,1024], index: 0, kind: input, shape index: {}]
  %s1 = inlined_call_operand.vmem [shape: bf16[1024,256], index: 1, kind: input, shape index: {}]
  %s2 = inlined_call_operand.vmem [shape: f32[1,256], index: 2, kind: input, shape index: {}]
  %s3 = inlined_call_operand.vmem [shape: bf16[256,256], index: 3, kind: input, shape index: {}]
  %s4 = inlined_call_operand.vmem [shape: f32[1,256], index: 4, kind: input, shape index: {}]
  %s5 = inlined_call_operand.vmem [shape: bf16[256,256], index: 5, kind: input, shape index: {}]
  %s6 = inlined_call_operand.vmem [shape: f32[1,256], index: 6, kind: input, shape index: {}]
  %s7 = inlined_call_operand.vmem [shape: bf16[256,128], index: 7, kind: input, shape index: {}]
  %s8 = inlined_call_operand.vmem [shape: f32[1,128], index: 8, kind: input, shape index: {}]
  %s9 = inlined_call_operand.vmem [shape: f32[16,128], index: 9, kind: output, shape index: {}]
  %s10 = sld [smem:[#allocation0]]
  $region46: #{segmentation_network_full.5} parent=0
    _
  %s12 = ssub.s32 1, %s10
  %s13 = scalar_select 0, %s12, %s10
  // Predicated region
  $region2: #{segmentation_network_full.5} parent=0 // pred_check
    _
  $region3: #{segmentation_network_full.5} parent=0 // pred_check_branch
    %15 = sbr.rel (0) target = $region5
  $region4: #{segmentation_network_full.5} parent=0 // pred_region
    _
  $region5: #{segmentation_network_full.5} parent=0 // pred_fallthru
    _
  // Predicated region
  $region6: #{segmentation_network_full.5} parent=0 // pred_check
    _
  $region7: #{segmentation_network_full.5} parent=0 // pred_check_branch
    %17 = sbr.rel (0) target = $region9
  $region8: #{segmentation_network_full.5} parent=0 // pred_region
    _
  $region9: #{segmentation_network_full.5} parent=0 // pred_fallthru
    _
  // Predicated region
  $region10: #{segmentation_network_full.5} parent=0 // pred_check
    _
  $region11: #{segmentation_network_full.5} parent=0 // pred_check_branch
    %19 = sbr.rel (0) target = $region13
  $region12: #{segmentation_network_full.5} parent=0 // pred_region
    _
  $region13: #{segmentation_network_full.5} parent=0 // pred_fallthru
    _
  // Predicated region
  $region14: #{segmentation_network_full.5} parent=0 // pred_check
    _
  $region15: #{segmentation_network_full.5} parent=0 // pred_check_branch
    %21 = sbr.rel (0) target = $region17
  $region16: #{segmentation_network_full.5} parent=0 // pred_region
    _
  $region17: #{segmentation_network_full.5} parent=0 // pred_fallthru
    _
  // Predicated region
  $region18: #{segmentation_network_full.5} parent=0 // pred_check
    _
  $region19: #{segmentation_network_full.5} parent=0 // pred_check_branch
    %23 = sbr.rel (0) target = $region21
  $region20: #{segmentation_network_full.5} parent=0 // pred_region
    _
  $region21: #{segmentation_network_full.5} parent=0 // pred_fallthru
    _
  // Predicated region
  $region22: #{segmentation_network_full.5} parent=0 // pred_check
    _
  $region23: #{segmentation_network_full.5} parent=0 // pred_check_branch
    %25 = sbr.rel (0) target = $region25
  $region24: #{segmentation_network_full.5} parent=0 // pred_region
    _
  $region25: #{segmentation_network_full.5} parent=0 // pred_fallthru
    _
  // Predicated region
  $region26: #{segmentation_network_full.5} parent=0 // pred_check
    _
  $region27: #{segmentation_network_full.5} parent=0 // pred_check_branch
    %27 = sbr.rel (0) target = $region29
  $region28: #{segmentation_network_full.5} parent=0 // pred_region
    _
  $region29: #{segmentation_network_full.5} parent=0 // pred_fallthru
    _
  // Predicated region
  $region30: #{segmentation_network_full.5} parent=0 // pred_check
    _
  $region31: #{segmentation_network_full.5} parent=0 // pred_check_branch
    %29 = sbr.rel (0) target = $region33
  $region32: #{segmentation_network_full.5} parent=0 // pred_region
    _
  $region33: #{segmentation_network_full.5} parent=0 // pred_fallthru
    _
  // Predicated region
  $region34: #{segmentation_network_full.5} parent=0 // pred_check
    _
  $region35: #{segmentation_network_full.5} parent=0 // pred_check_branch
    %31 = sbr.rel (0) target = $region37
  $region36: #{segmentation_network_full.5} parent=0 // pred_region
    _
  $region37: #{segmentation_network_full.5} parent=0 // pred_fallthru
    _
  %v32 = vld [vmem:[%s0] sm:$0xff]
  %v33 = vld [vmem:[%s0 + $0x8] sm:$0xff]
  %v34 = vld [vmem:[%s0 + $0x10] sm:$0xff]
  %v35 = vld [vmem:[%s0 + $0x18] sm:$0xff]
  %v36 = vld [vmem:[%s0 + $0x20] sm:$0xff]
  %v37 = vld [vmem:[%s0 + $0x28] sm:$0xff]
  %v38 = vld [vmem:[%s0 + $0x30] sm:$0xff]
  %v39 = vld [vmem:[%s0 + $0x38] sm:$0xff]
  %v40 = vld [vmem:[%s1] sm:$0xff]
  %v41 = vld [vmem:[%s1 + $0x8] sm:$0xff]
  %v42 = vld [vmem:[%s1 + $0x10] sm:$0xff]
  %v43 = vld [vmem:[%s1 + $0x18] sm:$0xff]
  %v44 = vld [vmem:[%s1 + $0x20] sm:$0xff]
  %v45 = vld [vmem:[%s1 + $0x28] sm:$0xff]
  %v46 = vld [vmem:[%s1 + $0x30] sm:$0xff]
  %v47 = vld [vmem:[%s1 + $0x38] sm:$0xff]
  %v48 = vld [vmem:[%s1 + $0x40] sm:$0xff]
  %v49 = vld [vmem:[%s1 + $0x48] sm:$0xff]
  %v50 = vld [vmem:[%s1 + $0x50] sm:$0xff]
  %v51 = vld [vmem:[%s1 + $0x58] sm:$0xff]
  %v52 = vld [vmem:[%s1 + $0x60] sm:$0xff]
  %v53 = vld [vmem:[%s1 + $0x68] sm:$0xff]
  %v54 = vld [vmem:[%s1 + $0x70] sm:$0xff]
  %v55 = vld [vmem:[%s1 + $0x78] sm:$0xff]
  %v56 = vld [vmem:[%s1 + $0x80] sm:$0xff]
  %v57 = vld [vmem:[%s1 + $0x88] sm:$0xff]
  %v58 = vld [vmem:[%s1 + $0x90] sm:$0xff]
  %v59 = vld [vmem:[%s1 + $0x98] sm:$0xff]
  %v60 = vld [vmem:[%s1 + $0xa0] sm:$0xff]
  %v61 = vld [vmem:[%s1 + $0xa8] sm:$0xff]
  %v62 = vld [vmem:[%s1 + $0xb0] sm:$0xff]
  %v63 = vld [vmem:[%s1 + $0xb8] sm:$0xff]
  %v64 = vld [vmem:[%s1 + $0xc0] sm:$0xff]
  %v65 = vld [vmem:[%s1 + $0xc8] sm:$0xff]
  %v66 = vld [vmem:[%s1 + $0xd0] sm:$0xff]
  %v67 = vld [vmem:[%s1 + $0xd8] sm:$0xff]
  %v68 = vld [vmem:[%s1 + $0xe0] sm:$0xff]
  %v69 = vld [vmem:[%s1 + $0xe8] sm:$0xff]
  %v70 = vld [vmem:[%s1 + $0xf0] sm:$0xff]
  %v71 = vld [vmem:[%s1 + $0xf8] sm:$0xff]
  %v72 = vld [vmem:[%s1 + $0x100] sm:$0xff]
  %v73 = vld [vmem:[%s1 + $0x108] sm:$0xff]
  %v74 = vld [vmem:[%s1 + $0x110] sm:$0xff]
  %v75 = vld [vmem:[%s1 + $0x118] sm:$0xff]
  %v76 = vld [vmem:[%s1 + $0x120] sm:$0xff]
  %v77 = vld [vmem:[%s1 + $0x128] sm:$0xff]
  %v78 = vld [vmem:[%s1 + $0x130] sm:$0xff]
  %v79 = vld [vmem:[%s1 + $0x138] sm:$0xff]
  %v80 = vld [vmem:[%s1 + $0x140] sm:$0xff]
  %v81 = vld [vmem:[%s1 + $0x148] sm:$0xff]
  %v82 = vld [vmem:[%s1 + $0x150] sm:$0xff]
  %v83 = vld [vmem:[%s1 + $0x158] sm:$0xff]
  %v84 = vld [vmem:[%s1 + $0x160] sm:$0xff]
  %v85 = vld [vmem:[%s1 + $0x168] sm:$0xff]
  %v86 = vld [vmem:[%s1 + $0x170] sm:$0xff]
  %v87 = vld [vmem:[%s1 + $0x178] sm:$0xff]
  %v88 = vld [vmem:[%s1 + $0x180] sm:$0xff]
  %v89 = vld [vmem:[%s1 + $0x188] sm:$0xff]
  %v90 = vld [vmem:[%s1 + $0x190] sm:$0xff]
  %v91 = vld [vmem:[%s1 + $0x198] sm:$0xff]
  %v92 = vld [vmem:[%s1 + $0x1a0] sm:$0xff]
  %v93 = vld [vmem:[%s1 + $0x1a8] sm:$0xff]
  %v94 = vld [vmem:[%s1 + $0x1b0] sm:$0xff]
  %v95 = vld [vmem:[%s1 + $0x1b8] sm:$0xff]
  %v96 = vld [vmem:[%s1 + $0x1c0] sm:$0xff]
  %v97 = vld [vmem:[%s1 + $0x1c8] sm:$0xff]
  %v98 = vld [vmem:[%s1 + $0x1d0] sm:$0xff]
  %v99 = vld [vmem:[%s1 + $0x1d8] sm:$0xff]
  %v100 = vld [vmem:[%s1 + $0x1e0] sm:$0xff]
  %v101 = vld [vmem:[%s1 + $0x1e8] sm:$0xff]
  %v102 = vld [vmem:[%s1 + $0x1f0] sm:$0xff]
  %v103 = vld [vmem:[%s1 + $0x1f8] sm:$0xff]
  %v104 = vld [vmem:[%s1 + $0x200] sm:$0xff]
  %v105 = vld [vmem:[%s1 + $0x208] sm:$0xff]
  %v106 = vld [vmem:[%s1 + $0x210] sm:$0xff]
  %v107 = vld [vmem:[%s1 + $0x218] sm:$0xff]
  %v108 = vld [vmem:[%s1 + $0x220] sm:$0xff]
  %v109 = vld [vmem:[%s1 + $0x228] sm:$0xff]
  %v110 = vld [vmem:[%s1 + $0x230] sm:$0xff]
  %v111 = vld [vmem:[%s1 + $0x238] sm:$0xff]
  %v112 = vld [vmem:[%s1 + $0x240] sm:$0xff]
  %v113 = vld [vmem:[%s1 + $0x248] sm:$0xff]
  %v114 = vld [vmem:[%s1 + $0x250] sm:$0xff]
  %v115 = vld [vmem:[%s1 + $0x258] sm:$0xff]
  %v116 = vld [vmem:[%s1 + $0x260] sm:$0xff]
  %v117 = vld [vmem:[%s1 + $0x268] sm:$0xff]
  %v118 = vld [vmem:[%s1 + $0x270] sm:$0xff]
  %v119 = vld [vmem:[%s1 + $0x278] sm:$0xff]
  %v120 = vld [vmem:[%s1 + $0x280] sm:$0xff]
  %v121 = vld [vmem:[%s1 + $0x288] sm:$0xff]
  %v122 = vld [vmem:[%s1 + $0x290] sm:$0xff]
  %v123 = vld [vmem:[%s1 + $0x298] sm:$0xff]
  %v124 = vld [vmem:[%s1 + $0x2a0] sm:$0xff]
  %v125 = vld [vmem:[%s1 + $0x2a8] sm:$0xff]
  %v126 = vld [vmem:[%s1 + $0x2b0] sm:$0xff]
  %v127 = vld [vmem:[%s1 + $0x2b8] sm:$0xff]
  %v128 = vld [vmem:[%s1 + $0x2c0] sm:$0xff]
  %v129 = vld [vmem:[%s1 + $0x2c8] sm:$0xff]
  %v130 = vld [vmem:[%s1 + $0x2d0] sm:$0xff]
  %v131 = vld [vmem:[%s1 + $0x2d8] sm:$0xff]
  %v132 = vld [vmem:[%s1 + $0x2e0] sm:$0xff]
  %v133 = vld [vmem:[%s1 + $0x2e8] sm:$0xff]
  %v134 = vld [vmem:[%s1 + $0x2f0] sm:$0xff]
  %v135 = vld [vmem:[%s1 + $0x2f8] sm:$0xff]
  %v136 = vld [vmem:[%s1 + $0x300] sm:$0xff]
  %v137 = vld [vmem:[%s1 + $0x308] sm:$0xff]
  %v138 = vld [vmem:[%s1 + $0x310] sm:$0xff]
  %v139 = vld [vmem:[%s1 + $0x318] sm:$0xff]
  %v140 = vld [vmem:[%s1 + $0x320] sm:$0xff]
  %v141 = vld [vmem:[%s1 + $0x328] sm:$0xff]
  %v142 = vld [vmem:[%s1 + $0x330] sm:$0xff]
  %v143 = vld [vmem:[%s1 + $0x338] sm:$0xff]
  %v144 = vld [vmem:[%s1 + $0x340] sm:$0xff]
  %v145 = vld [vmem:[%s1 + $0x348] sm:$0xff]
  %v146 = vld [vmem:[%s1 + $0x350] sm:$0xff]
  %v147 = vld [vmem:[%s1 + $0x358] sm:$0xff]
  %v148 = vld [vmem:[%s1 + $0x360] sm:$0xff]
  %v149 = vld [vmem:[%s1 + $0x368] sm:$0xff]
  %v150 = vld [vmem:[%s1 + $0x370] sm:$0xff]
  %v151 = vld [vmem:[%s1 + $0x378] sm:$0xff]
  %v152 = vld [vmem:[%s1 + $0x380] sm:$0xff]
  %v153 = vld [vmem:[%s1 + $0x388] sm:$0xff]
  %v154 = vld [vmem:[%s1 + $0x390] sm:$0xff]
  %v155 = vld [vmem:[%s1 + $0x398] sm:$0xff]
  %v156 = vld [vmem:[%s1 + $0x3a0] sm:$0xff]
  %v157 = vld [vmem:[%s1 + $0x3a8] sm:$0xff]
  %v158 = vld [vmem:[%s1 + $0x3b0] sm:$0xff]
  %v159 = vld [vmem:[%s1 + $0x3b8] sm:$0xff]
  %v160 = vld [vmem:[%s1 + $0x3c0] sm:$0xff]
  %v161 = vld [vmem:[%s1 + $0x3c8] sm:$0xff]
  %v162 = vld [vmem:[%s1 + $0x3d0] sm:$0xff]
  %v163 = vld [vmem:[%s1 + $0x3d8] sm:$0xff]
  %v164 = vld [vmem:[%s1 + $0x3e0] sm:$0xff]
  %v165 = vld [vmem:[%s1 + $0x3e8] sm:$0xff]
  %v166 = vld [vmem:[%s1 + $0x3f0] sm:$0xff]
  %v167 = vld [vmem:[%s1 + $0x3f8] sm:$0xff]
  %v168 = vld [vmem:[%s2] sm:$0x3]
  %v170 = vperm.slane %v168, 0
  %v171 = vperm.slane %v168, 1
  %v182 = vunpack.c.l.b16 %v32
  %v183 = vunpack.c.h.b16 %v32
  %v184 = vunpack.c.l.b16 %v33
  %v185 = vunpack.c.h.b16 %v33
  %v186 = vunpack.c.l.b16 %v34
  %v187 = vunpack.c.h.b16 %v34
  %v188 = vunpack.c.l.b16 %v35
  %v189 = vunpack.c.h.b16 %v35
  %v190 = vunpack.c.l.b16 %v36
  %v191 = vunpack.c.h.b16 %v36
  %v192 = vunpack.c.l.b16 %v37
  %v193 = vunpack.c.h.b16 %v37
  %v194 = vunpack.c.l.b16 %v38
  %v195 = vunpack.c.h.b16 %v38
  %v196 = vunpack.c.l.b16 %v39
  %v197 = vunpack.c.h.b16 %v39
  %v198 = vpack.c.b16 %v190, %v182
  %v199 = vpack.c.b16 %v191, %v183
  %v200 = vpack.c.b16 %v192, %v184
  %v201 = vpack.c.b16 %v193, %v185
  %v202 = vpack.c.b16 %v194, %v186
  %v203 = vpack.c.b16 %v195, %v187
  %v204 = vpack.c.b16 %v196, %v188
  %v205 = vpack.c.b16 %v197, %v189
  %v342 = vunpack.c.l.b16 %v40
  %v343 = vunpack.c.h.b16 %v40
  %v344 = vunpack.c.l.b16 %v41
  %v345 = vunpack.c.h.b16 %v41
  %v346 = vunpack.c.l.b16 %v42
  %v347 = vunpack.c.h.b16 %v42
  %v348 = vunpack.c.l.b16 %v43
  %v349 = vunpack.c.h.b16 %v43
  %v350 = vunpack.c.l.b16 %v44
  %v351 = vunpack.c.h.b16 %v44
  %v352 = vunpack.c.l.b16 %v45
  %v353 = vunpack.c.h.b16 %v45
  %v354 = vunpack.c.l.b16 %v46
  %v355 = vunpack.c.h.b16 %v46
  %v356 = vunpack.c.l.b16 %v47
  %v357 = vunpack.c.h.b16 %v47
  %v358 = vunpack.c.l.b16 %v48
  %v359 = vunpack.c.h.b16 %v48
  %v360 = vunpack.c.l.b16 %v49
  %v361 = vunpack.c.h.b16 %v49
  %v362 = vunpack.c.l.b16 %v50
  %v363 = vunpack.c.h.b16 %v50
  %v364 = vunpack.c.l.b16 %v51
  %v365 = vunpack.c.h.b16 %v51
  %v366 = vunpack.c.l.b16 %v52
  %v367 = vunpack.c.h.b16 %v52
  %v368 = vunpack.c.l.b16 %v53
  %v369 = vunpack.c.h.b16 %v53
  %v370 = vunpack.c.l.b16 %v54
  %v371 = vunpack.c.h.b16 %v54
  %v372 = vunpack.c.l.b16 %v55
  %v373 = vunpack.c.h.b16 %v55
  %v374 = vunpack.c.l.b16 %v56
  %v375 = vunpack.c.h.b16 %v56
  %v376 = vunpack.c.l.b16 %v57
  %v377 = vunpack.c.h.b16 %v57
  %v378 = vunpack.c.l.b16 %v58
  %v379 = vunpack.c.h.b16 %v58
  %v380 = vunpack.c.l.b16 %v59
  %v381 = vunpack.c.h.b16 %v59
  %v382 = vunpack.c.l.b16 %v60
  %v383 = vunpack.c.h.b16 %v60
  %v384 = vunpack.c.l.b16 %v61
  %v385 = vunpack.c.h.b16 %v61
  %v386 = vunpack.c.l.b16 %v62
  %v387 = vunpack.c.h.b16 %v62
  %v388 = vunpack.c.l.b16 %v63
  %v389 = vunpack.c.h.b16 %v63
  %v390 = vunpack.c.l.b16 %v64
  %v391 = vunpack.c.h.b16 %v64
  %v392 = vunpack.c.l.b16 %v65
  %v393 = vunpack.c.h.b16 %v65
  %v394 = vunpack.c.l.b16 %v66
  %v395 = vunpack.c.h.b16 %v66
  %v396 = vunpack.c.l.b16 %v67
  %v397 = vunpack.c.h.b16 %v67
  %v398 = vunpack.c.l.b16 %v68
  %v399 = vunpack.c.h.b16 %v68
  %v400 = vunpack.c.l.b16 %v69
  %v401 = vunpack.c.h.b16 %v69
  %v402 = vunpack.c.l.b16 %v70
  %v403 = vunpack.c.h.b16 %v70
  %v404 = vunpack.c.l.b16 %v71
  %v405 = vunpack.c.h.b16 %v71
  %v406 = vunpack.c.l.b16 %v72
  %v407 = vunpack.c.h.b16 %v72
  %v408 = vunpack.c.l.b16 %v73
  %v409 = vunpack.c.h.b16 %v73
  %v410 = vunpack.c.l.b16 %v74
  %v411 = vunpack.c.h.b16 %v74
  %v412 = vunpack.c.l.b16 %v75
  %v413 = vunpack.c.h.b16 %v75
  %v414 = vunpack.c.l.b16 %v76
  %v415 = vunpack.c.h.b16 %v76
  %v416 = vunpack.c.l.b16 %v77
  %v417 = vunpack.c.h.b16 %v77
  %v418 = vunpack.c.l.b16 %v78
  %v419 = vunpack.c.h.b16 %v78
  %v420 = vunpack.c.l.b16 %v79
  %v421 = vunpack.c.h.b16 %v79
  %v422 = vunpack.c.l.b16 %v80
  %v423 = vunpack.c.h.b16 %v80
  %v424 = vunpack.c.l.b16 %v81
  %v425 = vunpack.c.h.b16 %v81
  %v426 = vunpack.c.l.b16 %v82
  %v427 = vunpack.c.h.b16 %v82
  %v428 = vunpack.c.l.b16 %v83
  %v429 = vunpack.c.h.b16 %v83
  %v430 = vunpack.c.l.b16 %v84
  %v431 = vunpack.c.h.b16 %v84
  %v432 = vunpack.c.l.b16 %v85
  %v433 = vunpack.c.h.b16 %v85
  %v434 = vunpack.c.l.b16 %v86
  %v435 = vunpack.c.h.b16 %v86
  %v436 = vunpack.c.l.b16 %v87
  %v437 = vunpack.c.h.b16 %v87
  %v438 = vunpack.c.l.b16 %v88
  %v439 = vunpack.c.h.b16 %v88
  %v440 = vunpack.c.l.b16 %v89
  %v441 = vunpack.c.h.b16 %v89
  %v442 = vunpack.c.l.b16 %v90
  %v443 = vunpack.c.h.b16 %v90
  %v444 = vunpack.c.l.b16 %v91
  %v445 = vunpack.c.h.b16 %v91
  %v446 = vunpack.c.l.b16 %v92
  %v447 = vunpack.c.h.b16 %v92
  %v448 = vunpack.c.l.b16 %v93
  %v449 = vunpack.c.h.b16 %v93
  %v450 = vunpack.c.l.b16 %v94
  %v451 = vunpack.c.h.b16 %v94
  %v452 = vunpack.c.l.b16 %v95
  %v453 = vunpack.c.h.b16 %v95
  %v454 = vunpack.c.l.b16 %v96
  %v455 = vunpack.c.h.b16 %v96
  %v456 = vunpack.c.l.b16 %v97
  %v457 = vunpack.c.h.b16 %v97
  %v458 = vunpack.c.l.b16 %v98
  %v459 = vunpack.c.h.b16 %v98
  %v460 = vunpack.c.l.b16 %v99
  %v461 = vunpack.c.h.b16 %v99
  %v462 = vunpack.c.l.b16 %v100
  %v463 = vunpack.c.h.b16 %v100
  %v464 = vunpack.c.l.b16 %v101
  %v465 = vunpack.c.h.b16 %v101
  %v466 = vunpack.c.l.b16 %v102
  %v467 = vunpack.c.h.b16 %v102
  %v468 = vunpack.c.l.b16 %v103
  %v469 = vunpack.c.h.b16 %v103
  %v470 = vunpack.c.l.b16 %v104
  %v471 = vunpack.c.h.b16 %v104
  %v472 = vunpack.c.l.b16 %v105
  %v473 = vunpack.c.h.b16 %v105
  %v474 = vunpack.c.l.b16 %v106
  %v475 = vunpack.c.h.b16 %v106
  %v476 = vunpack.c.l.b16 %v107
  %v477 = vunpack.c.h.b16 %v107
  %v478 = vunpack.c.l.b16 %v108
  %v479 = vunpack.c.h.b16 %v108
  %v480 = vunpack.c.l.b16 %v109
  %v481 = vunpack.c.h.b16 %v109
  %v482 = vunpack.c.l.b16 %v110
  %v483 = vunpack.c.h.b16 %v110
  %v484 = vunpack.c.l.b16 %v111
  %v485 = vunpack.c.h.b16 %v111
  %v486 = vunpack.c.l.b16 %v112
  %v487 = vunpack.c.h.b16 %v112
  %v488 = vunpack.c.l.b16 %v113
  %v489 = vunpack.c.h.b16 %v113
  %v490 = vunpack.c.l.b16 %v114
  %v491 = vunpack.c.h.b16 %v114
  %v492 = vunpack.c.l.b16 %v115
  %v493 = vunpack.c.h.b16 %v115
  %v494 = vunpack.c.l.b16 %v116
  %v495 = vunpack.c.h.b16 %v116
  %v496 = vunpack.c.l.b16 %v117
  %v497 = vunpack.c.h.b16 %v117
  %v498 = vunpack.c.l.b16 %v118
  %v499 = vunpack.c.h.b16 %v118
  %v500 = vunpack.c.l.b16 %v119
  %v501 = vunpack.c.h.b16 %v119
  %v502 = vunpack.c.l.b16 %v120
  %v503 = vunpack.c.h.b16 %v120
  %v504 = vunpack.c.l.b16 %v121
  %v505 = vunpack.c.h.b16 %v121
  %v506 = vunpack.c.l.b16 %v122
  %v507 = vunpack.c.h.b16 %v122
  %v508 = vunpack.c.l.b16 %v123
  %v509 = vunpack.c.h.b16 %v123
  %v510 = vunpack.c.l.b16 %v124
  %v511 = vunpack.c.h.b16 %v124
  %v512 = vunpack.c.l.b16 %v125
  %v513 = vunpack.c.h.b16 %v125
  %v514 = vunpack.c.l.b16 %v126
  %v515 = vunpack.c.h.b16 %v126
  %v516 = vunpack.c.l.b16 %v127
  %v517 = vunpack.c.h.b16 %v127
  %v518 = vunpack.c.l.b16 %v128
  %v519 = vunpack.c.h.b16 %v128
  %v520 = vunpack.c.l.b16 %v129
  %v521 = vunpack.c.h.b16 %v129
  %v522 = vunpack.c.l.b16 %v130
  %v523 = vunpack.c.h.b16 %v130
  %v524 = vunpack.c.l.b16 %v131
  %v525 = vunpack.c.h.b16 %v131
  %v526 = vunpack.c.l.b16 %v132
  %v527 = vunpack.c.h.b16 %v132
  %v528 = vunpack.c.l.b16 %v133
  %v529 = vunpack.c.h.b16 %v133
  %v530 = vunpack.c.l.b16 %v134
  %v531 = vunpack.c.h.b16 %v134
  %v532 = vunpack.c.l.b16 %v135
  %v533 = vunpack.c.h.b16 %v135
  %v534 = vunpack.c.l.b16 %v136
  %v535 = vunpack.c.h.b16 %v136
  %v536 = vunpack.c.l.b16 %v137
  %v537 = vunpack.c.h.b16 %v137
  %v538 = vunpack.c.l.b16 %v138
  %v539 = vunpack.c.h.b16 %v138
  %v540 = vunpack.c.l.b16 %v139
  %v541 = vunpack.c.h.b16 %v139
  %v542 = vunpack.c.l.b16 %v140
  %v543 = vunpack.c.h.b16 %v140
  %v544 = vunpack.c.l.b16 %v141
  %v545 = vunpack.c.h.b16 %v141
  %v546 = vunpack.c.l.b16 %v142
  %v547 = vunpack.c.h.b16 %v142
  %v548 = vunpack.c.l.b16 %v143
  %v549 = vunpack.c.h.b16 %v143
  %v550 = vunpack.c.l.b16 %v144
  %v551 = vunpack.c.h.b16 %v144
  %v552 = vunpack.c.l.b16 %v145
  %v553 = vunpack.c.h.b16 %v145
  %v554 = vunpack.c.l.b16 %v146
  %v555 = vunpack.c.h.b16 %v146
  %v556 = vunpack.c.l.b16 %v147
  %v557 = vunpack.c.h.b16 %v147
  %v558 = vunpack.c.l.b16 %v148
  %v559 = vunpack.c.h.b16 %v148
  %v560 = vunpack.c.l.b16 %v149
  %v561 = vunpack.c.h.b16 %v149
  %v562 = vunpack.c.l.b16 %v150
  %v563 = vunpack.c.h.b16 %v150
  %v564 = vunpack.c.l.b16 %v151
  %v565 = vunpack.c.h.b16 %v151
  %v566 = vunpack.c.l.b16 %v152
  %v567 = vunpack.c.h.b16 %v152
  %v568 = vunpack.c.l.b16 %v153
  %v569 = vunpack.c.h.b16 %v153
  %v570 = vunpack.c.l.b16 %v154
  %v571 = vunpack.c.h.b16 %v154
  %v572 = vunpack.c.l.b16 %v155
  %v573 = vunpack.c.h.b16 %v155
  %v574 = vunpack.c.l.b16 %v156
  %v575 = vunpack.c.h.b16 %v156
  %v576 = vunpack.c.l.b16 %v157
  %v577 = vunpack.c.h.b16 %v157
  %v578 = vunpack.c.l.b16 %v158
  %v579 = vunpack.c.h.b16 %v158
  %v580 = vunpack.c.l.b16 %v159
  %v581 = vunpack.c.h.b16 %v159
  %v582 = vunpack.c.l.b16 %v160
  %v583 = vunpack.c.h.b16 %v160
  %v584 = vunpack.c.l.b16 %v161
  %v585 = vunpack.c.h.b16 %v161
  %v586 = vunpack.c.l.b16 %v162
  %v587 = vunpack.c.h.b16 %v162
  %v588 = vunpack.c.l.b16 %v163
  %v589 = vunpack.c.h.b16 %v163
  %v590 = vunpack.c.l.b16 %v164
  %v591 = vunpack.c.h.b16 %v164
  %v592 = vunpack.c.l.b16 %v165
  %v593 = vunpack.c.h.b16 %v165
  %v594 = vunpack.c.l.b16 %v166
  %v595 = vunpack.c.h.b16 %v166
  %v596 = vunpack.c.l.b16 %v167
  %v597 = vunpack.c.h.b16 %v167
  %v598 = vpack.c.b16 %v344, %v342
  %v599 = vpack.c.b16 %v345, %v343
  %v600 = vpack.c.b16 %v348, %v346
  %v601 = vpack.c.b16 %v349, %v347
  %v602 = vpack.c.b16 %v352, %v350
  %v603 = vpack.c.b16 %v353, %v351
  %v604 = vpack.c.b16 %v356, %v354
  %v605 = vpack.c.b16 %v357, %v355
  %v606 = vpack.c.b16 %v360, %v358
  %v607 = vpack.c.b16 %v361, %v359
  %v608 = vpack.c.b16 %v364, %v362
  %v609 = vpack.c.b16 %v365, %v363
  %v610 = vpack.c.b16 %v368, %v366
  %v611 = vpack.c.b16 %v369, %v367
  %v612 = vpack.c.b16 %v372, %v370
  %v613 = vpack.c.b16 %v373, %v371
  %v614 = vpack.c.b16 %v376, %v374
  %v615 = vpack.c.b16 %v377, %v375
  %v616 = vpack.c.b16 %v380, %v378
  %v617 = vpack.c.b16 %v381, %v379
  %v618 = vpack.c.b16 %v384, %v382
  %v619 = vpack.c.b16 %v385, %v383
  %v620 = vpack.c.b16 %v388, %v386
  %v621 = vpack.c.b16 %v389, %v387
  %v622 = vpack.c.b16 %v392, %v390
  %v623 = vpack.c.b16 %v393, %v391
  %v624 = vpack.c.b16 %v396, %v394
  %v625 = vpack.c.b16 %v397, %v395
  %v626 = vpack.c.b16 %v400, %v398
  %v627 = vpack.c.b16 %v401, %v399
  %v628 = vpack.c.b16 %v404, %v402
  %v629 = vpack.c.b16 %v405, %v403
  %v630 = vpack.c.b16 %v408, %v406
  %v631 = vpack.c.b16 %v409, %v407
  %v632 = vpack.c.b16 %v412, %v410
  %v633 = vpack.c.b16 %v413, %v411
  %v634 = vpack.c.b16 %v416, %v414
  %v635 = vpack.c.b16 %v417, %v415
  %v636 = vpack.c.b16 %v420, %v418
  %v637 = vpack.c.b16 %v421, %v419
  %v638 = vpack.c.b16 %v424, %v422
  %v639 = vpack.c.b16 %v425, %v423
  %v640 = vpack.c.b16 %v428, %v426
  %v641 = vpack.c.b16 %v429, %v427
  %v642 = vpack.c.b16 %v432, %v430
  %v643 = vpack.c.b16 %v433, %v431
  %v644 = vpack.c.b16 %v436, %v434
  %v645 = vpack.c.b16 %v437, %v435
  %v646 = vpack.c.b16 %v440, %v438
  %v647 = vpack.c.b16 %v441, %v439
  %v648 = vpack.c.b16 %v444, %v442
  %v649 = vpack.c.b16 %v445, %v443
  %v650 = vpack.c.b16 %v448, %v446
  %v651 = vpack.c.b16 %v449, %v447
  %v652 = vpack.c.b16 %v452, %v450
  %v653 = vpack.c.b16 %v453, %v451
  %v654 = vpack.c.b16 %v456, %v454
  %v655 = vpack.c.b16 %v457, %v455
  %v656 = vpack.c.b16 %v460, %v458
  %v657 = vpack.c.b16 %v461, %v459
  %v658 = vpack.c.b16 %v464, %v462
  %v659 = vpack.c.b16 %v465, %v463
  %v660 = vpack.c.b16 %v468, %v466
  %v661 = vpack.c.b16 %v469, %v467
  %v662 = vpack.c.b16 %v472, %v470
  %v663 = vpack.c.b16 %v473, %v471
  %v664 = vpack.c.b16 %v476, %v474
  %v665 = vpack.c.b16 %v477, %v475
  %v666 = vpack.c.b16 %v480, %v478
  %v667 = vpack.c.b16 %v481, %v479
  %v668 = vpack.c.b16 %v484, %v482
  %v669 = vpack.c.b16 %v485, %v483
  %v670 = vpack.c.b16 %v488, %v486
  %v671 = vpack.c.b16 %v489, %v487
  %v672 = vpack.c.b16 %v492, %v490
  %v673 = vpack.c.b16 %v493, %v491
  %v674 = vpack.c.b16 %v496, %v494
  %v675 = vpack.c.b16 %v497, %v495
  %v676 = vpack.c.b16 %v500, %v498
  %v677 = vpack.c.b16 %v501, %v499
  %v678 = vpack.c.b16 %v504, %v502
  %v679 = vpack.c.b16 %v505, %v503
  %v680 = vpack.c.b16 %v508, %v506
  %v681 = vpack.c.b16 %v509, %v507
  %v682 = vpack.c.b16 %v512, %v510
  %v683 = vpack.c.b16 %v513, %v511
  %v684 = vpack.c.b16 %v516, %v514
  %v685 = vpack.c.b16 %v517, %v515
  %v686 = vpack.c.b16 %v520, %v518
  %v687 = vpack.c.b16 %v521, %v519
  %v688 = vpack.c.b16 %v524, %v522
  %v689 = vpack.c.b16 %v525, %v523
  %v690 = vpack.c.b16 %v528, %v526
  %v691 = vpack.c.b16 %v529, %v527
  %v692 = vpack.c.b16 %v532, %v530
  %v693 = vpack.c.b16 %v533, %v531
  %v694 = vpack.c.b16 %v536, %v534
  %v695 = vpack.c.b16 %v537, %v535
  %v696 = vpack.c.b16 %v540, %v538
  %v697 = vpack.c.b16 %v541, %v539
  %v698 = vpack.c.b16 %v544, %v542
  %v699 = vpack.c.b16 %v545, %v543
  %v700 = vpack.c.b16 %v548, %v546
  %v701 = vpack.c.b16 %v549, %v547
  %v702 = vpack.c.b16 %v552, %v550
  %v703 = vpack.c.b16 %v553, %v551
  %v704 = vpack.c.b16 %v556, %v554
  %v705 = vpack.c.b16 %v557, %v555
  %v706 = vpack.c.b16 %v560, %v558
  %v707 = vpack.c.b16 %v561, %v559
  %v708 = vpack.c.b16 %v564, %v562
  %v709 = vpack.c.b16 %v565, %v563
  %v710 = vpack.c.b16 %v568, %v566
  %v711 = vpack.c.b16 %v569, %v567
  %v712 = vpack.c.b16 %v572, %v570
  %v713 = vpack.c.b16 %v573, %v571
  %v714 = vpack.c.b16 %v576, %v574
  %v715 = vpack.c.b16 %v577, %v575
  %v716 = vpack.c.b16 %v580, %v578
  %v717 = vpack.c.b16 %v581, %v579
  %v718 = vpack.c.b16 %v584, %v582
  %v719 = vpack.c.b16 %v585, %v583
  %v720 = vpack.c.b16 %v588, %v586
  %v721 = vpack.c.b16 %v589, %v587
  %v722 = vpack.c.b16 %v592, %v590
  %v723 = vpack.c.b16 %v593, %v591
  %v724 = vpack.c.b16 %v596, %v594
  %v725 = vpack.c.b16 %v597, %v595
  %854 = vmatpush.bf16.msra.mxu0 %v612
  %855 = vmatpush.bf16.msra.mxu0 %v610
  %856 = vmatpush.bf16.msra.mxu0 %v608
  %857 = vmatpush.bf16.msra.mxu0 %v606
  %858 = vmatpush.bf16.msra.mxu0 %v604
  %859 = vmatpush.bf16.msra.mxu0 %v602
  %860 = vmatpush.bf16.msra.mxu0 %v600
  %861 = vmatpush.bf16.msra.mxu0 %v598
  %862 = vmatmul.bf16.gmra.mxu0 %v198
  %v863 = vpop.f32.mrf.mxu0
  %v864 = vadd.f32 %v170, %v863
  %v865 = vpop.f32.mrf.mxu0
  %v866 = vadd.f32 %v170, %v865
  %867 = vdwg.mxu0
  %868 = vmatpush.bf16.msra.mxu0 %v628
  %869 = vmatpush.bf16.msra.mxu0 %v626
  %870 = vmatpush.bf16.msra.mxu0 %v624
  %871 = vmatpush.bf16.msra.mxu0 %v622
  %872 = vmatpush.bf16.msra.mxu0 %v620
  %873 = vmatpush.bf16.msra.mxu0 %v618
  %874 = vmatpush.bf16.msra.mxu0 %v616
  %875 = vmatpush.bf16.msra.mxu0 %v614
  %876 = vmatmul.bf16.gmra.mxu0 %v199
  %v877 = vpop.f32.mrf.mxu0
  %v878 = vadd.f32 %v864, %v877
  %v879 = vpop.f32.mrf.mxu0
  %v880 = vadd.f32 %v866, %v879
  %881 = vdwg.mxu0
  %882 = vmatpush.bf16.msra.mxu0 %v644
  %883 = vmatpush.bf16.msra.mxu0 %v642
  %884 = vmatpush.bf16.msra.mxu0 %v640
  %885 = vmatpush.bf16.msra.mxu0 %v638
  %886 = vmatpush.bf16.msra.mxu0 %v636
  %887 = vmatpush.bf16.msra.mxu0 %v634
  %888 = vmatpush.bf16.msra.mxu0 %v632
  %889 = vmatpush.bf16.msra.mxu0 %v630
  %890 = vmatmul.bf16.gmra.mxu0 %v200
  %v891 = vpop.f32.mrf.mxu0
  %v892 = vadd.f32 %v878, %v891
  %v893 = vpop.f32.mrf.mxu0
  %v894 = vadd.f32 %v880, %v893
  %895 = vdwg.mxu0
  %896 = vmatpush.bf16.msra.mxu0 %v660
  %897 = vmatpush.bf16.msra.mxu0 %v658
  %898 = vmatpush.bf16.msra.mxu0 %v656
  %899 = vmatpush.bf16.msra.mxu0 %v654
  %900 = vmatpush.bf16.msra.mxu0 %v652
  %901 = vmatpush.bf16.msra.mxu0 %v650
  %902 = vmatpush.bf16.msra.mxu0 %v648
  %903 = vmatpush.bf16.msra.mxu0 %v646
  %904 = vmatmul.bf16.gmra.mxu0 %v201
  %v905 = vpop.f32.mrf.mxu0
  %v906 = vadd.f32 %v892, %v905
  %v907 = vpop.f32.mrf.mxu0
  %v908 = vadd.f32 %v894, %v907
  %909 = vdwg.mxu0
  %910 = vmatpush.bf16.msra.mxu0 %v676
  %911 = vmatpush.bf16.msra.mxu0 %v674
  %912 = vmatpush.bf16.msra.mxu0 %v672
  %913 = vmatpush.bf16.msra.mxu0 %v670
  %914 = vmatpush.bf16.msra.mxu0 %v668
  %915 = vmatpush.bf16.msra.mxu0 %v666
  %916 = vmatpush.bf16.msra.mxu0 %v664
  %917 = vmatpush.bf16.msra.mxu0 %v662
  %918 = vmatmul.bf16.gmra.mxu0 %v202
  %v919 = vpop.f32.mrf.mxu0
  %v920 = vadd.f32 %v906, %v919
  %v921 = vpop.f32.mrf.mxu0
  %v922 = vadd.f32 %v908, %v921
  %923 = vdwg.mxu0
  %924 = vmatpush.bf16.msra.mxu0 %v692
  %925 = vmatpush.bf16.msra.mxu0 %v690
  %926 = vmatpush.bf16.msra.mxu0 %v688
  %927 = vmatpush.bf16.msra.mxu0 %v686
  %928 = vmatpush.bf16.msra.mxu0 %v684
  %929 = vmatpush.bf16.msra.mxu0 %v682
  %930 = vmatpush.bf16.msra.mxu0 %v680
  %931 = vmatpush.bf16.msra.mxu0 %v678
  %932 = vmatmul.bf16.gmra.mxu0 %v203
  %v933 = vpop.f32.mrf.mxu0
  %v934 = vadd.f32 %v920, %v933
  %v935 = vpop.f32.mrf.mxu0
  %v936 = vadd.f32 %v922, %v935
  %937 = vdwg.mxu0
  %938 = vmatpush.bf16.msra.mxu0 %v708
  %939 = vmatpush.bf16.msra.mxu0 %v706
  %940 = vmatpush.bf16.msra.mxu0 %v704
  %941 = vmatpush.bf16.msra.mxu0 %v702
  %942 = vmatpush.bf16.msra.mxu0 %v700
  %943 = vmatpush.bf16.msra.mxu0 %v698
  %944 = vmatpush.bf16.msra.mxu0 %v696
  %945 = vmatpush.bf16.msra.mxu0 %v694
  %946 = vmatmul.bf16.gmra.mxu0 %v204
  %v947 = vpop.f32.mrf.mxu0
  %v948 = vadd.f32 %v934, %v947
  %v949 = vpop.f32.mrf.mxu0
  %v950 = vadd.f32 %v936, %v949
  %951 = vdwg.mxu0
  %952 = vmatpush.bf16.msra.mxu0 %v724
  %953 = vmatpush.bf16.msra.mxu0 %v722
  %954 = vmatpush.bf16.msra.mxu0 %v720
  %955 = vmatpush.bf16.msra.mxu0 %v718
  %956 = vmatpush.bf16.msra.mxu0 %v716
  %957 = vmatpush.bf16.msra.mxu0 %v714
  %958 = vmatpush.bf16.msra.mxu0 %v712
  %959 = vmatpush.bf16.msra.mxu0 %v710
  %960 = vmatmul.bf16.gmra.mxu0 %v205
  %v961 = vpop.f32.mrf.mxu0
  %v962 = vadd.f32 %v948, %v961
  %v963 = vpop.f32.mrf.mxu0
  %v964 = vadd.f32 %v950, %v963
  %965 = vdwg.mxu0
  %966 = vmatpush.bf16.msra.mxu0 %v613
  %967 = vmatpush.bf16.msra.mxu0 %v611
  %968 = vmatpush.bf16.msra.mxu0 %v609
  %969 = vmatpush.bf16.msra.mxu0 %v607
  %970 = vmatpush.bf16.msra.mxu0 %v605
  %971 = vmatpush.bf16.msra.mxu0 %v603
  %972 = vmatpush.bf16.msra.mxu0 %v601
  %973 = vmatpush.bf16.msra.mxu0 %v599
  %974 = vmatmul.bf16.gmra.mxu0 %v198
  %v975 = vpop.f32.mrf.mxu0
  %v976 = vadd.f32 %v171, %v975
  %v977 = vpop.f32.mrf.mxu0
  %v978 = vadd.f32 %v171, %v977
  %979 = vdwg.mxu0
  %980 = vmatpush.bf16.msra.mxu0 %v629
  %981 = vmatpush.bf16.msra.mxu0 %v627
  %982 = vmatpush.bf16.msra.mxu0 %v625
  %983 = vmatpush.bf16.msra.mxu0 %v623
  %984 = vmatpush.bf16.msra.mxu0 %v621
  %985 = vmatpush.bf16.msra.mxu0 %v619
  %986 = vmatpush.bf16.msra.mxu0 %v617
  %987 = vmatpush.bf16.msra.mxu0 %v615
  %988 = vmatmul.bf16.gmra.mxu0 %v199
  %v989 = vpop.f32.mrf.mxu0
  %v990 = vadd.f32 %v976, %v989
  %v991 = vpop.f32.mrf.mxu0
  %v992 = vadd.f32 %v978, %v991
  %993 = vdwg.mxu0
  %994 = vmatpush.bf16.msra.mxu0 %v645
  %995 = vmatpush.bf16.msra.mxu0 %v643
  %996 = vmatpush.bf16.msra.mxu0 %v641
  %997 = vmatpush.bf16.msra.mxu0 %v639
  %998 = vmatpush.bf16.msra.mxu0 %v637
  %999 = vmatpush.bf16.msra.mxu0 %v635
  %1000 = vmatpush.bf16.msra.mxu0 %v633
  %1001 = vmatpush.bf16.msra.mxu0 %v631
  %1002 = vmatmul.bf16.gmra.mxu0 %v200
  %v1003 = vpop.f32.mrf.mxu0
  %v1004 = vadd.f32 %v990, %v1003
  %v1005 = vpop.f32.mrf.mxu0
  %v1006 = vadd.f32 %v992, %v1005
  %1007 = vdwg.mxu0
  %1008 = vmatpush.bf16.msra.mxu0 %v661
  %1009 = vmatpush.bf16.msra.mxu0 %v659
  %1010 = vmatpush.bf16.msra.mxu0 %v657
  %1011 = vmatpush.bf16.msra.mxu0 %v655
  %1012 = vmatpush.bf16.msra.mxu0 %v653
  %1013 = vmatpush.bf16.msra.mxu0 %v651
  %1014 = vmatpush.bf16.msra.mxu0 %v649
  %1015 = vmatpush.bf16.msra.mxu0 %v647
  %1016 = vmatmul.bf16.gmra.mxu0 %v201
  %v1017 = vpop.f32.mrf.mxu0
  %v1018 = vadd.f32 %v1004, %v1017
  %v1019 = vpop.f32.mrf.mxu0
  %v1020 = vadd.f32 %v1006, %v1019
  %1021 = vdwg.mxu0
  %1022 = vmatpush.bf16.msra.mxu0 %v677
  %1023 = vmatpush.bf16.msra.mxu0 %v675
  %1024 = vmatpush.bf16.msra.mxu0 %v673
  %1025 = vmatpush.bf16.msra.mxu0 %v671
  %1026 = vmatpush.bf16.msra.mxu0 %v669
  %1027 = vmatpush.bf16.msra.mxu0 %v667
  %1028 = vmatpush.bf16.msra.mxu0 %v665
  %1029 = vmatpush.bf16.msra.mxu0 %v663
  %1030 = vmatmul.bf16.gmra.mxu0 %v202
  %v1031 = vpop.f32.mrf.mxu0
  %v1032 = vadd.f32 %v1018, %v1031
  %v1033 = vpop.f32.mrf.mxu0
  %v1034 = vadd.f32 %v1020, %v1033
  %1035 = vdwg.mxu0
  %1036 = vmatpush.bf16.msra.mxu0 %v693
  %1037 = vmatpush.bf16.msra.mxu0 %v691
  %1038 = vmatpush.bf16.msra.mxu0 %v689
  %1039 = vmatpush.bf16.msra.mxu0 %v687
  %1040 = vmatpush.bf16.msra.mxu0 %v685
  %1041 = vmatpush.bf16.msra.mxu0 %v683
  %1042 = vmatpush.bf16.msra.mxu0 %v681
  %1043 = vmatpush.bf16.msra.mxu0 %v679
  %1044 = vmatmul.bf16.gmra.mxu0 %v203
  %v1045 = vpop.f32.mrf.mxu0
  %v1046 = vadd.f32 %v1032, %v1045
  %v1047 = vpop.f32.mrf.mxu0
  %v1048 = vadd.f32 %v1034, %v1047
  %1049 = vdwg.mxu0
  %1050 = vmatpush.bf16.msra.mxu0 %v709
  %1051 = vmatpush.bf16.msra.mxu0 %v707
  %1052 = vmatpush.bf16.msra.mxu0 %v705
  %1053 = vmatpush.bf16.msra.mxu0 %v703
  %1054 = vmatpush.bf16.msra.mxu0 %v701
  %1055 = vmatpush.bf16.msra.mxu0 %v699
  %1056 = vmatpush.bf16.msra.mxu0 %v697
  %1057 = vmatpush.bf16.msra.mxu0 %v695
  %1058 = vmatmul.bf16.gmra.mxu0 %v204
  %v1059 = vpop.f32.mrf.mxu0
  %v1060 = vadd.f32 %v1046, %v1059
  %v1061 = vpop.f32.mrf.mxu0
  %v1062 = vadd.f32 %v1048, %v1061
  %1063 = vdwg.mxu0
  %1064 = vmatpush.bf16.msra.mxu0 %v725
  %1065 = vmatpush.bf16.msra.mxu0 %v723
  %1066 = vmatpush.bf16.msra.mxu0 %v721
  %1067 = vmatpush.bf16.msra.mxu0 %v719
  %1068 = vmatpush.bf16.msra.mxu0 %v717
  %1069 = vmatpush.bf16.msra.mxu0 %v715
  %1070 = vmatpush.bf16.msra.mxu0 %v713
  %1071 = vmatpush.bf16.msra.mxu0 %v711
  %1072 = vmatmul.bf16.gmra.mxu0 %v205
  %v1073 = vpop.f32.mrf.mxu0
  %v1074 = vadd.f32 %v1060, %v1073
  %v1075 = vpop.f32.mrf.mxu0
  %v1076 = vadd.f32 %v1062, %v1075
  %1077 = vdwg.mxu0
  %v1078 = vmax.f32 %v962, 0.0
  %v1079 = vmax.f32 %v1074, 0.0
  %v1080 = vmax.f32 %v964, 0.0
  %v1081 = vmax.f32 %v1076, 0.0
  %v1082 = vpack.c.bf16 %v1080, %v1078
  %v1083 = vpack.c.bf16 %v1081, %v1079
  %v1084 = vld [vmem:[%s3] sm:$0xff]
  %v1085 = vld [vmem:[%s3 + $0x8] sm:$0xff]
  %v1086 = vld [vmem:[%s3 + $0x10] sm:$0xff]
  %v1087 = vld [vmem:[%s3 + $0x18] sm:$0xff]
  %v1088 = vld [vmem:[%s3 + $0x20] sm:$0xff]
  %v1089 = vld [vmem:[%s3 + $0x28] sm:$0xff]
  %v1090 = vld [vmem:[%s3 + $0x30] sm:$0xff]
  %v1091 = vld [vmem:[%s3 + $0x38] sm:$0xff]
  %v1092 = vld [vmem:[%s3 + $0x40] sm:$0xff]
  %v1093 = vld [vmem:[%s3 + $0x48] sm:$0xff]
  %v1094 = vld [vmem:[%s3 + $0x50] sm:$0xff]
  %v1095 = vld [vmem:[%s3 + $0x58] sm:$0xff]
  %v1096 = vld [vmem:[%s3 + $0x60] sm:$0xff]
  %v1097 = vld [vmem:[%s3 + $0x68] sm:$0xff]
  %v1098 = vld [vmem:[%s3 + $0x70] sm:$0xff]
  %v1099 = vld [vmem:[%s3 + $0x78] sm:$0xff]
  %v1100 = vld [vmem:[%s3 + $0x80] sm:$0xff]
  %v1101 = vld [vmem:[%s3 + $0x88] sm:$0xff]
  %v1102 = vld [vmem:[%s3 + $0x90] sm:$0xff]
  %v1103 = vld [vmem:[%s3 + $0x98] sm:$0xff]
  %v1104 = vld [vmem:[%s3 + $0xa0] sm:$0xff]
  %v1105 = vld [vmem:[%s3 + $0xa8] sm:$0xff]
  %v1106 = vld [vmem:[%s3 + $0xb0] sm:$0xff]
  %v1107 = vld [vmem:[%s3 + $0xb8] sm:$0xff]
  %v1108 = vld [vmem:[%s3 + $0xc0] sm:$0xff]
  %v1109 = vld [vmem:[%s3 + $0xc8] sm:$0xff]
  %v1110 = vld [vmem:[%s3 + $0xd0] sm:$0xff]
  %v1111 = vld [vmem:[%s3 + $0xd8] sm:$0xff]
  %v1112 = vld [vmem:[%s3 + $0xe0] sm:$0xff]
  %v1113 = vld [vmem:[%s3 + $0xe8] sm:$0xff]
  %v1114 = vld [vmem:[%s3 + $0xf0] sm:$0xff]
  %v1115 = vld [vmem:[%s3 + $0xf8] sm:$0xff]
  %v1116 = vld [vmem:[%s4] sm:$0x3]
  %v1118 = vperm.slane %v1116, 0
  %v1119 = vperm.slane %v1116, 1
  %v1154 = vunpack.c.l.b16 %v1084
  %v1155 = vunpack.c.h.b16 %v1084
  %v1156 = vunpack.c.l.b16 %v1085
  %v1157 = vunpack.c.h.b16 %v1085
  %v1158 = vunpack.c.l.b16 %v1086
  %v1159 = vunpack.c.h.b16 %v1086
  %v1160 = vunpack.c.l.b16 %v1087
  %v1161 = vunpack.c.h.b16 %v1087
  %v1162 = vunpack.c.l.b16 %v1088
  %v1163 = vunpack.c.h.b16 %v1088
  %v1164 = vunpack.c.l.b16 %v1089
  %v1165 = vunpack.c.h.b16 %v1089
  %v1166 = vunpack.c.l.b16 %v1090
  %v1167 = vunpack.c.h.b16 %v1090
  %v1168 = vunpack.c.l.b16 %v1091
  %v1169 = vunpack.c.h.b16 %v1091
  %v1170 = vunpack.c.l.b16 %v1092
  %v1171 = vunpack.c.h.b16 %v1092
  %v1172 = vunpack.c.l.b16 %v1093
  %v1173 = vunpack.c.h.b16 %v1093
  %v1174 = vunpack.c.l.b16 %v1094
  %v1175 = vunpack.c.h.b16 %v1094
  %v1176 = vunpack.c.l.b16 %v1095
  %v1177 = vunpack.c.h.b16 %v1095
  %v1178 = vunpack.c.l.b16 %v1096
  %v1179 = vunpack.c.h.b16 %v1096
  %v1180 = vunpack.c.l.b16 %v1097
  %v1181 = vunpack.c.h.b16 %v1097
  %v1182 = vunpack.c.l.b16 %v1098
  %v1183 = vunpack.c.h.b16 %v1098
  %v1184 = vunpack.c.l.b16 %v1099
  %v1185 = vunpack.c.h.b16 %v1099
  %v1186 = vunpack.c.l.b16 %v1100
  %v1187 = vunpack.c.h.b16 %v1100
  %v1188 = vunpack.c.l.b16 %v1101
  %v1189 = vunpack.c.h.b16 %v1101
  %v1190 = vunpack.c.l.b16 %v1102
  %v1191 = vunpack.c.h.b16 %v1102
  %v1192 = vunpack.c.l.b16 %v1103
  %v1193 = vunpack.c.h.b16 %v1103
  %v1194 = vunpack.c.l.b16 %v1104
  %v1195 = vunpack.c.h.b16 %v1104
  %v1196 = vunpack.c.l.b16 %v1105
  %v1197 = vunpack.c.h.b16 %v1105
  %v1198 = vunpack.c.l.b16 %v1106
  %v1199 = vunpack.c.h.b16 %v1106
  %v1200 = vunpack.c.l.b16 %v1107
  %v1201 = vunpack.c.h.b16 %v1107
  %v1202 = vunpack.c.l.b16 %v1108
  %v1203 = vunpack.c.h.b16 %v1108
  %v1204 = vunpack.c.l.b16 %v1109
  %v1205 = vunpack.c.h.b16 %v1109
  %v1206 = vunpack.c.l.b16 %v1110
  %v1207 = vunpack.c.h.b16 %v1110
  %v1208 = vunpack.c.l.b16 %v1111
  %v1209 = vunpack.c.h.b16 %v1111
  %v1210 = vunpack.c.l.b16 %v1112
  %v1211 = vunpack.c.h.b16 %v1112
  %v1212 = vunpack.c.l.b16 %v1113
  %v1213 = vunpack.c.h.b16 %v1113
  %v1214 = vunpack.c.l.b16 %v1114
  %v1215 = vunpack.c.h.b16 %v1114
  %v1216 = vunpack.c.l.b16 %v1115
  %v1217 = vunpack.c.h.b16 %v1115
  %v1218 = vpack.c.b16 %v1156, %v1154
  %v1219 = vpack.c.b16 %v1157, %v1155
  %v1220 = vpack.c.b16 %v1160, %v1158
  %v1221 = vpack.c.b16 %v1161, %v1159
  %v1222 = vpack.c.b16 %v1164, %v1162
  %v1223 = vpack.c.b16 %v1165, %v1163
  %v1224 = vpack.c.b16 %v1168, %v1166
  %v1225 = vpack.c.b16 %v1169, %v1167
  %v1226 = vpack.c.b16 %v1172, %v1170
  %v1227 = vpack.c.b16 %v1173, %v1171
  %v1228 = vpack.c.b16 %v1176, %v1174
  %v1229 = vpack.c.b16 %v1177, %v1175
  %v1230 = vpack.c.b16 %v1180, %v1178
  %v1231 = vpack.c.b16 %v1181, %v1179
  %v1232 = vpack.c.b16 %v1184, %v1182
  %v1233 = vpack.c.b16 %v1185, %v1183
  %v1234 = vpack.c.b16 %v1188, %v1186
  %v1235 = vpack.c.b16 %v1189, %v1187
  %v1236 = vpack.c.b16 %v1192, %v1190
  %v1237 = vpack.c.b16 %v1193, %v1191
  %v1238 = vpack.c.b16 %v1196, %v1194
  %v1239 = vpack.c.b16 %v1197, %v1195
  %v1240 = vpack.c.b16 %v1200, %v1198
  %v1241 = vpack.c.b16 %v1201, %v1199
  %v1242 = vpack.c.b16 %v1204, %v1202
  %v1243 = vpack.c.b16 %v1205, %v1203
  %v1244 = vpack.c.b16 %v1208, %v1206
  %v1245 = vpack.c.b16 %v1209, %v1207
  %v1246 = vpack.c.b16 %v1212, %v1210
  %v1247 = vpack.c.b16 %v1213, %v1211
  %v1248 = vpack.c.b16 %v1216, %v1214
  %v1249 = vpack.c.b16 %v1217, %v1215
  %1282 = vmatpush.bf16.msra.mxu0 %v1232
  %1283 = vmatpush.bf16.msra.mxu0 %v1230
  %1284 = vmatpush.bf16.msra.mxu0 %v1228
  %1285 = vmatpush.bf16.msra.mxu0 %v1226
  %1286 = vmatpush.bf16.msra.mxu0 %v1224
  %1287 = vmatpush.bf16.msra.mxu0 %v1222
  %1288 = vmatpush.bf16.msra.mxu0 %v1220
  %1289 = vmatpush.bf16.msra.mxu0 %v1218
  %1290 = vmatmul.bf16.gmra.mxu0 %v1082
  %v1291 = vpop.f32.mrf.mxu0
  %v1292 = vadd.f32 %v1118, %v1291
  %v1293 = vpop.f32.mrf.mxu0
  %v1294 = vadd.f32 %v1118, %v1293
  %1295 = vdwg.mxu0
  %1296 = vmatpush.bf16.msra.mxu0 %v1248
  %1297 = vmatpush.bf16.msra.mxu0 %v1246
  %1298 = vmatpush.bf16.msra.mxu0 %v1244
  %1299 = vmatpush.bf16.msra.mxu0 %v1242
  %1300 = vmatpush.bf16.msra.mxu0 %v1240
  %1301 = vmatpush.bf16.msra.mxu0 %v1238
  %1302 = vmatpush.bf16.msra.mxu0 %v1236
  %1303 = vmatpush.bf16.msra.mxu0 %v1234
  %1304 = vmatmul.bf16.gmra.mxu0 %v1083
  %v1305 = vpop.f32.mrf.mxu0
  %v1306 = vadd.f32 %v1292, %v1305
  %v1307 = vpop.f32.mrf.mxu0
  %v1308 = vadd.f32 %v1294, %v1307
  %1309 = vdwg.mxu0
  %1310 = vmatpush.bf16.msra.mxu0 %v1233
  %1311 = vmatpush.bf16.msra.mxu0 %v1231
  %1312 = vmatpush.bf16.msra.mxu0 %v1229
  %1313 = vmatpush.bf16.msra.mxu0 %v1227
  %1314 = vmatpush.bf16.msra.mxu0 %v1225
  %1315 = vmatpush.bf16.msra.mxu0 %v1223
  %1316 = vmatpush.bf16.msra.mxu0 %v1221
  %1317 = vmatpush.bf16.msra.mxu0 %v1219
  %1318 = vmatmul.bf16.gmra.mxu0 %v1082
  %v1319 = vpop.f32.mrf.mxu0
  %v1320 = vadd.f32 %v1119, %v1319
  %v1321 = vpop.f32.mrf.mxu0
  %v1322 = vadd.f32 %v1119, %v1321
  %1323 = vdwg.mxu0
  %1324 = vmatpush.bf16.msra.mxu0 %v1249
  %1325 = vmatpush.bf16.msra.mxu0 %v1247
  %1326 = vmatpush.bf16.msra.mxu0 %v1245
  %1327 = vmatpush.bf16.msra.mxu0 %v1243
  %1328 = vmatpush.bf16.msra.mxu0 %v1241
  %1329 = vmatpush.bf16.msra.mxu0 %v1239
  %1330 = vmatpush.bf16.msra.mxu0 %v1237
  %1331 = vmatpush.bf16.msra.mxu0 %v1235
  %1332 = vmatmul.bf16.gmra.mxu0 %v1083
  %v1333 = vpop.f32.mrf.mxu0
  %v1334 = vadd.f32 %v1320, %v1333
  %v1335 = vpop.f32.mrf.mxu0
  %v1336 = vadd.f32 %v1322, %v1335
  %1337 = vdwg.mxu0
  %v1338 = vmax.f32 %v1306, 0.0
  %v1339 = vmax.f32 %v1334, 0.0
  %v1340 = vmax.f32 %v1308, 0.0
  %v1341 = vmax.f32 %v1336, 0.0
  %v1342 = vpack.c.bf16 %v1340, %v1338
  %v1343 = vpack.c.bf16 %v1341, %v1339
  %v1344 = vld [vmem:[%s5] sm:$0xff]
  %v1345 = vld [vmem:[%s5 + $0x8] sm:$0xff]
  %v1346 = vld [vmem:[%s5 + $0x10] sm:$0xff]
  %v1347 = vld [vmem:[%s5 + $0x18] sm:$0xff]
  %v1348 = vld [vmem:[%s5 + $0x20] sm:$0xff]
  %v1349 = vld [vmem:[%s5 + $0x28] sm:$0xff]
  %v1350 = vld [vmem:[%s5 + $0x30] sm:$0xff]
  %v1351 = vld [vmem:[%s5 + $0x38] sm:$0xff]
  %v1352 = vld [vmem:[%s5 + $0x40] sm:$0xff]
  %v1353 = vld [vmem:[%s5 + $0x48] sm:$0xff]
  %v1354 = vld [vmem:[%s5 + $0x50] sm:$0xff]
  %v1355 = vld [vmem:[%s5 + $0x58] sm:$0xff]
  %v1356 = vld [vmem:[%s5 + $0x60] sm:$0xff]
  %v1357 = vld [vmem:[%s5 + $0x68] sm:$0xff]
  %v1358 = vld [vmem:[%s5 + $0x70] sm:$0xff]
  %v1359 = vld [vmem:[%s5 + $0x78] sm:$0xff]
  %v1360 = vld [vmem:[%s5 + $0x80] sm:$0xff]
  %v1361 = vld [vmem:[%s5 + $0x88] sm:$0xff]
  %v1362 = vld [vmem:[%s5 + $0x90] sm:$0xff]
  %v1363 = vld [vmem:[%s5 + $0x98] sm:$0xff]
  %v1364 = vld [vmem:[%s5 + $0xa0] sm:$0xff]
  %v1365 = vld [vmem:[%s5 + $0xa8] sm:$0xff]
  %v1366 = vld [vmem:[%s5 + $0xb0] sm:$0xff]
  %v1367 = vld [vmem:[%s5 + $0xb8] sm:$0xff]
  %v1368 = vld [vmem:[%s5 + $0xc0] sm:$0xff]
  %v1369 = vld [vmem:[%s5 + $0xc8] sm:$0xff]
  %v1370 = vld [vmem:[%s5 + $0xd0] sm:$0xff]
  %v1371 = vld [vmem:[%s5 + $0xd8] sm:$0xff]
  %v1372 = vld [vmem:[%s5 + $0xe0] sm:$0xff]
  %v1373 = vld [vmem:[%s5 + $0xe8] sm:$0xff]
  %v1374 = vld [vmem:[%s5 + $0xf0] sm:$0xff]
  %v1375 = vld [vmem:[%s5 + $0xf8] sm:$0xff]
  %v1376 = vld [vmem:[%s6] sm:$0x3]
  %v1378 = vperm.slane %v1376, 0
  %v1379 = vperm.slane %v1376, 1
  %v1414 = vunpack.c.l.b16 %v1344
  %v1415 = vunpack.c.h.b16 %v1344
  %v1416 = vunpack.c.l.b16 %v1345
  %v1417 = vunpack.c.h.b16 %v1345
  %v1418 = vunpack.c.l.b16 %v1346
  %v1419 = vunpack.c.h.b16 %v1346
  %v1420 = vunpack.c.l.b16 %v1347
  %v1421 = vunpack.c.h.b16 %v1347
  %v1422 = vunpack.c.l.b16 %v1348
  %v1423 = vunpack.c.h.b16 %v1348
  %v1424 = vunpack.c.l.b16 %v1349
  %v1425 = vunpack.c.h.b16 %v1349
  %v1426 = vunpack.c.l.b16 %v1350
  %v1427 = vunpack.c.h.b16 %v1350
  %v1428 = vunpack.c.l.b16 %v1351
  %v1429 = vunpack.c.h.b16 %v1351
  %v1430 = vunpack.c.l.b16 %v1352
  %v1431 = vunpack.c.h.b16 %v1352
  %v1432 = vunpack.c.l.b16 %v1353
  %v1433 = vunpack.c.h.b16 %v1353
  %v1434 = vunpack.c.l.b16 %v1354
  %v1435 = vunpack.c.h.b16 %v1354
  %v1436 = vunpack.c.l.b16 %v1355
  %v1437 = vunpack.c.h.b16 %v1355
  %v1438 = vunpack.c.l.b16 %v1356
  %v1439 = vunpack.c.h.b16 %v1356
  %v1440 = vunpack.c.l.b16 %v1357
  %v1441 = vunpack.c.h.b16 %v1357
  %v1442 = vunpack.c.l.b16 %v1358
  %v1443 = vunpack.c.h.b16 %v1358
  %v1444 = vunpack.c.l.b16 %v1359
  %v1445 = vunpack.c.h.b16 %v1359
  %v1446 = vunpack.c.l.b16 %v1360
  %v1447 = vunpack.c.h.b16 %v1360
  %v1448 = vunpack.c.l.b16 %v1361
  %v1449 = vunpack.c.h.b16 %v1361
  %v1450 = vunpack.c.l.b16 %v1362
  %v1451 = vunpack.c.h.b16 %v1362
  %v1452 = vunpack.c.l.b16 %v1363
  %v1453 = vunpack.c.h.b16 %v1363
  %v1454 = vunpack.c.l.b16 %v1364
  %v1455 = vunpack.c.h.b16 %v1364
  %v1456 = vunpack.c.l.b16 %v1365
  %v1457 = vunpack.c.h.b16 %v1365
  %v1458 = vunpack.c.l.b16 %v1366
  %v1459 = vunpack.c.h.b16 %v1366
  %v1460 = vunpack.c.l.b16 %v1367
  %v1461 = vunpack.c.h.b16 %v1367
  %v1462 = vunpack.c.l.b16 %v1368
  %v1463 = vunpack.c.h.b16 %v1368
  %v1464 = vunpack.c.l.b16 %v1369
  %v1465 = vunpack.c.h.b16 %v1369
  %v1466 = vunpack.c.l.b16 %v1370
  %v1467 = vunpack.c.h.b16 %v1370
  %v1468 = vunpack.c.l.b16 %v1371
  %v1469 = vunpack.c.h.b16 %v1371
  %v1470 = vunpack.c.l.b16 %v1372
  %v1471 = vunpack.c.h.b16 %v1372
  %v1472 = vunpack.c.l.b16 %v1373
  %v1473 = vunpack.c.h.b16 %v1373
  %v1474 = vunpack.c.l.b16 %v1374
  %v1475 = vunpack.c.h.b16 %v1374
  %v1476 = vunpack.c.l.b16 %v1375
  %v1477 = vunpack.c.h.b16 %v1375
  %v1478 = vpack.c.b16 %v1416, %v1414
  %v1479 = vpack.c.b16 %v1417, %v1415
  %v1480 = vpack.c.b16 %v1420, %v1418
  %v1481 = vpack.c.b16 %v1421, %v1419
  %v1482 = vpack.c.b16 %v1424, %v1422
  %v1483 = vpack.c.b16 %v1425, %v1423
  %v1484 = vpack.c.b16 %v1428, %v1426
  %v1485 = vpack.c.b16 %v1429, %v1427
  %v1486 = vpack.c.b16 %v1432, %v1430
  %v1487 = vpack.c.b16 %v1433, %v1431
  %v1488 = vpack.c.b16 %v1436, %v1434
  %v1489 = vpack.c.b16 %v1437, %v1435
  %v1490 = vpack.c.b16 %v1440, %v1438
  %v1491 = vpack.c.b16 %v1441, %v1439
  %v1492 = vpack.c.b16 %v1444, %v1442
  %v1493 = vpack.c.b16 %v1445, %v1443
  %v1494 = vpack.c.b16 %v1448, %v1446
  %v1495 = vpack.c.b16 %v1449, %v1447
  %v1496 = vpack.c.b16 %v1452, %v1450
  %v1497 = vpack.c.b16 %v1453, %v1451
  %v1498 = vpack.c.b16 %v1456, %v1454
  %v1499 = vpack.c.b16 %v1457, %v1455
  %v1500 = vpack.c.b16 %v1460, %v1458
  %v1501 = vpack.c.b16 %v1461, %v1459
  %v1502 = vpack.c.b16 %v1464, %v1462
  %v1503 = vpack.c.b16 %v1465, %v1463
  %v1504 = vpack.c.b16 %v1468, %v1466
  %v1505 = vpack.c.b16 %v1469, %v1467
  %v1506 = vpack.c.b16 %v1472, %v1470
  %v1507 = vpack.c.b16 %v1473, %v1471
  %v1508 = vpack.c.b16 %v1476, %v1474
  %v1509 = vpack.c.b16 %v1477, %v1475
  %1542 = vmatpush.bf16.msra.mxu0 %v1492
  %1543 = vmatpush.bf16.msra.mxu0 %v1490
  %1544 = vmatpush.bf16.msra.mxu0 %v1488
  %1545 = vmatpush.bf16.msra.mxu0 %v1486
  %1546 = vmatpush.bf16.msra.mxu0 %v1484
  %1547 = vmatpush.bf16.msra.mxu0 %v1482
  %1548 = vmatpush.bf16.msra.mxu0 %v1480
  %1549 = vmatpush.bf16.msra.mxu0 %v1478
  %1550 = vmatmul.bf16.gmra.mxu0 %v1342
  %v1551 = vpop.f32.mrf.mxu0
  %v1552 = vadd.f32 %v1378, %v1551
  %v1553 = vpop.f32.mrf.mxu0
  %v1554 = vadd.f32 %v1378, %v1553
  %1555 = vdwg.mxu0
  %1556 = vmatpush.bf16.msra.mxu0 %v1508
  %1557 = vmatpush.bf16.msra.mxu0 %v1506
  %1558 = vmatpush.bf16.msra.mxu0 %v1504
  %1559 = vmatpush.bf16.msra.mxu0 %v1502
  %1560 = vmatpush.bf16.msra.mxu0 %v1500
  %1561 = vmatpush.bf16.msra.mxu0 %v1498
  %1562 = vmatpush.bf16.msra.mxu0 %v1496
  %1563 = vmatpush.bf16.msra.mxu0 %v1494
  %1564 = vmatmul.bf16.gmra.mxu0 %v1343
  %v1565 = vpop.f32.mrf.mxu0
  %v1566 = vadd.f32 %v1552, %v1565
  %v1567 = vpop.f32.mrf.mxu0
  %v1568 = vadd.f32 %v1554, %v1567
  %1569 = vdwg.mxu0
  %1570 = vmatpush.bf16.msra.mxu0 %v1493
  %1571 = vmatpush.bf16.msra.mxu0 %v1491
  %1572 = vmatpush.bf16.msra.mxu0 %v1489
  %1573 = vmatpush.bf16.msra.mxu0 %v1487
  %1574 = vmatpush.bf16.msra.mxu0 %v1485
  %1575 = vmatpush.bf16.msra.mxu0 %v1483
  %1576 = vmatpush.bf16.msra.mxu0 %v1481
  %1577 = vmatpush.bf16.msra.mxu0 %v1479
  %1578 = vmatmul.bf16.gmra.mxu0 %v1342
  %v1579 = vpop.f32.mrf.mxu0
  %v1580 = vadd.f32 %v1379, %v1579
  %v1581 = vpop.f32.mrf.mxu0
  %v1582 = vadd.f32 %v1379, %v1581
  %1583 = vdwg.mxu0
  %1584 = vmatpush.bf16.msra.mxu0 %v1509
  %1585 = vmatpush.bf16.msra.mxu0 %v1507
  %1586 = vmatpush.bf16.msra.mxu0 %v1505
  %1587 = vmatpush.bf16.msra.mxu0 %v1503
  %1588 = vmatpush.bf16.msra.mxu0 %v1501
  %1589 = vmatpush.bf16.msra.mxu0 %v1499
  %1590 = vmatpush.bf16.msra.mxu0 %v1497
  %1591 = vmatpush.bf16.msra.mxu0 %v1495
  %1592 = vmatmul.bf16.gmra.mxu0 %v1343
  %v1593 = vpop.f32.mrf.mxu0
  %v1594 = vadd.f32 %v1580, %v1593
  %v1595 = vpop.f32.mrf.mxu0
  %v1596 = vadd.f32 %v1582, %v1595
  %1597 = vdwg.mxu0
  %v1598 = vmax.f32 %v1566, 0.0
  %v1599 = vmax.f32 %v1594, 0.0
  %v1600 = vmax.f32 %v1568, 0.0
  %v1601 = vmax.f32 %v1596, 0.0
  %v1602 = vpack.c.bf16 %v1600, %v1598
  %v1603 = vpack.c.bf16 %v1601, %v1599
  %v1604 = vld [vmem:[%s7] sm:$0xf]
  %v1605 = vld [vmem:[%s7 + $0x4] sm:$0xf]
  %v1606 = vld [vmem:[%s7 + $0x8] sm:$0xf]
  %v1607 = vld [vmem:[%s7 + $0xc] sm:$0xf]
  %v1608 = vld [vmem:[%s7 + $0x10] sm:$0xf]
  %v1609 = vld [vmem:[%s7 + $0x14] sm:$0xf]
  %v1610 = vld [vmem:[%s7 + $0x18] sm:$0xf]
  %v1611 = vld [vmem:[%s7 + $0x1c] sm:$0xf]
  %v1612 = vld [vmem:[%s7 + $0x20] sm:$0xf]
  %v1613 = vld [vmem:[%s7 + $0x24] sm:$0xf]
  %v1614 = vld [vmem:[%s7 + $0x28] sm:$0xf]
  %v1615 = vld [vmem:[%s7 + $0x2c] sm:$0xf]
  %v1616 = vld [vmem:[%s7 + $0x30] sm:$0xf]
  %v1617 = vld [vmem:[%s7 + $0x34] sm:$0xf]
  %v1618 = vld [vmem:[%s7 + $0x38] sm:$0xf]
  %v1619 = vld [vmem:[%s7 + $0x3c] sm:$0xf]
  %v1620 = vld [vmem:[%s7 + $0x40] sm:$0xf]
  %v1621 = vld [vmem:[%s7 + $0x44] sm:$0xf]
  %v1622 = vld [vmem:[%s7 + $0x48] sm:$0xf]
  %v1623 = vld [vmem:[%s7 + $0x4c] sm:$0xf]
  %v1624 = vld [vmem:[%s7 + $0x50] sm:$0xf]
  %v1625 = vld [vmem:[%s7 + $0x54] sm:$0xf]
  %v1626 = vld [vmem:[%s7 + $0x58] sm:$0xf]
  %v1627 = vld [vmem:[%s7 + $0x5c] sm:$0xf]
  %v1628 = vld [vmem:[%s7 + $0x60] sm:$0xf]
  %v1629 = vld [vmem:[%s7 + $0x64] sm:$0xf]
  %v1630 = vld [vmem:[%s7 + $0x68] sm:$0xf]
  %v1631 = vld [vmem:[%s7 + $0x6c] sm:$0xf]
  %v1632 = vld [vmem:[%s7 + $0x70] sm:$0xf]
  %v1633 = vld [vmem:[%s7 + $0x74] sm:$0xf]
  %v1634 = vld [vmem:[%s7 + $0x78] sm:$0xf]
  %v1635 = vld [vmem:[%s7 + $0x7c] sm:$0xf]
  %v1636 = vld [vmem:[%s8] sm:$0x1]
  %v1638 = vperm.slane %v1636, 0
  %v1672 = vunpack.c.l.b16 %v1604
  %v1673 = vunpack.c.l.b16 %v1605
  %v1674 = vunpack.c.l.b16 %v1606
  %v1675 = vunpack.c.l.b16 %v1607
  %v1676 = vunpack.c.l.b16 %v1608
  %v1677 = vunpack.c.l.b16 %v1609
  %v1678 = vunpack.c.l.b16 %v1610
  %v1679 = vunpack.c.l.b16 %v1611
  %v1680 = vunpack.c.l.b16 %v1612
  %v1681 = vunpack.c.l.b16 %v1613
  %v1682 = vunpack.c.l.b16 %v1614
  %v1683 = vunpack.c.l.b16 %v1615
  %v1684 = vunpack.c.l.b16 %v1616
  %v1685 = vunpack.c.l.b16 %v1617
  %v1686 = vunpack.c.l.b16 %v1618
  %v1687 = vunpack.c.l.b16 %v1619
  %v1688 = vunpack.c.l.b16 %v1620
  %v1689 = vunpack.c.l.b16 %v1621
  %v1690 = vunpack.c.l.b16 %v1622
  %v1691 = vunpack.c.l.b16 %v1623
  %v1692 = vunpack.c.l.b16 %v1624
  %v1693 = vunpack.c.l.b16 %v1625
  %v1694 = vunpack.c.l.b16 %v1626
  %v1695 = vunpack.c.l.b16 %v1627
  %v1696 = vunpack.c.l.b16 %v1628
  %v1697 = vunpack.c.l.b16 %v1629
  %v1698 = vunpack.c.l.b16 %v1630
  %v1699 = vunpack.c.l.b16 %v1631
  %v1700 = vunpack.c.l.b16 %v1632
  %v1701 = vunpack.c.l.b16 %v1633
  %v1702 = vunpack.c.l.b16 %v1634
  %v1703 = vunpack.c.l.b16 %v1635
  %v1704 = vpack.c.b16 %v1673, %v1672
  %v1705 = vpack.c.b16 %v1675, %v1674
  %v1706 = vpack.c.b16 %v1677, %v1676
  %v1707 = vpack.c.b16 %v1679, %v1678
  %v1708 = vpack.c.b16 %v1681, %v1680
  %v1709 = vpack.c.b16 %v1683, %v1682
  %v1710 = vpack.c.b16 %v1685, %v1684
  %v1711 = vpack.c.b16 %v1687, %v1686
  %v1712 = vpack.c.b16 %v1689, %v1688
  %v1713 = vpack.c.b16 %v1691, %v1690
  %v1714 = vpack.c.b16 %v1693, %v1692
  %v1715 = vpack.c.b16 %v1695, %v1694
  %v1716 = vpack.c.b16 %v1697, %v1696
  %v1717 = vpack.c.b16 %v1699, %v1698
  %v1718 = vpack.c.b16 %v1701, %v1700
  %v1719 = vpack.c.b16 %v1703, %v1702
  %1736 = vmatpush.bf16.msra.mxu0 %v1711
  %1737 = vmatpush.bf16.msra.mxu0 %v1710
  %1738 = vmatpush.bf16.msra.mxu0 %v1709
  %1739 = vmatpush.bf16.msra.mxu0 %v1708
  %1740 = vmatpush.bf16.msra.mxu0 %v1707
  %1741 = vmatpush.bf16.msra.mxu0 %v1706
  %1742 = vmatpush.bf16.msra.mxu0 %v1705
  %1743 = vmatpush.bf16.msra.mxu0 %v1704
  %1744 = vmatmul.bf16.gmra.mxu0 %v1602
  %v1745 = vpop.f32.mrf.mxu0
  %v1746 = vadd.f32 %v1638, %v1745
  %v1747 = vpop.f32.mrf.mxu0
  %v1748 = vadd.f32 %v1638, %v1747
  %1749 = vdwg.mxu0
  %1750 = vmatpush.bf16.msra.mxu0 %v1719
  %1751 = vmatpush.bf16.msra.mxu0 %v1718
  %1752 = vmatpush.bf16.msra.mxu0 %v1717
  %1753 = vmatpush.bf16.msra.mxu0 %v1716
  %1754 = vmatpush.bf16.msra.mxu0 %v1715
  %1755 = vmatpush.bf16.msra.mxu0 %v1714
  %1756 = vmatpush.bf16.msra.mxu0 %v1713
  %1757 = vmatpush.bf16.msra.mxu0 %v1712
  %1758 = vmatmul.bf16.gmra.mxu0 %v1603
  %v1759 = vpop.f32.mrf.mxu0
  %v1760 = vadd.f32 %v1746, %v1759
  %v1761 = vpop.f32.mrf.mxu0
  %v1762 = vadd.f32 %v1748, %v1761
  %1763 = vdwg.mxu0
  %v1764 = vxor.u32 %v1760, 2147483648
  %v1765 = vxor.u32 %v1762, 2147483648
  %v1766 = vmul.f32 %v1764, 1.442695
  %v1767 = vpow.pop %v1766
  %v1768 = vmul.f32 %v1765, 1.442695
  %v1769 = vpow.pop %v1768
  %v1770 = vadd.f32 %v1767, 1.0
  %v1771 = vadd.f32 %v1769, 1.0
  %v1772 = vrcp.pop %v1770
  %v1773 = vmul.f32 %v1770, %v1772
  %v1774 = vsub.f32 1.0, %v1773
  %v1775 = vmul.f32 %v1772, %v1774
  %v1776 = vadd.f32 %v1772, %v1775
  %vm1777 = vweird.f32 %v1770
  %vm1778 = vweird.f32 %v1772
  %vm1779 = vmor %vm1777, %vm1778
  %v1780 = vsel %vm1779, %v1772, %v1776
  %v1781 = vand.u32 2147483647, %v1770
  %vm1782 = vcmp.eq.f32.partialorder %v1781, 8.507059e+37
  %v1783 = vand.u32 %v1770, 2147483648
  %v1784 = vor.u32 1.1754944e-38, %v1783
  %v1785 = vsel %vm1782, %v1784, %v1780
  %v1786 = vmul.f32 1.0, %v1785
  %v1787 = vrcp.pop %v1771
  %v1788 = vmul.f32 %v1771, %v1787
  %v1789 = vsub.f32 1.0, %v1788
  %v1790 = vmul.f32 %v1787, %v1789
  %v1791 = vadd.f32 %v1787, %v1790
  %vm1792 = vweird.f32 %v1771
  %vm1793 = vweird.f32 %v1787
  %vm1794 = vmor %vm1792, %vm1793
  %v1795 = vsel %vm1794, %v1787, %v1791
  %v1796 = vand.u32 2147483647, %v1771
  %vm1797 = vcmp.eq.f32.partialorder %v1796, 8.507059e+37
  %v1798 = vand.u32 %v1771, 2147483648
  %v1799 = vor.u32 1.1754944e-38, %v1798
  %v1800 = vsel %vm1797, %v1799, %v1795
  %v1801 = vmul.f32 1.0, %v1800
  %1802 = vst [vmem:[%s9] sm:$0xff] %v1786
  %1803 = vst [vmem:[%s9 + $0x8] sm:$0xff] %v1801
  // Predicated region
  $region38: #{segmentation_network_full.5} parent=0 // pred_check
    _
  $region39: #{segmentation_network_full.5} parent=0 // pred_check_branch
    %1805 = sbr.rel (0) target = $region41
  $region40: #{segmentation_network_full.5} parent=0 // pred_region
    _
  $region41: #{segmentation_network_full.5} parent=0 // pred_fallthru
    _
  // Predicated region
  $region42: #{segmentation_network_full.5} parent=0 // pred_check
    _
  $region43: #{segmentation_network_full.5} parent=0 // pred_check_branch
    %1807 = sbr.rel (0) target = $region45
  $region44: #{segmentation_network_full.5} parent=0 // pred_region
    _
  $region45: #{segmentation_network_full.5} parent=0 // pred_fallthru
    _

</llo_original>
